<compile_context>
chip_gen: v7x
topology: tpu7x:2x2x1
jax: 0.10.0
libtpu: 0.0.40
codegen_flags: <defaults>
</compile_context>

<pallas_src>
import functools
import math

import jax
import jax.numpy as jnp
from jax.experimental import pallas as pl
from jax.experimental.pallas import tpu as pltpu

# ----------------------------- tiny Qwen2 config -----------------------------
VOCAB = 64
HIDDEN = 32
INTERMEDIATE = 64
NUM_LAYERS = 2
NUM_HEADS = 4
NUM_KV_HEADS = 2
HEAD_DIM = HIDDEN // NUM_HEADS           # 8
N_REP = NUM_HEADS // NUM_KV_HEADS        # 2   (GQA replication factor)
Q_F = NUM_HEADS * HEAD_DIM               # 32  (q columns in fused qkv)
KV_F = NUM_KV_HEADS * HEAD_DIM           # 16  (k / v columns in fused qkv)
RMS_EPS = 1e-6
ROPE_THETA = 10000.0
ROPE_HALF = HEAD_DIM // 2                # 4
VOCAB_PAD = ((VOCAB + 127) // 128) * 128 # 128: lane-dense LM-head / output slab

_REFS_PER_LAYER = 5  # wqkv_t, bqkv, wo_t, wgu_t, wd_t   (all norms folded into weights)


# ------------------------- fused whole-model Pallas kernel -------------------------
def _qwen2_forward_kernel(*refs, seq):
    """One grid step == one batch element pushed through the full model.

    refs = [h (S,H) f32, cos_q (S,Q_F), sin_a (S,Q_F), sin_b (S,Q_F),
            causal_bias (nH*S,S),
            <5 refs per layer> * NUM_LAYERS,
            head_wt (H,VOCAB_PAD) bf16, head_b (1,VOCAB_PAD) f32,
            out (S,VOCAB_PAD) f32,
            scores_scratch (nH*S,S) f32, attn_scratch (S,Q_F) f32]
    """
    n_in = 5 + NUM_LAYERS * _REFS_PER_LAYER + 2
    h_ref, cos_ref, sina_ref, sinb_ref, bias_ref = refs[:5]
    layer_refs = refs[5:5 + NUM_LAYERS * _REFS_PER_LAYER]
    head_wt_ref, head_b_ref = refs[n_in - 2:n_in]
    out_ref = refs[n_in]
    scores_ref, attn_ref = refs[n_in + 1], refs[n_in + 2]

    f32 = jnp.float32
    bf16 = jnp.bfloat16

    def rms(x):
        # gamma is folded into the following weight matrix at prepare time.
        return x * jax.lax.rsqrt(jnp.mean(x * x, axis=-1, keepdims=True) + RMS_EPS)

    def mm(x, w_ref):
        # bf16 operands for the MXU, f32 accumulation.
        return jnp.dot(x.astype(bf16), w_ref[...], preferred_element_type=f32)

    # RoPE tables, hoisted: per-position, tiled per head; sign and half-lane masks are
    # folded into sin_a / sin_b host-side so rotate_half == two whole-slab lane rolls.
    cos_q, sa_q, sb_q = cos_ref[...], sina_ref[...], sinb_ref[...]
    cos_k, sa_k, sb_k = cos_q[:, :KV_F], sa_q[:, :KV_F], sb_q[:, :KV_F]

    def rope(x, c, sa, sb):
        # x*cos + rotate_half(x)*sin ; cross-head wrap lanes are zeroed by sa/sb masks.
        return (x * c
                + jnp.roll(x, -ROPE_HALF, axis=1) * sa
                + jnp.roll(x, ROPE_HALF, axis=1) * sb)

    causal_bias = bias_ref[...]                           # (nH*S, S) additive 0 / -1e30
    h = h_ref[...]                                        # (S, HIDDEN) f32 residual

    for l in range(NUM_LAYERS):
        wqkv_ref, bqkv_ref, wo_ref, wgu_ref, wd_ref = (
            layer_refs[l * _REFS_PER_LAYER:(l + 1) * _REFS_PER_LAYER])

        # ---- attention: rms -> fused QKV (+bias, scale folded) -> RoPE -> causal GQA ----
        xn = rms(h)
        qkv = mm(xn, wqkv_ref) + bqkv_ref[...]            # (S, 48), one MXU push
        q = rope(qkv[:, :Q_F], cos_q, sa_q, sb_q)
        k = rope(qkv[:, Q_F:Q_F + KV_F], cos_k, sa_k, sb_k)
        v = qkv[:, Q_F + KV_F:]
        q16, k16, v16 = q.astype(bf16), k.astype(bf16), v.astype(bf16)

        # per-head scores staged into one (nH*S, S) slab (no concat trees)
        for hd in range(NUM_HEADS):
            g = hd // N_REP                               # GQA: share KV slice
            qh = q16[:, hd * HEAD_DIM:(hd + 1) * HEAD_DIM]
            kh = k16[:, g * HEAD_DIM:(g + 1) * HEAD_DIM]
            scores_ref[hd * seq:(hd + 1) * seq, :] = jax.lax.dot_general(
                qh, kh, (((1,), (1,)), ((), ())), preferred_element_type=f32)

        # one causal-bias add + one softmax over the whole (nH*S, S) slab
        s = scores_ref[...] + causal_bias
        m = jnp.max(s, axis=-1, keepdims=True)
        e = jnp.exp(s - m)
        p = (e * pl.reciprocal(jnp.sum(e, axis=-1, keepdims=True), approx=True)
             ).astype(bf16)

        # per-head p@v written directly into its lane slice of the attention slab
        for hd in range(NUM_HEADS):
            g = hd // N_REP
            attn_ref[:, hd * HEAD_DIM:(hd + 1) * HEAD_DIM] = jnp.dot(
                p[hd * seq:(hd + 1) * seq, :],
                v16[:, g * HEAD_DIM:(g + 1) * HEAD_DIM],
                preferred_element_type=f32)

        h = h + mm(attn_ref[...], wo_ref)                 # o_proj + residual

        # ---- MLP: rms -> fused gate|up (128 lanes) -> SwiGLU -> down + residual ----
        xn = rms(h)
        gu = mm(xn, wgu_ref)                              # (S, 2*I) == 128 lanes
        gate = gu[:, :INTERMEDIATE]
        up = gu[:, INTERMEDIATE:]
        h = h + mm(gate * jax.nn.sigmoid(gate) * up, wd_ref)

    # ---- final norm (gamma folded into head weight) + LM head (bias=True) ----
    hn = rms(h)
    out_ref[...] = mm(hn, head_wt_ref) + head_b_ref[...]  # (S, 128) unmasked lane-dense store


# --------------------------------- JAX wrapper ---------------------------------
def qwen2_forward(prepped, token_ids):
    # TODO(synk): past_key_values (KV cache) and user-supplied attention_mask are not
    # implemented; this covers the mask=None causal-prefill forward pass.
    B, S = token_ids.shape
    M = B * S

    # Embedding gather stays as a single tiny XLA op feeding the kernel.
    h0 = prepped["embed"][token_ids].reshape(M, HIDDEN).astype(jnp.float32)

    # RoPE tables (host-side, free): per-head cos, plus sign-folded + lane-masked sin
    # halves so in-kernel rotate_half is just two static lane rolls.
    pos = jnp.arange(S, dtype=jnp.float32)
    inv_freq = 1.0 / (ROPE_THETA ** (jnp.arange(0, HEAD_DIM, 2, dtype=jnp.float32) / HEAD_DIM))
    emb = jnp.concatenate([pos[:, None] * inv_freq[None, :]] * 2, axis=-1)   # (S, D)
    cos_h, sin_h = jnp.cos(emb), jnp.sin(emb)
    first_half = jnp.arange(HEAD_DIM) < ROPE_HALF
    sin_a = jnp.where(first_half, -sin_h, 0.0)            # contributes at first-half lanes
    sin_b = jnp.where(first_half, 0.0, sin_h)             # contributes at second-half lanes
    cos_q = jnp.tile(cos_h, (1, NUM_HEADS)).astype(jnp.float32)              # (S, Q_F)
    sin_aq = jnp.tile(sin_a, (1, NUM_HEADS)).astype(jnp.float32)
    sin_bq = jnp.tile(sin_b, (1, NUM_HEADS)).astype(jnp.float32)

    # Additive causal bias, tiled per head so it is applied once to the whole score slab.
    causal = jnp.where(jnp.arange(S)[:, None] >= jnp.arange(S)[None, :], 0.0, -1e30)
    causal_bias = jnp.tile(causal.astype(jnp.float32), (NUM_HEADS, 1))       # (nH*S, S)

    inputs = [h0, cos_q, sin_aq, sin_bq, causal_bias]
    for layer in prepped["layers"]:
        inputs += [layer["wqkv_t"], layer["bqkv"], layer["wo_t"],
                   layer["wgu_t"], layer["wd_t"]]
    inputs += [prepped["head_wt"], prepped["head_b"]]

    # Per-batch row slab for activations/output; full-array broadcast blocks for the rest.
    in_specs = [pl.BlockSpec((S, HIDDEN), lambda b: (b, 0))]
    in_specs += [pl.BlockSpec(a.shape, lambda b: (0, 0)) for a in inputs[1:]]

    out = pl.pallas_call(
        functools.partial(_qwen2_forward_kernel, seq=S),
        out_shape=jax.ShapeDtypeStruct((M, VOCAB_PAD), jnp.float32),
        grid=(B,),
        in_specs=in_specs,
        out_specs=pl.BlockSpec((S, VOCAB_PAD), lambda b: (b, 0)),
        scratch_shapes=[pltpu.VMEM((NUM_HEADS * S, S), jnp.float32),   # per-head scores
                        pltpu.VMEM((S, Q_F), jnp.float32)],            # attention output slab
        compiler_params=pltpu.CompilerParams(
            dimension_semantics=("parallel",)),          # 2nd TensorCore on v7x
    )(*inputs)
    return out[:, :VOCAB].reshape(B, S, VOCAB)


# ------------------------------ parameter handling ------------------------------
def init_params(key):
    """Parameters in the PyTorch nn.Linear convention [out_features, in_features]."""
    def nxt():
        nonlocal key
        key, sub = jax.random.split(key)
        return sub

    def w(shape, scale=0.02):
        return (scale * jax.random.normal(nxt(), shape)).astype(jnp.float32)

    params = {
        "embed": w((VOCAB, HIDDEN)),
        "final_ln": jnp.ones((HIDDEN,), jnp.float32),
        "head_w": w((VOCAB, HIDDEN)),
        "head_b": w((VOCAB,)),
        "layers": [],
    }
    for _ in range(NUM_LAYERS):
        params["layers"].append(
            {
                "input_ln": jnp.ones((HIDDEN,), jnp.float32),
                "post_ln": jnp.ones((HIDDEN,), jnp.float32),
                "q_w": w((NUM_HEADS * HEAD_DIM, HIDDEN)),
                "q_b": w((NUM_HEADS * HEAD_DIM,)),
                "k_w": w((NUM_KV_HEADS * HEAD_DIM, HIDDEN)),
                "k_b": w((NUM_KV_HEADS * HEAD_DIM,)),
                "v_w": w((NUM_KV_HEADS * HEAD_DIM, HIDDEN)),
                "v_b": w((NUM_KV_HEADS * HEAD_DIM,)),
                "o_w": w((HIDDEN, NUM_HEADS * HEAD_DIM)),
                "gate_w": w((INTERMEDIATE, HIDDEN)),
                "up_w": w((INTERMEDIATE, HIDDEN)),
                "down_w": w((HIDDEN, INTERMEDIATE)),
            }
        )
    return params


def prepare_params(params):
    """Fuse QKV / gate|up, fold RMSNorm gammas + 1/sqrt(D) scale, pre-transpose to
    (in, out), pad the LM head to 128 lanes, and cast weight matrices to bf16."""
    bf16 = jnp.bfloat16
    scale = 1.0 / math.sqrt(HEAD_DIM)

    head_wt = (params["head_w"] * params["final_ln"][None, :]).T             # (H, V)
    head_wt = jnp.pad(head_wt, ((0, 0), (0, VOCAB_PAD - VOCAB)))             # (H, 128)
    head_b = jnp.pad(params["head_b"], (0, VOCAB_PAD - VOCAB)).reshape(1, VOCAB_PAD)

    prepped = {
        "embed": params["embed"],
        "head_wt": head_wt.astype(bf16),
        "head_b": head_b.astype(jnp.float32),
        "layers": [],
    }
    for layer in params["layers"]:
        wqkv = jnp.concatenate(
            [layer["q_w"] * scale, layer["k_w"], layer["v_w"]], axis=0)      # (48, H)
        bqkv = jnp.concatenate(
            [layer["q_b"] * scale, layer["k_b"], layer["v_b"]], axis=0)      # (48,)
        wqkv_t = (wqkv * layer["input_ln"][None, :]).T                       # (H, 48), gamma folded
        wgu = jnp.concatenate([layer["gate_w"], layer["up_w"]], axis=0)      # (2I, H)
        wgu_t = (wgu * layer["post_ln"][None, :]).T                          # (H, 2I), gamma folded
        prepped["layers"].append({
            "wqkv_t": wqkv_t.astype(bf16),
            "bqkv": bqkv.reshape(1, -1).astype(jnp.float32),
            "wo_t": layer["o_w"].T.astype(bf16),                             # (nH*D, H)
            "wgu_t": wgu_t.astype(bf16),
            "wd_t": layer["down_w"].T.astype(bf16),                          # (I, H)
        })
    return prepped


# ------------------------- pure-JAX reference (for checking) -------------------------
def _reference_forward(params, token_ids):
    B, S = token_ids.shape
    pos = jnp.arange(S, dtype=jnp.float32)
    inv_freq = 1.0 / (ROPE_THETA ** (jnp.arange(0, HEAD_DIM, 2, dtype=jnp.float32) / HEAD_DIM))
    freqs = pos[:, None] * inv_freq[None, :]
    emb = jnp.concatenate([freqs, freqs], axis=-1)
    cos = jnp.cos(emb)[None, None]
    sin = jnp.sin(emb)[None, None]

    def rot_half(x):
        x1, x2 = jnp.split(x, 2, axis=-1)
        return jnp.concatenate([-x2, x1], axis=-1)

    def rms(x, w):
        var = jnp.mean(x * x, axis=-1, keepdims=True)
        return x * jax.lax.rsqrt(var + RMS_EPS) * w

    h = params["embed"][token_ids]
    for layer in params["layers"]:
        hn = rms(h, layer["input_ln"])
        q = hn @ layer["q_w"].T + layer["q_b"]
        k = hn @ layer["k_w"].T + layer["k_b"]
        v = hn @ layer["v_w"].T + layer["v_b"]
        q = q.reshape(B, S, NUM_HEADS, HEAD_DIM).transpose(0, 2, 1, 3)
        k = k.reshape(B, S, NUM_KV_HEADS, HEAD_DIM).transpose(0, 2, 1, 3)
        v = v.reshape(B, S, NUM_KV_HEADS, HEAD_DIM).transpose(0, 2, 1, 3)
        q = q * cos + rot_half(q) * sin
        k = k * cos + rot_half(k) * sin
        k = jnp.repeat(k, N_REP, axis=1)
        v = jnp.repeat(v, N_REP, axis=1)
        s = jnp.einsum("bhqd,bhkd->bhqk", q, k) / math.sqrt(HEAD_DIM)
        s = jnp.where(jnp.tril(jnp.ones((S, S), bool)), s, -1e30)
        p = jax.nn.softmax(s, axis=-1)
        o = jnp.einsum("bhqk,bhkd->bhqd", p, v).transpose(0, 2, 1, 3).reshape(B, S, HIDDEN)
        h = h + o @ layer["o_w"].T
        hn = rms(h, layer["post_ln"])
        g = hn @ layer["gate_w"].T
        u = hn @ layer["up_w"].T
        h = h + ((g * jax.nn.sigmoid(g)) * u) @ layer["down_w"].T
    h = rms(h, params["final_ln"])
    return h @ params["head_w"].T + params["head_b"]


# ----------------------------------- main -------------------------------------
if __name__ == "__main__":
    key = jax.random.PRNGKey(0)
    params = init_params(key)
    prepped = prepare_params(params)
    token_ids = jax.random.randint(jax.random.PRNGKey(0), (2, 8), 0, VOCAB, dtype=jnp.int32)

    fwd = jax.jit(qwen2_forward)
    logits = fwd(prepped, token_ids)
    jax.block_until_ready(logits)

    assert logits.shape == (2, 8, VOCAB) and logits.dtype == jnp.float32
    assert bool(jnp.all(jnp.isfinite(logits)))

    # Sanity-check against a pure-JAX reference of the original module structure
    # (bf16 weights + approx reciprocal stay well inside this tolerance).
    ref = jax.jit(_reference_forward)(params, token_ids)
    max_err = float(jnp.max(jnp.abs(logits - ref)))
    assert bool(jnp.allclose(logits, ref, rtol=2e-2, atol=2e-2)), max_err

    print("KERNEL_OK")
</pallas_src>

<mosaic_0001>
module attributes {stable_mosaic.version = 11 : i64} {
  func.func @_qwen2_forward_kernel(%arg0: i32, %arg1: memref<8x32xf32, #tpu.memory_space<vmem>>, %arg2: memref<8x32xf32, #tpu.memory_space<vmem>>, %arg3: memref<8x32xf32, #tpu.memory_space<vmem>>, %arg4: memref<8x32xf32, #tpu.memory_space<vmem>>, %arg5: memref<32x8xf32, #tpu.memory_space<vmem>>, %arg6: memref<32x64xbf16, #tpu.memory_space<vmem>>, %arg7: memref<1x64xf32, #tpu.memory_space<vmem>>, %arg8: memref<32x32xbf16, #tpu.memory_space<vmem>>, %arg9: memref<32x128xbf16, #tpu.memory_space<vmem>>, %arg10: memref<64x32xbf16, #tpu.memory_space<vmem>>, %arg11: memref<32x64xbf16, #tpu.memory_space<vmem>>, %arg12: memref<1x64xf32, #tpu.memory_space<vmem>>, %arg13: memref<32x32xbf16, #tpu.memory_space<vmem>>, %arg14: memref<32x128xbf16, #tpu.memory_space<vmem>>, %arg15: memref<64x32xbf16, #tpu.memory_space<vmem>>, %arg16: memref<32x128xbf16, #tpu.memory_space<vmem>>, %arg17: memref<1x128xf32, #tpu.memory_space<vmem>>, %arg18: memref<8x128xf32, #tpu.memory_space<vmem>>, %arg19: memref<32x8xf32, #tpu.memory_space<vmem>>, %arg20: memref<8x32xf32, #tpu.memory_space<vmem>>) attributes {dimension_semantics = [#tpu.dimension_semantics<parallel>], iteration_bounds = array<i64: 2>, scalar_prefetch = 0 : i64, scratch_operands = 2 : i64, tpu.core_type = #tpu.core_type<tc>, window_params = [{transform_indices = @transform_0, window_bounds = array<i64: 8, 32>}, {pipeline_mode = #tpu.pipeline_mode<synchronous>, transform_indices = @transform_1, window_bounds = array<i64: 8, 32>}, {pipeline_mode = #tpu.pipeline_mode<synchronous>, transform_indices = @transform_2, window_bounds = array<i64: 8, 32>}, {pipeline_mode = #tpu.pipeline_mode<synchronous>, transform_indices = @transform_3, window_bounds = array<i64: 8, 32>}, {pipeline_mode = #tpu.pipeline_mode<synchronous>, transform_indices = @transform_4, window_bounds = array<i64: 32, 8>}, {pipeline_mode = #tpu.pipeline_mode<synchronous>, transform_indices = @transform_5, window_bounds = array<i64: 32, 64>}, {pipeline_mode = #tpu.pipeline_mode<synchronous>, transform_indices = @transform_6, window_bounds = array<i64: 1, 64>}, {pipeline_mode = #tpu.pipeline_mode<synchronous>, transform_indices = @transform_7, window_bounds = array<i64: 32, 32>}, {pipeline_mode = #tpu.pipeline_mode<synchronous>, transform_indices = @transform_8, window_bounds = array<i64: 32, 128>}, {pipeline_mode = #tpu.pipeline_mode<synchronous>, transform_indices = @transform_9, window_bounds = array<i64: 64, 32>}, {pipeline_mode = #tpu.pipeline_mode<synchronous>, transform_indices = @transform_10, window_bounds = array<i64: 32, 64>}, {pipeline_mode = #tpu.pipeline_mode<synchronous>, transform_indices = @transform_11, window_bounds = array<i64: 1, 64>}, {pipeline_mode = #tpu.pipeline_mode<synchronous>, transform_indices = @transform_12, window_bounds = array<i64: 32, 32>}, {pipeline_mode = #tpu.pipeline_mode<synchronous>, transform_indices = @transform_13, window_bounds = array<i64: 32, 128>}, {pipeline_mode = #tpu.pipeline_mode<synchronous>, transform_indices = @transform_14, window_bounds = array<i64: 64, 32>}, {pipeline_mode = #tpu.pipeline_mode<synchronous>, transform_indices = @transform_15, window_bounds = array<i64: 32, 128>}, {pipeline_mode = #tpu.pipeline_mode<synchronous>, transform_indices = @transform_16, window_bounds = array<i64: 1, 128>}, {transform_indices = @transform_17, window_bounds = array<i64: 8, 128>}]} {
    %c0 = arith.constant 0 : index
    %c0_0 = arith.constant 0 : index
    %0 = vector.load %arg2[%c0, %c0_0] : memref<8x32xf32, #tpu.memory_space<vmem>>, vector<8x32xf32>
    %c0_1 = arith.constant 0 : index
    %c0_2 = arith.constant 0 : index
    %1 = vector.load %arg3[%c0_1, %c0_2] : memref<8x32xf32, #tpu.memory_space<vmem>>, vector<8x32xf32>
    %c0_3 = arith.constant 0 : index
    %c0_4 = arith.constant 0 : index
    %2 = vector.load %arg4[%c0_3, %c0_4] : memref<8x32xf32, #tpu.memory_space<vmem>>, vector<8x32xf32>
    %3 = vector.extract_strided_slice %0 {offsets = [0, 0], sizes = [8, 16], strides = [1, 1]} : vector<8x32xf32> to vector<8x16xf32>
    %4 = vector.extract_strided_slice %1 {offsets = [0, 0], sizes = [8, 16], strides = [1, 1]} : vector<8x32xf32> to vector<8x16xf32>
    %5 = vector.extract_strided_slice %2 {offsets = [0, 0], sizes = [8, 16], strides = [1, 1]} : vector<8x32xf32> to vector<8x16xf32>
    %c0_5 = arith.constant 0 : index
    %c0_6 = arith.constant 0 : index
    %6 = vector.load %arg5[%c0_5, %c0_6] : memref<32x8xf32, #tpu.memory_space<vmem>>, vector<32x8xf32>
    %c0_7 = arith.constant 0 : index
    %c0_8 = arith.constant 0 : index
    %7 = vector.load %arg1[%c0_7, %c0_8] : memref<8x32xf32, #tpu.memory_space<vmem>>, vector<8x32xf32>
    %8 = arith.mulf %7, %7 : vector<8x32xf32>
    %cst = arith.constant dense<0.000000e+00> : vector<8xf32>
    %9 = vector.multi_reduction <add>, %8, %cst [1] : vector<8x32xf32> to vector<8xf32>
    %10 = vector.shape_cast %9 : vector<8xf32> to vector<8x1xf32>
    %cst_9 = arith.constant 3.200000e+01 : f32
    %11 = vector.broadcast %cst_9 : f32 to vector<8x1xf32>
    %12 = arith.divf %10, %11 : vector<8x1xf32>
    %cst_10 = arith.constant 9.99999997E-7 : f32
    %13 = vector.broadcast %cst_10 : f32 to vector<8x1xf32>
    %14 = arith.addf %12, %13 : vector<8x1xf32>
    %15 = math.rsqrt %14 : vector<8x1xf32>
    %16 = vector.broadcast %15 : vector<8x1xf32> to vector<8x32xf32>
    %17 = arith.mulf %7, %16 : vector<8x32xf32>
    %18 = arith.truncf %17 : vector<8x32xf32> to vector<8x32xbf16>
    %c0_11 = arith.constant 0 : index
    %c0_12 = arith.constant 0 : index
    %19 = vector.load %arg6[%c0_11, %c0_12] : memref<32x64xbf16, #tpu.memory_space<vmem>>, vector<32x64xbf16>
    %cst_13 = arith.constant dense<0.000000e+00> : vector<8x64xf32>
    %20 = tpu.matmul %18, %19, %cst_13 {dimension_numbers = #tpu.dot_dimension_numbers<[1], [0], [0], [1], [0, 0, 1, 1], [], []>} : vector<8x32xbf16>, vector<32x64xbf16>, vector<8x64xf32> -> vector<8x64xf32>
    %c0_14 = arith.constant 0 : index
    %c0_15 = arith.constant 0 : index
    %21 = vector.load %arg7[%c0_14, %c0_15] : memref<1x64xf32, #tpu.memory_space<vmem>>, vector<1x64xf32>
    %22 = vector.broadcast %21 : vector<1x64xf32> to vector<8x64xf32>
    %23 = arith.addf %20, %22 : vector<8x64xf32>
    %24 = vector.extract_strided_slice %23 {offsets = [0, 0], sizes = [8, 32], strides = [1, 1]} : vector<8x64xf32> to vector<8x32xf32>
    %25 = arith.mulf %24, %0 : vector<8x32xf32>
    %26 = vector.extract_strided_slice %24 {offsets = [0, 4], sizes = [8, 28], strides = [1, 1]} : vector<8x32xf32> to vector<8x28xf32>
    %27 = vector.extract_strided_slice %24 {offsets = [0, 0], sizes = [8, 4], strides = [1, 1]} : vector<8x32xf32> to vector<8x4xf32>
    %28 = tpu.concatenate %26, %27 in 1 : vector<8x28xf32>, vector<8x4xf32> -> vector<8x32xf32>
    %29 = arith.mulf %28, %1 : vector<8x32xf32>
    %30 = arith.addf %25, %29 : vector<8x32xf32>
    %31 = vector.extract_strided_slice %24 {offsets = [0, 28], sizes = [8, 4], strides = [1, 1]} : vector<8x32xf32> to vector<8x4xf32>
    %32 = vector.extract_strided_slice %24 {offsets = [0, 0], sizes = [8, 28], strides = [1, 1]} : vector<8x32xf32> to vector<8x28xf32>
    %33 = tpu.concatenate %31, %32 in 1 : vector<8x4xf32>, vector<8x28xf32> -> vector<8x32xf32>
    %34 = arith.mulf %33, %2 : vector<8x32xf32>
    %35 = arith.addf %30, %34 : vector<8x32xf32>
    %36 = vector.extract_strided_slice %23 {offsets = [0, 32], sizes = [8, 16], strides = [1, 1]} : vector<8x64xf32> to vector<8x16xf32>
    %37 = arith.mulf %36, %3 : vector<8x16xf32>
    %38 = vector.extract_strided_slice %36 {offsets = [0, 4], sizes = [8, 12], strides = [1, 1]} : vector<8x16xf32> to vector<8x12xf32>
    %39 = vector.extract_strided_slice %36 {offsets = [0, 0], sizes = [8, 4], strides = [1, 1]} : vector<8x16xf32> to vector<8x4xf32>
    %40 = tpu.concatenate %38, %39 in 1 : vector<8x12xf32>, vector<8x4xf32> -> vector<8x16xf32>
    %41 = arith.mulf %40, %4 : vector<8x16xf32>
    %42 = arith.addf %37, %41 : vector<8x16xf32>
    %43 = vector.extract_strided_slice %36 {offsets = [0, 12], sizes = [8, 4], strides = [1, 1]} : vector<8x16xf32> to vector<8x4xf32>
    %44 = vector.extract_strided_slice %36 {offsets = [0, 0], sizes = [8, 12], strides = [1, 1]} : vector<8x16xf32> to vector<8x12xf32>
    %45 = tpu.concatenate %43, %44 in 1 : vector<8x4xf32>, vector<8x12xf32> -> vector<8x16xf32>
    %46 = arith.mulf %45, %5 : vector<8x16xf32>
    %47 = arith.addf %42, %46 : vector<8x16xf32>
    %48 = vector.extract_strided_slice %23 {offsets = [0, 48], sizes = [8, 16], strides = [1, 1]} : vector<8x64xf32> to vector<8x16xf32>
    %49 = arith.truncf %35 : vector<8x32xf32> to vector<8x32xbf16>
    %50 = arith.truncf %47 : vector<8x16xf32> to vector<8x16xbf16>
    %51 = arith.truncf %48 : vector<8x16xf32> to vector<8x16xbf16>
    %52 = vector.extract_strided_slice %49 {offsets = [0, 0], sizes = [8, 8], strides = [1, 1]} : vector<8x32xbf16> to vector<8x8xbf16>
    %53 = vector.extract_strided_slice %50 {offsets = [0, 0], sizes = [8, 8], strides = [1, 1]} : vector<8x16xbf16> to vector<8x8xbf16>
    %cst_16 = arith.constant dense<0.000000e+00> : vector<8x8xf32>
    %54 = tpu.matmul %52, %53, %cst_16 {dimension_numbers = #tpu.dot_dimension_numbers<[1], [1], [0], [0], [0, 0, 1, 0], [], []>} : vector<8x8xbf16>, vector<8x8xbf16>, vector<8x8xf32> -> vector<8x8xf32>
    %c0_17 = arith.constant 0 : index
    %c0_18 = arith.constant 0 : index
    %55 = vector.load %arg19[%c0_17, %c0_18] : memref<32x8xf32, #tpu.memory_space<vmem>>, vector<8x8xf32>
    tpu.vector_store %arg19[%c0_17, %c0_18], %54 {strides = array<i32>} : memref<32x8xf32, #tpu.memory_space<vmem>>, vector<8x8xf32>,
    %56 = vector.extract_strided_slice %49 {offsets = [0, 8], sizes = [8, 8], strides = [1, 1]} : vector<8x32xbf16> to vector<8x8xbf16>
    %57 = vector.extract_strided_slice %50 {offsets = [0, 0], sizes = [8, 8], strides = [1, 1]} : vector<8x16xbf16> to vector<8x8xbf16>
    %cst_19 = arith.constant dense<0.000000e+00> : vector<8x8xf32>
    %58 = tpu.matmul %56, %57, %cst_19 {dimension_numbers = #tpu.dot_dimension_numbers<[1], [1], [0], [0], [0, 0, 1, 0], [], []>} : vector<8x8xbf16>, vector<8x8xbf16>, vector<8x8xf32> -> vector<8x8xf32>
    %c8 = arith.constant 8 : index
    %c0_20 = arith.constant 0 : index
    %59 = vector.load %arg19[%c8, %c0_20] : memref<32x8xf32, #tpu.memory_space<vmem>>, vector<8x8xf32>
    tpu.vector_store %arg19[%c8, %c0_20], %58 {strides = array<i32>} : memref<32x8xf32, #tpu.memory_space<vmem>>, vector<8x8xf32>,
    %60 = vector.extract_strided_slice %49 {offsets = [0, 16], sizes = [8, 8], strides = [1, 1]} : vector<8x32xbf16> to vector<8x8xbf16>
    %61 = vector.extract_strided_slice %50 {offsets = [0, 8], sizes = [8, 8], strides = [1, 1]} : vector<8x16xbf16> to vector<8x8xbf16>
    %cst_21 = arith.constant dense<0.000000e+00> : vector<8x8xf32>
    %62 = tpu.matmul %60, %61, %cst_21 {dimension_numbers = #tpu.dot_dimension_numbers<[1], [1], [0], [0], [0, 0, 1, 0], [], []>} : vector<8x8xbf16>, vector<8x8xbf16>, vector<8x8xf32> -> vector<8x8xf32>
    %c16 = arith.constant 16 : index
    %c0_22 = arith.constant 0 : index
    %63 = vector.load %arg19[%c16, %c0_22] : memref<32x8xf32, #tpu.memory_space<vmem>>, vector<8x8xf32>
    tpu.vector_store %arg19[%c16, %c0_22], %62 {strides = array<i32>} : memref<32x8xf32, #tpu.memory_space<vmem>>, vector<8x8xf32>,
    %64 = vector.extract_strided_slice %49 {offsets = [0, 24], sizes = [8, 8], strides = [1, 1]} : vector<8x32xbf16> to vector<8x8xbf16>
    %65 = vector.extract_strided_slice %50 {offsets = [0, 8], sizes = [8, 8], strides = [1, 1]} : vector<8x16xbf16> to vector<8x8xbf16>
    %cst_23 = arith.constant dense<0.000000e+00> : vector<8x8xf32>
    %66 = tpu.matmul %64, %65, %cst_23 {dimension_numbers = #tpu.dot_dimension_numbers<[1], [1], [0], [0], [0, 0, 1, 0], [], []>} : vector<8x8xbf16>, vector<8x8xbf16>, vector<8x8xf32> -> vector<8x8xf32>
    %c24 = arith.constant 24 : index
    %c0_24 = arith.constant 0 : index
    %67 = vector.load %arg19[%c24, %c0_24] : memref<32x8xf32, #tpu.memory_space<vmem>>, vector<8x8xf32>
    tpu.vector_store %arg19[%c24, %c0_24], %66 {strides = array<i32>} : memref<32x8xf32, #tpu.memory_space<vmem>>, vector<8x8xf32>,
    %c0_25 = arith.constant 0 : index
    %c0_26 = arith.constant 0 : index
    %68 = vector.load %arg19[%c0_25, %c0_26] : memref<32x8xf32, #tpu.memory_space<vmem>>, vector<32x8xf32>
    %69 = arith.addf %68, %6 : vector<32x8xf32>
    %cst_27 = arith.constant dense<0xFF800000> : vector<32xf32>
    %70 = vector.multi_reduction <maximumf>, %69, %cst_27 [1] : vector<32x8xf32> to vector<32xf32>
    %71 = vector.shape_cast %70 : vector<32xf32> to vector<32x1xf32>
    %72 = vector.broadcast %71 : vector<32x1xf32> to vector<32x8xf32>
    %73 = arith.subf %69, %72 : vector<32x8xf32>
    %74 = math.exp %73 : vector<32x8xf32>
    %cst_28 = arith.constant dense<0.000000e+00> : vector<32xf32>
    %75 = vector.multi_reduction <add>, %74, %cst_28 [1] : vector<32x8xf32> to vector<32xf32>
    %76 = vector.shape_cast %75 : vector<32xf32> to vector<32x1xf32>
    %77 = tpu.reciprocal %76 {approx = true} : vector<32x1xf32> -> vector<32x1xf32>
    %78 = vector.broadcast %77 : vector<32x1xf32> to vector<32x8xf32>
    %79 = arith.mulf %74, %78 : vector<32x8xf32>
    %80 = arith.truncf %79 : vector<32x8xf32> to vector<32x8xbf16>
    %81 = vector.extract_strided_slice %80 {offsets = [0, 0], sizes = [8, 8], strides = [1, 1]} : vector<32x8xbf16> to vector<8x8xbf16>
    %82 = vector.extract_strided_slice %51 {offsets = [0, 0], sizes = [8, 8], strides = [1, 1]} : vector<8x16xbf16> to vector<8x8xbf16>
    %cst_29 = arith.constant dense<0.000000e+00> : vector<8x8xf32>
    %83 = tpu.matmul %81, %82, %cst_29 {dimension_numbers = #tpu.dot_dimension_numbers<[1], [0], [0], [1], [0, 0, 1, 1], [], []>} : vector<8x8xbf16>, vector<8x8xbf16>, vector<8x8xf32> -> vector<8x8xf32>
    %c0_30 = arith.constant 0 : index
    %c0_31 = arith.constant 0 : index
    %84 = vector.load %arg20[%c0_30, %c0_31] : memref<8x32xf32, #tpu.memory_space<vmem>>, vector<8x8xf32>
    tpu.vector_store %arg20[%c0_30, %c0_31], %83 {strides = array<i32>} : memref<8x32xf32, #tpu.memory_space<vmem>>, vector<8x8xf32>,
    %85 = vector.extract_strided_slice %80 {offsets = [8, 0], sizes = [8, 8], strides = [1, 1]} : vector<32x8xbf16> to vector<8x8xbf16>
    %86 = vector.extract_strided_slice %51 {offsets = [0, 0], sizes = [8, 8], strides = [1, 1]} : vector<8x16xbf16> to vector<8x8xbf16>
    %cst_32 = arith.constant dense<0.000000e+00> : vector<8x8xf32>
    %87 = tpu.matmul %85, %86, %cst_32 {dimension_numbers = #tpu.dot_dimension_numbers<[1], [0], [0], [1], [0, 0, 1, 1], [], []>} : vector<8x8xbf16>, vector<8x8xbf16>, vector<8x8xf32> -> vector<8x8xf32>
    %c0_33 = arith.constant 0 : index
    %c8_34 = arith.constant 8 : index
    %88 = vector.load %arg20[%c0_33, %c8_34] : memref<8x32xf32, #tpu.memory_space<vmem>>, vector<8x8xf32>
    tpu.vector_store %arg20[%c0_33, %c8_34], %87 {strides = array<i32>} : memref<8x32xf32, #tpu.memory_space<vmem>>, vector<8x8xf32>,
    %89 = vector.extract_strided_slice %80 {offsets = [16, 0], sizes = [8, 8], strides = [1, 1]} : vector<32x8xbf16> to vector<8x8xbf16>
    %90 = vector.extract_strided_slice %51 {offsets = [0, 8], sizes = [8, 8], strides = [1, 1]} : vector<8x16xbf16> to vector<8x8xbf16>
    %cst_35 = arith.constant dense<0.000000e+00> : vector<8x8xf32>
    %91 = tpu.matmul %89, %90, %cst_35 {dimension_numbers = #tpu.dot_dimension_numbers<[1], [0], [0], [1], [0, 0, 1, 1], [], []>} : vector<8x8xbf16>, vector<8x8xbf16>, vector<8x8xf32> -> vector<8x8xf32>
    %c0_36 = arith.constant 0 : index
    %c16_37 = arith.constant 16 : index
    %92 = vector.load %arg20[%c0_36, %c16_37] : memref<8x32xf32, #tpu.memory_space<vmem>>, vector<8x8xf32>
    tpu.vector_store %arg20[%c0_36, %c16_37], %91 {strides = array<i32>} : memref<8x32xf32, #tpu.memory_space<vmem>>, vector<8x8xf32>,
    %93 = vector.extract_strided_slice %80 {offsets = [24, 0], sizes = [8, 8], strides = [1, 1]} : vector<32x8xbf16> to vector<8x8xbf16>
    %94 = vector.extract_strided_slice %51 {offsets = [0, 8], sizes = [8, 8], strides = [1, 1]} : vector<8x16xbf16> to vector<8x8xbf16>
    %cst_38 = arith.constant dense<0.000000e+00> : vector<8x8xf32>
    %95 = tpu.matmul %93, %94, %cst_38 {dimension_numbers = #tpu.dot_dimension_numbers<[1], [0], [0], [1], [0, 0, 1, 1], [], []>} : vector<8x8xbf16>, vector<8x8xbf16>, vector<8x8xf32> -> vector<8x8xf32>
    %c0_39 = arith.constant 0 : index
    %c24_40 = arith.constant 24 : index
    %96 = vector.load %arg20[%c0_39, %c24_40] : memref<8x32xf32, #tpu.memory_space<vmem>>, vector<8x8xf32>
    tpu.vector_store %arg20[%c0_39, %c24_40], %95 {strides = array<i32>} : memref<8x32xf32, #tpu.memory_space<vmem>>, vector<8x8xf32>,
    %c0_41 = arith.constant 0 : index
    %c0_42 = arith.constant 0 : index
    %97 = vector.load %arg20[%c0_41, %c0_42] : memref<8x32xf32, #tpu.memory_space<vmem>>, vector<8x32xf32>
    %98 = arith.truncf %97 : vector<8x32xf32> to vector<8x32xbf16>
    %c0_43 = arith.constant 0 : index
    %c0_44 = arith.constant 0 : index
    %99 = vector.load %arg8[%c0_43, %c0_44] : memref<32x32xbf16, #tpu.memory_space<vmem>>, vector<32x32xbf16>
    %cst_45 = arith.constant dense<0.000000e+00> : vector<8x32xf32>
    %100 = tpu.matmul %98, %99, %cst_45 {dimension_numbers = #tpu.dot_dimension_numbers<[1], [0], [0], [1], [0, 0, 1, 1], [], []>} : vector<8x32xbf16>, vector<32x32xbf16>, vector<8x32xf32> -> vector<8x32xf32>
    %101 = arith.addf %7, %100 : vector<8x32xf32>
    %102 = arith.mulf %101, %101 : vector<8x32xf32>
    %cst_46 = arith.constant dense<0.000000e+00> : vector<8xf32>
    %103 = vector.multi_reduction <add>, %102, %cst_46 [1] : vector<8x32xf32> to vector<8xf32>
    %104 = vector.shape_cast %103 : vector<8xf32> to vector<8x1xf32>
    %cst_47 = arith.constant 3.200000e+01 : f32
    %105 = vector.broadcast %cst_47 : f32 to vector<8x1xf32>
    %106 = arith.divf %104, %105 : vector<8x1xf32>
    %cst_48 = arith.constant 9.99999997E-7 : f32
    %107 = vector.broadcast %cst_48 : f32 to vector<8x1xf32>
    %108 = arith.addf %106, %107 : vector<8x1xf32>
    %109 = math.rsqrt %108 : vector<8x1xf32>
    %110 = vector.broadcast %109 : vector<8x1xf32> to vector<8x32xf32>
    %111 = arith.mulf %101, %110 : vector<8x32xf32>
    %112 = arith.truncf %111 : vector<8x32xf32> to vector<8x32xbf16>
    %c0_49 = arith.constant 0 : index
    %c0_50 = arith.constant 0 : index
    %113 = vector.load %arg9[%c0_49, %c0_50] : memref<32x128xbf16, #tpu.memory_space<vmem>>, vector<32x128xbf16>
    %cst_51 = arith.constant dense<0.000000e+00> : vector<8x128xf32>
    %114 = tpu.matmul %112, %113, %cst_51 {dimension_numbers = #tpu.dot_dimension_numbers<[1], [0], [0], [1], [0, 0, 1, 1], [], []>} : vector<8x32xbf16>, vector<32x128xbf16>, vector<8x128xf32> -> vector<8x128xf32>
    %115 = vector.extract_strided_slice %114 {offsets = [0, 0], sizes = [8, 64], strides = [1, 1]} : vector<8x128xf32> to vector<8x64xf32>
    %116 = vector.extract_strided_slice %114 {offsets = [0, 64], sizes = [8, 64], strides = [1, 1]} : vector<8x128xf32> to vector<8x64xf32>
    %117 = arith.negf %115 : vector<8x64xf32>
    %118 = math.exp %117 : vector<8x64xf32>
    %cst_52 = arith.constant 1.000000e+00 : f32
    %119 = vector.broadcast %cst_52 : f32 to vector<8x64xf32>
    %120 = arith.addf %119, %118 : vector<8x64xf32>
    %121 = arith.divf %119, %120 : vector<8x64xf32>
    %122 = arith.mulf %115, %121 : vector<8x64xf32>
    %123 = arith.mulf %122, %116 : vector<8x64xf32>
    %124 = arith.truncf %123 : vector<8x64xf32> to vector<8x64xbf16>
    %c0_53 = arith.constant 0 : index
    %c0_54 = arith.constant 0 : index
    %125 = vector.load %arg10[%c0_53, %c0_54] : memref<64x32xbf16, #tpu.memory_space<vmem>>, vector<64x32xbf16>
    %cst_55 = arith.constant dense<0.000000e+00> : vector<8x32xf32>
    %126 = tpu.matmul %124, %125, %cst_55 {dimension_numbers = #tpu.dot_dimension_numbers<[1], [0], [0], [1], [0, 0, 1, 1], [], []>} : vector<8x64xbf16>, vector<64x32xbf16>, vector<8x32xf32> -> vector<8x32xf32>
    %127 = arith.addf %101, %126 : vector<8x32xf32>
    %128 = arith.mulf %127, %127 : vector<8x32xf32>
    %cst_56 = arith.constant dense<0.000000e+00> : vector<8xf32>
    %129 = vector.multi_reduction <add>, %128, %cst_56 [1] : vector<8x32xf32> to vector<8xf32>
    %130 = vector.shape_cast %129 : vector<8xf32> to vector<8x1xf32>
    %cst_57 = arith.constant 3.200000e+01 : f32
    %131 = vector.broadcast %cst_57 : f32 to vector<8x1xf32>
    %132 = arith.divf %130, %131 : vector<8x1xf32>
    %cst_58 = arith.constant 9.99999997E-7 : f32
    %133 = vector.broadcast %cst_58 : f32 to vector<8x1xf32>
    %134 = arith.addf %132, %133 : vector<8x1xf32>
    %135 = math.rsqrt %134 : vector<8x1xf32>
    %136 = vector.broadcast %135 : vector<8x1xf32> to vector<8x32xf32>
    %137 = arith.mulf %127, %136 : vector<8x32xf32>
    %138 = arith.truncf %137 : vector<8x32xf32> to vector<8x32xbf16>
    %c0_59 = arith.constant 0 : index
    %c0_60 = arith.constant 0 : index
    %139 = vector.load %arg11[%c0_59, %c0_60] : memref<32x64xbf16, #tpu.memory_space<vmem>>, vector<32x64xbf16>
    %cst_61 = arith.constant dense<0.000000e+00> : vector<8x64xf32>
    %140 = tpu.matmul %138, %139, %cst_61 {dimension_numbers = #tpu.dot_dimension_numbers<[1], [0], [0], [1], [0, 0, 1, 1], [], []>} : vector<8x32xbf16>, vector<32x64xbf16>, vector<8x64xf32> -> vector<8x64xf32>
    %c0_62 = arith.constant 0 : index
    %c0_63 = arith.constant 0 : index
    %141 = vector.load %arg12[%c0_62, %c0_63] : memref<1x64xf32, #tpu.memory_space<vmem>>, vector<1x64xf32>
    %142 = vector.broadcast %141 : vector<1x64xf32> to vector<8x64xf32>
    %143 = arith.addf %140, %142 : vector<8x64xf32>
    %144 = vector.extract_strided_slice %143 {offsets = [0, 0], sizes = [8, 32], strides = [1, 1]} : vector<8x64xf32> to vector<8x32xf32>
    %145 = arith.mulf %144, %0 : vector<8x32xf32>
    %146 = vector.extract_strided_slice %144 {offsets = [0, 4], sizes = [8, 28], strides = [1, 1]} : vector<8x32xf32> to vector<8x28xf32>
    %147 = vector.extract_strided_slice %144 {offsets = [0, 0], sizes = [8, 4], strides = [1, 1]} : vector<8x32xf32> to vector<8x4xf32>
    %148 = tpu.concatenate %146, %147 in 1 : vector<8x28xf32>, vector<8x4xf32> -> vector<8x32xf32>
    %149 = arith.mulf %148, %1 : vector<8x32xf32>
    %150 = arith.addf %145, %149 : vector<8x32xf32>
    %151 = vector.extract_strided_slice %144 {offsets = [0, 28], sizes = [8, 4], strides = [1, 1]} : vector<8x32xf32> to vector<8x4xf32>
    %152 = vector.extract_strided_slice %144 {offsets = [0, 0], sizes = [8, 28], strides = [1, 1]} : vector<8x32xf32> to vector<8x28xf32>
    %153 = tpu.concatenate %151, %152 in 1 : vector<8x4xf32>, vector<8x28xf32> -> vector<8x32xf32>
    %154 = arith.mulf %153, %2 : vector<8x32xf32>
    %155 = arith.addf %150, %154 : vector<8x32xf32>
    %156 = vector.extract_strided_slice %143 {offsets = [0, 32], sizes = [8, 16], strides = [1, 1]} : vector<8x64xf32> to vector<8x16xf32>
    %157 = arith.mulf %156, %3 : vector<8x16xf32>
    %158 = vector.extract_strided_slice %156 {offsets = [0, 4], sizes = [8, 12], strides = [1, 1]} : vector<8x16xf32> to vector<8x12xf32>
    %159 = vector.extract_strided_slice %156 {offsets = [0, 0], sizes = [8, 4], strides = [1, 1]} : vector<8x16xf32> to vector<8x4xf32>
    %160 = tpu.concatenate %158, %159 in 1 : vector<8x12xf32>, vector<8x4xf32> -> vector<8x16xf32>
    %161 = arith.mulf %160, %4 : vector<8x16xf32>
    %162 = arith.addf %157, %161 : vector<8x16xf32>
    %163 = vector.extract_strided_slice %156 {offsets = [0, 12], sizes = [8, 4], strides = [1, 1]} : vector<8x16xf32> to vector<8x4xf32>
    %164 = vector.extract_strided_slice %156 {offsets = [0, 0], sizes = [8, 12], strides = [1, 1]} : vector<8x16xf32> to vector<8x12xf32>
    %165 = tpu.concatenate %163, %164 in 1 : vector<8x4xf32>, vector<8x12xf32> -> vector<8x16xf32>
    %166 = arith.mulf %165, %5 : vector<8x16xf32>
    %167 = arith.addf %162, %166 : vector<8x16xf32>
    %168 = vector.extract_strided_slice %143 {offsets = [0, 48], sizes = [8, 16], strides = [1, 1]} : vector<8x64xf32> to vector<8x16xf32>
    %169 = arith.truncf %155 : vector<8x32xf32> to vector<8x32xbf16>
    %170 = arith.truncf %167 : vector<8x16xf32> to vector<8x16xbf16>
    %171 = arith.truncf %168 : vector<8x16xf32> to vector<8x16xbf16>
    %172 = vector.extract_strided_slice %169 {offsets = [0, 0], sizes = [8, 8], strides = [1, 1]} : vector<8x32xbf16> to vector<8x8xbf16>
    %173 = vector.extract_strided_slice %170 {offsets = [0, 0], sizes = [8, 8], strides = [1, 1]} : vector<8x16xbf16> to vector<8x8xbf16>
    %cst_64 = arith.constant dense<0.000000e+00> : vector<8x8xf32>
    %174 = tpu.matmul %172, %173, %cst_64 {dimension_numbers = #tpu.dot_dimension_numbers<[1], [1], [0], [0], [0, 0, 1, 0], [], []>} : vector<8x8xbf16>, vector<8x8xbf16>, vector<8x8xf32> -> vector<8x8xf32>
    %c0_65 = arith.constant 0 : index
    %c0_66 = arith.constant 0 : index
    %175 = vector.load %arg19[%c0_65, %c0_66] : memref<32x8xf32, #tpu.memory_space<vmem>>, vector<8x8xf32>
    tpu.vector_store %arg19[%c0_65, %c0_66], %174 {strides = array<i32>} : memref<32x8xf32, #tpu.memory_space<vmem>>, vector<8x8xf32>,
    %176 = vector.extract_strided_slice %169 {offsets = [0, 8], sizes = [8, 8], strides = [1, 1]} : vector<8x32xbf16> to vector<8x8xbf16>
    %177 = vector.extract_strided_slice %170 {offsets = [0, 0], sizes = [8, 8], strides = [1, 1]} : vector<8x16xbf16> to vector<8x8xbf16>
    %cst_67 = arith.constant dense<0.000000e+00> : vector<8x8xf32>
    %178 = tpu.matmul %176, %177, %cst_67 {dimension_numbers = #tpu.dot_dimension_numbers<[1], [1], [0], [0], [0, 0, 1, 0], [], []>} : vector<8x8xbf16>, vector<8x8xbf16>, vector<8x8xf32> -> vector<8x8xf32>
    %c8_68 = arith.constant 8 : index
    %c0_69 = arith.constant 0 : index
    %179 = vector.load %arg19[%c8_68, %c0_69] : memref<32x8xf32, #tpu.memory_space<vmem>>, vector<8x8xf32>
    tpu.vector_store %arg19[%c8_68, %c0_69], %178 {strides = array<i32>} : memref<32x8xf32, #tpu.memory_space<vmem>>, vector<8x8xf32>,
    %180 = vector.extract_strided_slice %169 {offsets = [0, 16], sizes = [8, 8], strides = [1, 1]} : vector<8x32xbf16> to vector<8x8xbf16>
    %181 = vector.extract_strided_slice %170 {offsets = [0, 8], sizes = [8, 8], strides = [1, 1]} : vector<8x16xbf16> to vector<8x8xbf16>
    %cst_70 = arith.constant dense<0.000000e+00> : vector<8x8xf32>
    %182 = tpu.matmul %180, %181, %cst_70 {dimension_numbers = #tpu.dot_dimension_numbers<[1], [1], [0], [0], [0, 0, 1, 0], [], []>} : vector<8x8xbf16>, vector<8x8xbf16>, vector<8x8xf32> -> vector<8x8xf32>
    %c16_71 = arith.constant 16 : index
    %c0_72 = arith.constant 0 : index
    %183 = vector.load %arg19[%c16_71, %c0_72] : memref<32x8xf32, #tpu.memory_space<vmem>>, vector<8x8xf32>
    tpu.vector_store %arg19[%c16_71, %c0_72], %182 {strides = array<i32>} : memref<32x8xf32, #tpu.memory_space<vmem>>, vector<8x8xf32>,
    %184 = vector.extract_strided_slice %169 {offsets = [0, 24], sizes = [8, 8], strides = [1, 1]} : vector<8x32xbf16> to vector<8x8xbf16>
    %185 = vector.extract_strided_slice %170 {offsets = [0, 8], sizes = [8, 8], strides = [1, 1]} : vector<8x16xbf16> to vector<8x8xbf16>
    %cst_73 = arith.constant dense<0.000000e+00> : vector<8x8xf32>
    %186 = tpu.matmul %184, %185, %cst_73 {dimension_numbers = #tpu.dot_dimension_numbers<[1], [1], [0], [0], [0, 0, 1, 0], [], []>} : vector<8x8xbf16>, vector<8x8xbf16>, vector<8x8xf32> -> vector<8x8xf32>
    %c24_74 = arith.constant 24 : index
    %c0_75 = arith.constant 0 : index
    %187 = vector.load %arg19[%c24_74, %c0_75] : memref<32x8xf32, #tpu.memory_space<vmem>>, vector<8x8xf32>
    tpu.vector_store %arg19[%c24_74, %c0_75], %186 {strides = array<i32>} : memref<32x8xf32, #tpu.memory_space<vmem>>, vector<8x8xf32>,
    %c0_76 = arith.constant 0 : index
    %c0_77 = arith.constant 0 : index
    %188 = vector.load %arg19[%c0_76, %c0_77] : memref<32x8xf32, #tpu.memory_space<vmem>>, vector<32x8xf32>
    %189 = arith.addf %188, %6 : vector<32x8xf32>
    %cst_78 = arith.constant dense<0xFF800000> : vector<32xf32>
    %190 = vector.multi_reduction <maximumf>, %189, %cst_78 [1] : vector<32x8xf32> to vector<32xf32>
    %191 = vector.shape_cast %190 : vector<32xf32> to vector<32x1xf32>
    %192 = vector.broadcast %191 : vector<32x1xf32> to vector<32x8xf32>
    %193 = arith.subf %189, %192 : vector<32x8xf32>
    %194 = math.exp %193 : vector<32x8xf32>
    %cst_79 = arith.constant dense<0.000000e+00> : vector<32xf32>
    %195 = vector.multi_reduction <add>, %194, %cst_79 [1] : vector<32x8xf32> to vector<32xf32>
    %196 = vector.shape_cast %195 : vector<32xf32> to vector<32x1xf32>
    %197 = tpu.reciprocal %196 {approx = true} : vector<32x1xf32> -> vector<32x1xf32>
    %198 = vector.broadcast %197 : vector<32x1xf32> to vector<32x8xf32>
    %199 = arith.mulf %194, %198 : vector<32x8xf32>
    %200 = arith.truncf %199 : vector<32x8xf32> to vector<32x8xbf16>
    %201 = vector.extract_strided_slice %200 {offsets = [0, 0], sizes = [8, 8], strides = [1, 1]} : vector<32x8xbf16> to vector<8x8xbf16>
    %202 = vector.extract_strided_slice %171 {offsets = [0, 0], sizes = [8, 8], strides = [1, 1]} : vector<8x16xbf16> to vector<8x8xbf16>
    %cst_80 = arith.constant dense<0.000000e+00> : vector<8x8xf32>
    %203 = tpu.matmul %201, %202, %cst_80 {dimension_numbers = #tpu.dot_dimension_numbers<[1], [0], [0], [1], [0, 0, 1, 1], [], []>} : vector<8x8xbf16>, vector<8x8xbf16>, vector<8x8xf32> -> vector<8x8xf32>
    %c0_81 = arith.constant 0 : index
    %c0_82 = arith.constant 0 : index
    %204 = vector.load %arg20[%c0_81, %c0_82] : memref<8x32xf32, #tpu.memory_space<vmem>>, vector<8x8xf32>
    tpu.vector_store %arg20[%c0_81, %c0_82], %203 {strides = array<i32>} : memref<8x32xf32, #tpu.memory_space<vmem>>, vector<8x8xf32>,
    %205 = vector.extract_strided_slice %200 {offsets = [8, 0], sizes = [8, 8], strides = [1, 1]} : vector<32x8xbf16> to vector<8x8xbf16>
    %206 = vector.extract_strided_slice %171 {offsets = [0, 0], sizes = [8, 8], strides = [1, 1]} : vector<8x16xbf16> to vector<8x8xbf16>
    %cst_83 = arith.constant dense<0.000000e+00> : vector<8x8xf32>
    %207 = tpu.matmul %205, %206, %cst_83 {dimension_numbers = #tpu.dot_dimension_numbers<[1], [0], [0], [1], [0, 0, 1, 1], [], []>} : vector<8x8xbf16>, vector<8x8xbf16>, vector<8x8xf32> -> vector<8x8xf32>
    %c0_84 = arith.constant 0 : index
    %c8_85 = arith.constant 8 : index
    %208 = vector.load %arg20[%c0_84, %c8_85] : memref<8x32xf32, #tpu.memory_space<vmem>>, vector<8x8xf32>
    tpu.vector_store %arg20[%c0_84, %c8_85], %207 {strides = array<i32>} : memref<8x32xf32, #tpu.memory_space<vmem>>, vector<8x8xf32>,
    %209 = vector.extract_strided_slice %200 {offsets = [16, 0], sizes = [8, 8], strides = [1, 1]} : vector<32x8xbf16> to vector<8x8xbf16>
    %210 = vector.extract_strided_slice %171 {offsets = [0, 8], sizes = [8, 8], strides = [1, 1]} : vector<8x16xbf16> to vector<8x8xbf16>
    %cst_86 = arith.constant dense<0.000000e+00> : vector<8x8xf32>
    %211 = tpu.matmul %209, %210, %cst_86 {dimension_numbers = #tpu.dot_dimension_numbers<[1], [0], [0], [1], [0, 0, 1, 1], [], []>} : vector<8x8xbf16>, vector<8x8xbf16>, vector<8x8xf32> -> vector<8x8xf32>
    %c0_87 = arith.constant 0 : index
    %c16_88 = arith.constant 16 : index
    %212 = vector.load %arg20[%c0_87, %c16_88] : memref<8x32xf32, #tpu.memory_space<vmem>>, vector<8x8xf32>
    tpu.vector_store %arg20[%c0_87, %c16_88], %211 {strides = array<i32>} : memref<8x32xf32, #tpu.memory_space<vmem>>, vector<8x8xf32>,
    %213 = vector.extract_strided_slice %200 {offsets = [24, 0], sizes = [8, 8], strides = [1, 1]} : vector<32x8xbf16> to vector<8x8xbf16>
    %214 = vector.extract_strided_slice %171 {offsets = [0, 8], sizes = [8, 8], strides = [1, 1]} : vector<8x16xbf16> to vector<8x8xbf16>
    %cst_89 = arith.constant dense<0.000000e+00> : vector<8x8xf32>
    %215 = tpu.matmul %213, %214, %cst_89 {dimension_numbers = #tpu.dot_dimension_numbers<[1], [0], [0], [1], [0, 0, 1, 1], [], []>} : vector<8x8xbf16>, vector<8x8xbf16>, vector<8x8xf32> -> vector<8x8xf32>
    %c0_90 = arith.constant 0 : index
    %c24_91 = arith.constant 24 : index
    %216 = vector.load %arg20[%c0_90, %c24_91] : memref<8x32xf32, #tpu.memory_space<vmem>>, vector<8x8xf32>
    tpu.vector_store %arg20[%c0_90, %c24_91], %215 {strides = array<i32>} : memref<8x32xf32, #tpu.memory_space<vmem>>, vector<8x8xf32>,
    %c0_92 = arith.constant 0 : index
    %c0_93 = arith.constant 0 : index
    %217 = vector.load %arg20[%c0_92, %c0_93] : memref<8x32xf32, #tpu.memory_space<vmem>>, vector<8x32xf32>
    %218 = arith.truncf %217 : vector<8x32xf32> to vector<8x32xbf16>
    %c0_94 = arith.constant 0 : index
    %c0_95 = arith.constant 0 : index
    %219 = vector.load %arg13[%c0_94, %c0_95] : memref<32x32xbf16, #tpu.memory_space<vmem>>, vector<32x32xbf16>
    %cst_96 = arith.constant dense<0.000000e+00> : vector<8x32xf32>
    %220 = tpu.matmul %218, %219, %cst_96 {dimension_numbers = #tpu.dot_dimension_numbers<[1], [0], [0], [1], [0, 0, 1, 1], [], []>} : vector<8x32xbf16>, vector<32x32xbf16>, vector<8x32xf32> -> vector<8x32xf32>
    %221 = arith.addf %127, %220 : vector<8x32xf32>
    %222 = arith.mulf %221, %221 : vector<8x32xf32>
    %cst_97 = arith.constant dense<0.000000e+00> : vector<8xf32>
    %223 = vector.multi_reduction <add>, %222, %cst_97 [1] : vector<8x32xf32> to vector<8xf32>
    %224 = vector.shape_cast %223 : vector<8xf32> to vector<8x1xf32>
    %cst_98 = arith.constant 3.200000e+01 : f32
    %225 = vector.broadcast %cst_98 : f32 to vector<8x1xf32>
    %226 = arith.divf %224, %225 : vector<8x1xf32>
    %cst_99 = arith.constant 9.99999997E-7 : f32
    %227 = vector.broadcast %cst_99 : f32 to vector<8x1xf32>
    %228 = arith.addf %226, %227 : vector<8x1xf32>
    %229 = math.rsqrt %228 : vector<8x1xf32>
    %230 = vector.broadcast %229 : vector<8x1xf32> to vector<8x32xf32>
    %231 = arith.mulf %221, %230 : vector<8x32xf32>
    %232 = arith.truncf %231 : vector<8x32xf32> to vector<8x32xbf16>
    %c0_100 = arith.constant 0 : index
    %c0_101 = arith.constant 0 : index
    %233 = vector.load %arg14[%c0_100, %c0_101] : memref<32x128xbf16, #tpu.memory_space<vmem>>, vector<32x128xbf16>
    %cst_102 = arith.constant dense<0.000000e+00> : vector<8x128xf32>
    %234 = tpu.matmul %232, %233, %cst_102 {dimension_numbers = #tpu.dot_dimension_numbers<[1], [0], [0], [1], [0, 0, 1, 1], [], []>} : vector<8x32xbf16>, vector<32x128xbf16>, vector<8x128xf32> -> vector<8x128xf32>
    %235 = vector.extract_strided_slice %234 {offsets = [0, 0], sizes = [8, 64], strides = [1, 1]} : vector<8x128xf32> to vector<8x64xf32>
    %236 = vector.extract_strided_slice %234 {offsets = [0, 64], sizes = [8, 64], strides = [1, 1]} : vector<8x128xf32> to vector<8x64xf32>
    %237 = arith.negf %235 : vector<8x64xf32>
    %238 = math.exp %237 : vector<8x64xf32>
    %cst_103 = arith.constant 1.000000e+00 : f32
    %239 = vector.broadcast %cst_103 : f32 to vector<8x64xf32>
    %240 = arith.addf %239, %238 : vector<8x64xf32>
    %241 = arith.divf %239, %240 : vector<8x64xf32>
    %242 = arith.mulf %235, %241 : vector<8x64xf32>
    %243 = arith.mulf %242, %236 : vector<8x64xf32>
    %244 = arith.truncf %243 : vector<8x64xf32> to vector<8x64xbf16>
    %c0_104 = arith.constant 0 : index
    %c0_105 = arith.constant 0 : index
    %245 = vector.load %arg15[%c0_104, %c0_105] : memref<64x32xbf16, #tpu.memory_space<vmem>>, vector<64x32xbf16>
    %cst_106 = arith.constant dense<0.000000e+00> : vector<8x32xf32>
    %246 = tpu.matmul %244, %245, %cst_106 {dimension_numbers = #tpu.dot_dimension_numbers<[1], [0], [0], [1], [0, 0, 1, 1], [], []>} : vector<8x64xbf16>, vector<64x32xbf16>, vector<8x32xf32> -> vector<8x32xf32>
    %247 = arith.addf %221, %246 : vector<8x32xf32>
    %248 = arith.mulf %247, %247 : vector<8x32xf32>
    %cst_107 = arith.constant dense<0.000000e+00> : vector<8xf32>
    %249 = vector.multi_reduction <add>, %248, %cst_107 [1] : vector<8x32xf32> to vector<8xf32>
    %250 = vector.shape_cast %249 : vector<8xf32> to vector<8x1xf32>
    %cst_108 = arith.constant 3.200000e+01 : f32
    %251 = vector.broadcast %cst_108 : f32 to vector<8x1xf32>
    %252 = arith.divf %250, %251 : vector<8x1xf32>
    %cst_109 = arith.constant 9.99999997E-7 : f32
    %253 = vector.broadcast %cst_109 : f32 to vector<8x1xf32>
    %254 = arith.addf %252, %253 : vector<8x1xf32>
    %255 = math.rsqrt %254 : vector<8x1xf32>
    %256 = vector.broadcast %255 : vector<8x1xf32> to vector<8x32xf32>
    %257 = arith.mulf %247, %256 : vector<8x32xf32>
    %258 = arith.truncf %257 : vector<8x32xf32> to vector<8x32xbf16>
    %c0_110 = arith.constant 0 : index
    %c0_111 = arith.constant 0 : index
    %259 = vector.load %arg16[%c0_110, %c0_111] : memref<32x128xbf16, #tpu.memory_space<vmem>>, vector<32x128xbf16>
    %cst_112 = arith.constant dense<0.000000e+00> : vector<8x128xf32>
    %260 = tpu.matmul %258, %259, %cst_112 {dimension_numbers = #tpu.dot_dimension_numbers<[1], [0], [0], [1], [0, 0, 1, 1], [], []>} : vector<8x32xbf16>, vector<32x128xbf16>, vector<8x128xf32> -> vector<8x128xf32>
    %c0_113 = arith.constant 0 : index
    %c0_114 = arith.constant 0 : index
    %261 = vector.load %arg17[%c0_113, %c0_114] : memref<1x128xf32, #tpu.memory_space<vmem>>, vector<1x128xf32>
    %262 = vector.broadcast %261 : vector<1x128xf32> to vector<8x128xf32>
    %263 = arith.addf %260, %262 : vector<8x128xf32>
    %c0_115 = arith.constant 0 : index
    %c0_116 = arith.constant 0 : index
    %264 = vector.load %arg18[%c0_115, %c0_116] : memref<8x128xf32, #tpu.memory_space<vmem>>, vector<8x128xf32>
    tpu.vector_store %arg18[%c0_115, %c0_116], %263 {strides = array<i32>} : memref<8x128xf32, #tpu.memory_space<vmem>>, vector<8x128xf32>,
    return
  }
  func.func @transform_0(%arg0: i32) -> (i32, i32) {
    %c0_i32 = arith.constant 0 : i32
    %c0_i32_0 = arith.constant 0 : i32
    return %arg0, %c0_i32 : i32, i32
  }
  func.func @transform_1(%arg0: i32) -> (i32, i32) {
    %c0_i32 = arith.constant 0 : i32
    %c0_i32_0 = arith.constant 0 : i32
    %c0_i32_1 = arith.constant 0 : i32
    return %c0_i32, %c0_i32_0 : i32, i32
  }
  func.func @transform_2(%arg0: i32) -> (i32, i32) {
    %c0_i32 = arith.constant 0 : i32
    %c0_i32_0 = arith.constant 0 : i32
    %c0_i32_1 = arith.constant 0 : i32
    return %c0_i32, %c0_i32_0 : i32, i32
  }
  func.func @transform_3(%arg0: i32) -> (i32, i32) {
    %c0_i32 = arith.constant 0 : i32
    %c0_i32_0 = arith.constant 0 : i32
    %c0_i32_1 = arith.constant 0 : i32
    return %c0_i32, %c0_i32_0 : i32, i32
  }
  func.func @transform_4(%arg0: i32) -> (i32, i32) {
    %c0_i32 = arith.constant 0 : i32
    %c0_i32_0 = arith.constant 0 : i32
    %c0_i32_1 = arith.constant 0 : i32
    return %c0_i32, %c0_i32_0 : i32, i32
  }
  func.func @transform_5(%arg0: i32) -> (i32, i32) {
    %c0_i32 = arith.constant 0 : i32
    %c0_i32_0 = arith.constant 0 : i32
    %c0_i32_1 = arith.constant 0 : i32
    return %c0_i32, %c0_i32_0 : i32, i32
  }
  func.func @transform_6(%arg0: i32) -> (i32, i32) {
    %c0_i32 = arith.constant 0 : i32
    %c0_i32_0 = arith.constant 0 : i32
    %c0_i32_1 = arith.constant 0 : i32
    return %c0_i32, %c0_i32_0 : i32, i32
  }
  func.func @transform_7(%arg0: i32) -> (i32, i32) {
    %c0_i32 = arith.constant 0 : i32
    %c0_i32_0 = arith.constant 0 : i32
    %c0_i32_1 = arith.constant 0 : i32
    return %c0_i32, %c0_i32_0 : i32, i32
  }
  func.func @transform_8(%arg0: i32) -> (i32, i32) {
    %c0_i32 = arith.constant 0 : i32
    %c0_i32_0 = arith.constant 0 : i32
    %c0_i32_1 = arith.constant 0 : i32
    return %c0_i32, %c0_i32_0 : i32, i32
  }
  func.func @transform_9(%arg0: i32) -> (i32, i32) {
    %c0_i32 = arith.constant 0 : i32
    %c0_i32_0 = arith.constant 0 : i32
    %c0_i32_1 = arith.constant 0 : i32
    return %c0_i32, %c0_i32_0 : i32, i32
  }
  func.func @transform_10(%arg0: i32) -> (i32, i32) {
    %c0_i32 = arith.constant 0 : i32
    %c0_i32_0 = arith.constant 0 : i32
    %c0_i32_1 = arith.constant 0 : i32
    return %c0_i32, %c0_i32_0 : i32, i32
  }
  func.func @transform_11(%arg0: i32) -> (i32, i32) {
    %c0_i32 = arith.constant 0 : i32
    %c0_i32_0 = arith.constant 0 : i32
    %c0_i32_1 = arith.constant 0 : i32
    return %c0_i32, %c0_i32_0 : i32, i32
  }
  func.func @transform_12(%arg0: i32) -> (i32, i32) {
    %c0_i32 = arith.constant 0 : i32
    %c0_i32_0 = arith.constant 0 : i32
    %c0_i32_1 = arith.constant 0 : i32
    return %c0_i32, %c0_i32_0 : i32, i32
  }
  func.func @transform_13(%arg0: i32) -> (i32, i32) {
    %c0_i32 = arith.constant 0 : i32
    %c0_i32_0 = arith.constant 0 : i32
    %c0_i32_1 = arith.constant 0 : i32
    return %c0_i32, %c0_i32_0 : i32, i32
  }
  func.func @transform_14(%arg0: i32) -> (i32, i32) {
    %c0_i32 = arith.constant 0 : i32
    %c0_i32_0 = arith.constant 0 : i32
    %c0_i32_1 = arith.constant 0 : i32
    return %c0_i32, %c0_i32_0 : i32, i32
  }
  func.func @transform_15(%arg0: i32) -> (i32, i32) {
    %c0_i32 = arith.constant 0 : i32
    %c0_i32_0 = arith.constant 0 : i32
    %c0_i32_1 = arith.constant 0 : i32
    return %c0_i32, %c0_i32_0 : i32, i32
  }
  func.func @transform_16(%arg0: i32) -> (i32, i32) {
    %c0_i32 = arith.constant 0 : i32
    %c0_i32_0 = arith.constant 0 : i32
    %c0_i32_1 = arith.constant 0 : i32
    return %c0_i32, %c0_i32_0 : i32, i32
  }
  func.func @transform_17(%arg0: i32) -> (i32, i32) {
    %c0_i32 = arith.constant 0 : i32
    %c0_i32_0 = arith.constant 0 : i32
    return %arg0, %c0_i32 : i32, i32
  }
}

</mosaic_0001>

<llo_original>
// kernel: tile.24
$region0: #{tile.24}
  %s0 = inlined_call_operand.vmem [shape: f32[8,4,8], index: 0, kind: input, shape index: {}]
  %s1 = inlined_call_operand.vmem [shape: f32[8,32], index: 1, kind: output, shape index: {}]
  $region1: #{tile.24} parent=0
    #allocation0 [shape = 'u8[32768]{0}', space=vmem, size = 0x8000, scoped, tag = 'scoped mem for input reshape']
    %s3 = sshllo.u32 0, 4
    %s4 = smul.addr 4, 7
    %s5 = scalar_lea.vmem %s0, %s4
    %v6 = vld [vmem:[%s5] sm:%s3]
    %s7 = scalar_lea.vmem [#allocation0], 56
    %8 = vst [vmem:[%s7] sm:%s3] %v6
    %s9 = smul.addr 4, 6
    %s10 = scalar_lea.vmem %s0, %s9
    %v11 = vld [vmem:[%s10] sm:%s3]
    %s12 = scalar_lea.vmem [#allocation0], 48
    %13 = vst [vmem:[%s12] sm:%s3] %v11
    %s14 = smul.addr 4, 5
    %s15 = scalar_lea.vmem %s0, %s14
    %v16 = vld [vmem:[%s15] sm:%s3]
    %s17 = scalar_lea.vmem [#allocation0], 40
    %18 = vst [vmem:[%s17] sm:%s3] %v16
    %s19 = smul.addr 4, 4
    %s20 = scalar_lea.vmem %s0, %s19
    %v21 = vld [vmem:[%s20] sm:%s3]
    %s22 = scalar_lea.vmem [#allocation0], 32
    %23 = vst [vmem:[%s22] sm:%s3] %v21
    %s24 = smul.addr 4, 3
    %s25 = scalar_lea.vmem %s0, %s24
    %v26 = vld [vmem:[%s25] sm:%s3]
    %s27 = scalar_lea.vmem [#allocation0], 24
    %28 = vst [vmem:[%s27] sm:%s3] %v26
    %s29 = smul.addr 4, 2
    %s30 = scalar_lea.vmem %s0, %s29
    %v31 = vld [vmem:[%s30] sm:%s3]
    %s32 = scalar_lea.vmem [#allocation0], 16
    %33 = vst [vmem:[%s32] sm:%s3] %v31
    %s34 = scalar_lea.vmem %s0, 4
    %v35 = vld [vmem:[%s34] sm:%s3]
    %s36 = scalar_lea.vmem [#allocation0], 8
    %37 = vst [vmem:[%s36] sm:%s3] %v35
    %v38 = vld [vmem:[%s0] sm:%s3]
    %39 = vst [vmem:[#allocation0] sm:%s3] %v38
    %v40 = vld [vmem:[#allocation0] ss:$8 sm:$0xf]
    %v41 = vld [vmem:[#allocation0] ss:$8 sm:$0xf0]
    %vm42 = vcmask 1047556
    %v43 = vsel %vm42, %v41, %v40
    %vm44 = vcmask 64512
    %45 = vst.msk [vmem:[%s1] sm:$0xff] %vm44, %v43
    %s46 = scalar_lea.vmem [#allocation0], 3
    %v47 = vld [vmem:[%s46] ss:$8 sm:$0xf]
    %s48 = scalar_lea.vmem [#allocation0], 3
    %v49 = vld [vmem:[%s48] ss:$8 sm:$0xf0]
    %vm50 = vcmask 1047556
    %v51 = vsel %vm50, %v49, %v47
    %52 = vrot.lane.b32.xlu0 %v51, 24
    %v53 = vpop.permute.xlu0 %52
    %vm54 = vcmask 261312
    %55 = vst.msk [vmem:[%s1] sm:$0xff] %vm54, %v53
    %s56 = scalar_lea.vmem [#allocation0], 2
    %v57 = vld [vmem:[%s56] ss:$8 sm:$0xf]
    %s58 = scalar_lea.vmem [#allocation0], 2
    %v59 = vld [vmem:[%s58] ss:$8 sm:$0xf0]
    %vm60 = vcmask 1047556
    %v61 = vsel %vm60, %v59, %v57
    %62 = vrot.lane.b32.xlu0 %v61, 16
    %v63 = vpop.permute.xlu0 %62
    %vm64 = vcmask 195712
    %65 = vst.msk [vmem:[%s1] sm:$0xff] %vm64, %v63
    %s66 = scalar_lea.vmem [#allocation0], 1
    %v67 = vld [vmem:[%s66] ss:$8 sm:$0xf]
    %s68 = scalar_lea.vmem [#allocation0], 1
    %v69 = vld [vmem:[%s68] ss:$8 sm:$0xf0]
    %vm70 = vcmask 1047556
    %v71 = vsel %vm70, %v69, %v67
    %72 = vrot.lane.b32.xlu0 %v71, 8
    %v73 = vpop.permute.xlu0 %72
    %vm74 = vcmask 130112
    %75 = vst.msk [vmem:[%s1] sm:$0xff] %vm74, %v73

// kernel: qwen2_forward.1
$region0: #{qwen2_forward.1}
  #allocation0 [shape = 'u32[]', space=smem, size = 0x4, offset = 0x4, fixed_abs, tag = 'smem constant byte address 0x4 - core index']
  #allocation1 [shape = 'u32[144,128]{1,0:T(1,128)}', space=vmem, size = 0x12000, scoped, tag = 'internal scratch']
  #allocation2 [shape = 'f32[32,8]{1,0:T(8,128)}', space=vmem, size = 0x4000, scoped, tag = 'scratch operand']
  #allocation3 [shape = 'f32[8,32]{1,0:T(8,128)}', space=vmem, size = 0x1000, scoped, tag = 'scratch operand']
  %s0 = inlined_call_operand.vmem [shape: f32[16,32], index: 0, kind: input, shape index: {}]
  %s1 = inlined_call_operand.vmem [shape: f32[8,32], index: 1, kind: input, shape index: {}]
  %s2 = inlined_call_operand.vmem [shape: f32[8,32], index: 2, kind: input, shape index: {}]
  %s3 = inlined_call_operand.vmem [shape: f32[8,32], index: 3, kind: input, shape index: {}]
  %s4 = inlined_call_operand.vmem [shape: f32[32,8], index: 4, kind: input, shape index: {}]
  %s5 = inlined_call_operand.vmem [shape: bf16[32,64], index: 5, kind: input, shape index: {}]
  %s6 = inlined_call_operand.vmem [shape: f32[1,64], index: 6, kind: input, shape index: {}]
  %s7 = inlined_call_operand.vmem [shape: bf16[32,32], index: 7, kind: input, shape index: {}]
  %s8 = inlined_call_operand.vmem [shape: bf16[32,128], index: 8, kind: input, shape index: {}]
  %s9 = inlined_call_operand.vmem [shape: bf16[64,32], index: 9, kind: input, shape index: {}]
  %s10 = inlined_call_operand.vmem [shape: bf16[32,64], index: 10, kind: input, shape index: {}]
  %s11 = inlined_call_operand.vmem [shape: f32[1,64], index: 11, kind: input, shape index: {}]
  %s12 = inlined_call_operand.vmem [shape: bf16[32,32], index: 12, kind: input, shape index: {}]
  %s13 = inlined_call_operand.vmem [shape: bf16[32,128], index: 13, kind: input, shape index: {}]
  %s14 = inlined_call_operand.vmem [shape: bf16[64,32], index: 14, kind: input, shape index: {}]
  %s15 = inlined_call_operand.vmem [shape: bf16[32,128], index: 15, kind: input, shape index: {}]
  %s16 = inlined_call_operand.vmem [shape: f32[1,128], index: 16, kind: input, shape index: {}]
  %s17 = inlined_call_operand.vmem [shape: f32[16,128], index: 17, kind: output, shape index: {}]
  %s18 = sld [smem:[#allocation0]]
  $region101: #{qwen2_forward.1} parent=0
    _
  %s20 = ssub.s32 1, %s18
  %s21 = scalar_select 0, %s20, %s18
  loop: start=0, step=1, limit=4
  $region2: #{qwen2_forward.1} parent=0 // loop_pre_header
    _
  $region3: #{qwen2_forward.1} parent=0 // loop_header
    %s23 = sphi 0, %s27
    %p24 = scmp.ge.s32.totalorder %s23, 4
    %s33 = sphi 0, %s35
    %s36 = sphi 0, %s33
    %s37 = sphi 0, %s36
    %s53 = sphi 0, %s37
    %s57 = sphi 0, %s57
    %s59 = sphi 0, %s57
    %s60 = sphi 0, %s59
    %s74 = sphi 0, %s60
    %s78 = sphi 0, %s78
    %s80 = sphi 0, %s78
    %s81 = sphi 0, %s80
    %s95 = sphi 0, %s81
    %s99 = sphi 0, %s99
    %s101 = sphi 0, %s99
    %s102 = sphi 0, %s101
    %s116 = sphi 0, %s102
    %s120 = sphi 0, %s120
    %s122 = sphi 0, %s120
    %s123 = sphi 0, %s122
    %s137 = sphi 0, %s123
    %s141 = sphi 0, %s141
    %s143 = sphi 0, %s141
    %s144 = sphi 0, %s143
    %s158 = sphi 0, %s144
    %s162 = sphi 0, %s162
    %s164 = sphi 0, %s162
    %s165 = sphi 0, %s164
    %s179 = sphi 0, %s165
    %s183 = sphi 0, %s183
    %s185 = sphi 0, %s183
    %s186 = sphi 0, %s185
    %s200 = sphi 0, %s186
    %s204 = sphi 0, %s204
    %s206 = sphi 0, %s204
    %s207 = sphi 0, %s206
    %s221 = sphi 0, %s207
    %s225 = sphi 0, %s225
    %s227 = sphi 0, %s225
    %s228 = sphi 0, %s227
    %s242 = sphi 0, %s228
    %s246 = sphi 0, %s246
    %s248 = sphi 0, %s246
    %s249 = sphi 0, %s248
    %s263 = sphi 0, %s249
    %s267 = sphi 0, %s267
    %s269 = sphi 0, %s267
    %s270 = sphi 0, %s269
    %s284 = sphi 0, %s270
    %s288 = sphi 0, %s288
    %s290 = sphi 0, %s288
    %s291 = sphi 0, %s290
    %s305 = sphi 0, %s291
    %s309 = sphi 0, %s309
    %s311 = sphi 0, %s309
    %s312 = sphi 0, %s311
    %s326 = sphi 0, %s312
    %s330 = sphi 0, %s330
    %s332 = sphi 0, %s330
    %s333 = sphi 0, %s332
    %s347 = sphi 0, %s333
    %s351 = sphi 0, %s351
    %s353 = sphi 0, %s351
    %s354 = sphi 0, %s353
    %s368 = sphi 0, %s354
    %s372 = sphi 0, %s372
    %s374 = sphi 0, %s372
    %s375 = sphi 0, %s374
    %s389 = sphi 0, %s375
    %s395 = sphi 0, %s397
    %s398 = sphi 0, %s395
    %s399 = sphi 0, %s398
    %s415 = sphi 0, %s399
  $region4: #{qwen2_forward.1} parent=0 // loop_header_branch
    %26 = sbr.rel (%p24) target = $region8
  $region5: #{qwen2_forward.1} parent=0 // loop_body
    %s28 = ssub.s32 %s23, 1
    %s29 = ssub.s32 %s23, 2
    %s30 = sadd.s32 %s23, 1
    %s31 = ssub.s32 %s23, %s30
    %p32 = scmp.eq.s32.totalorder %s31, 0
    %s34 = sadd.s32 %s33, 1
    %s35 = scalar_select %p32, %s33, %s34
    %p38 = pneg %p32
    %p39 = scmp.eq.s32.totalorder %s23, 1
    %p40 = por %p38, %p39
    %p41 = scmp.ne.s32.totalorder %s33, %s36
    %p42 = scmp.eq.s32.totalorder %s23, 0
    %p43 = por %p41, %p42
    %p44 = scmp.ne.s32.totalorder %s33, %s36
    %p45 = scmp.eq.s32.totalorder %s28, 1
    %p46 = por %p44, %p45
    %p47 = scmp.ne.s32.totalorder %s36, %s37
    %p48 = scmp.eq.s32.totalorder %s28, 0
    %p49 = por %p47, %p48
    %p50 = scmp.ne.s32.totalorder %s36, %s37
    %p51 = scmp.eq.s32.totalorder %s29, 1
    %p52 = por %p50, %p51
    %p54 = scmp.ne.s32.totalorder %s37, %s53
    %p55 = scmp.eq.s32.totalorder %s29, 0
    %p56 = por %p54, %p55
    %s58 = sadd.s32 %s57, 1
    %p61 = scmp.eq.s32.totalorder %s23, 1
    %p62 = scmp.ne.s32.totalorder %s57, %s59
    %p63 = scmp.eq.s32.totalorder %s23, 0
    %p64 = por %p62, %p63
    %p65 = scmp.ne.s32.totalorder %s57, %s59
    %p66 = scmp.eq.s32.totalorder %s28, 1
    %p67 = por %p65, %p66
    %p68 = scmp.ne.s32.totalorder %s59, %s60
    %p69 = scmp.eq.s32.totalorder %s28, 0
    %p70 = por %p68, %p69
    %p71 = scmp.ne.s32.totalorder %s59, %s60
    %p72 = scmp.eq.s32.totalorder %s29, 1
    %p73 = por %p71, %p72
    %p75 = scmp.ne.s32.totalorder %s60, %s74
    %p76 = scmp.eq.s32.totalorder %s29, 0
    %p77 = por %p75, %p76
    %s79 = sadd.s32 %s78, 1
    %p82 = scmp.eq.s32.totalorder %s23, 1
    %p83 = scmp.ne.s32.totalorder %s78, %s80
    %p84 = scmp.eq.s32.totalorder %s23, 0
    %p85 = por %p83, %p84
    %p86 = scmp.ne.s32.totalorder %s78, %s80
    %p87 = scmp.eq.s32.totalorder %s28, 1
    %p88 = por %p86, %p87
    %p89 = scmp.ne.s32.totalorder %s80, %s81
    %p90 = scmp.eq.s32.totalorder %s28, 0
    %p91 = por %p89, %p90
    %p92 = scmp.ne.s32.totalorder %s80, %s81
    %p93 = scmp.eq.s32.totalorder %s29, 1
    %p94 = por %p92, %p93
    %p96 = scmp.ne.s32.totalorder %s81, %s95
    %p97 = scmp.eq.s32.totalorder %s29, 0
    %p98 = por %p96, %p97
    %s100 = sadd.s32 %s99, 1
    %p103 = scmp.eq.s32.totalorder %s23, 1
    %p104 = scmp.ne.s32.totalorder %s99, %s101
    %p105 = scmp.eq.s32.totalorder %s23, 0
    %p106 = por %p104, %p105
    %p107 = scmp.ne.s32.totalorder %s99, %s101
    %p108 = scmp.eq.s32.totalorder %s28, 1
    %p109 = por %p107, %p108
    %p110 = scmp.ne.s32.totalorder %s101, %s102
    %p111 = scmp.eq.s32.totalorder %s28, 0
    %p112 = por %p110, %p111
    %p113 = scmp.ne.s32.totalorder %s101, %s102
    %p114 = scmp.eq.s32.totalorder %s29, 1
    %p115 = por %p113, %p114
    %p117 = scmp.ne.s32.totalorder %s102, %s116
    %p118 = scmp.eq.s32.totalorder %s29, 0
    %p119 = por %p117, %p118
    %s121 = sadd.s32 %s120, 1
    %p124 = scmp.eq.s32.totalorder %s23, 1
    %p125 = scmp.ne.s32.totalorder %s120, %s122
    %p126 = scmp.eq.s32.totalorder %s23, 0
    %p127 = por %p125, %p126
    %p128 = scmp.ne.s32.totalorder %s120, %s122
    %p129 = scmp.eq.s32.totalorder %s28, 1
    %p130 = por %p128, %p129
    %p131 = scmp.ne.s32.totalorder %s122, %s123
    %p132 = scmp.eq.s32.totalorder %s28, 0
    %p133 = por %p131, %p132
    %p134 = scmp.ne.s32.totalorder %s122, %s123
    %p135 = scmp.eq.s32.totalorder %s29, 1
    %p136 = por %p134, %p135
    %p138 = scmp.ne.s32.totalorder %s123, %s137
    %p139 = scmp.eq.s32.totalorder %s29, 0
    %p140 = por %p138, %p139
    %s142 = sadd.s32 %s141, 1
    %p145 = scmp.eq.s32.totalorder %s23, 1
    %p146 = scmp.ne.s32.totalorder %s141, %s143
    %p147 = scmp.eq.s32.totalorder %s23, 0
    %p148 = por %p146, %p147
    %p149 = scmp.ne.s32.totalorder %s141, %s143
    %p150 = scmp.eq.s32.totalorder %s28, 1
    %p151 = por %p149, %p150
    %p152 = scmp.ne.s32.totalorder %s143, %s144
    %p153 = scmp.eq.s32.totalorder %s28, 0
    %p154 = por %p152, %p153
    %p155 = scmp.ne.s32.totalorder %s143, %s144
    %p156 = scmp.eq.s32.totalorder %s29, 1
    %p157 = por %p155, %p156
    %p159 = scmp.ne.s32.totalorder %s144, %s158
    %p160 = scmp.eq.s32.totalorder %s29, 0
    %p161 = por %p159, %p160
    %s163 = sadd.s32 %s162, 1
    %p166 = scmp.eq.s32.totalorder %s23, 1
    %p167 = scmp.ne.s32.totalorder %s162, %s164
    %p168 = scmp.eq.s32.totalorder %s23, 0
    %p169 = por %p167, %p168
    %p170 = scmp.ne.s32.totalorder %s162, %s164
    %p171 = scmp.eq.s32.totalorder %s28, 1
    %p172 = por %p170, %p171
    %p173 = scmp.ne.s32.totalorder %s164, %s165
    %p174 = scmp.eq.s32.totalorder %s28, 0
    %p175 = por %p173, %p174
    %p176 = scmp.ne.s32.totalorder %s164, %s165
    %p177 = scmp.eq.s32.totalorder %s29, 1
    %p178 = por %p176, %p177
    %p180 = scmp.ne.s32.totalorder %s165, %s179
    %p181 = scmp.eq.s32.totalorder %s29, 0
    %p182 = por %p180, %p181
    %s184 = sadd.s32 %s183, 1
    %p187 = scmp.eq.s32.totalorder %s23, 1
    %p188 = scmp.ne.s32.totalorder %s183, %s185
    %p189 = scmp.eq.s32.totalorder %s23, 0
    %p190 = por %p188, %p189
    %p191 = scmp.ne.s32.totalorder %s183, %s185
    %p192 = scmp.eq.s32.totalorder %s28, 1
    %p193 = por %p191, %p192
    %p194 = scmp.ne.s32.totalorder %s185, %s186
    %p195 = scmp.eq.s32.totalorder %s28, 0
    %p196 = por %p194, %p195
    %p197 = scmp.ne.s32.totalorder %s185, %s186
    %p198 = scmp.eq.s32.totalorder %s29, 1
    %p199 = por %p197, %p198
    %p201 = scmp.ne.s32.totalorder %s186, %s200
    %p202 = scmp.eq.s32.totalorder %s29, 0
    %p203 = por %p201, %p202
    %s205 = sadd.s32 %s204, 1
    %p208 = scmp.eq.s32.totalorder %s23, 1
    %p209 = scmp.ne.s32.totalorder %s204, %s206
    %p210 = scmp.eq.s32.totalorder %s23, 0
    %p211 = por %p209, %p210
    %p212 = scmp.ne.s32.totalorder %s204, %s206
    %p213 = scmp.eq.s32.totalorder %s28, 1
    %p214 = por %p212, %p213
    %p215 = scmp.ne.s32.totalorder %s206, %s207
    %p216 = scmp.eq.s32.totalorder %s28, 0
    %p217 = por %p215, %p216
    %p218 = scmp.ne.s32.totalorder %s206, %s207
    %p219 = scmp.eq.s32.totalorder %s29, 1
    %p220 = por %p218, %p219
    %p222 = scmp.ne.s32.totalorder %s207, %s221
    %p223 = scmp.eq.s32.totalorder %s29, 0
    %p224 = por %p222, %p223
    %s226 = sadd.s32 %s225, 1
    %p229 = scmp.eq.s32.totalorder %s23, 1
    %p230 = scmp.ne.s32.totalorder %s225, %s227
    %p231 = scmp.eq.s32.totalorder %s23, 0
    %p232 = por %p230, %p231
    %p233 = scmp.ne.s32.totalorder %s225, %s227
    %p234 = scmp.eq.s32.totalorder %s28, 1
    %p235 = por %p233, %p234
    %p236 = scmp.ne.s32.totalorder %s227, %s228
    %p237 = scmp.eq.s32.totalorder %s28, 0
    %p238 = por %p236, %p237
    %p239 = scmp.ne.s32.totalorder %s227, %s228
    %p240 = scmp.eq.s32.totalorder %s29, 1
    %p241 = por %p239, %p240
    %p243 = scmp.ne.s32.totalorder %s228, %s242
    %p244 = scmp.eq.s32.totalorder %s29, 0
    %p245 = por %p243, %p244
    %s247 = sadd.s32 %s246, 1
    %p250 = scmp.eq.s32.totalorder %s23, 1
    %p251 = scmp.ne.s32.totalorder %s246, %s248
    %p252 = scmp.eq.s32.totalorder %s23, 0
    %p253 = por %p251, %p252
    %p254 = scmp.ne.s32.totalorder %s246, %s248
    %p255 = scmp.eq.s32.totalorder %s28, 1
    %p256 = por %p254, %p255
    %p257 = scmp.ne.s32.totalorder %s248, %s249
    %p258 = scmp.eq.s32.totalorder %s28, 0
    %p259 = por %p257, %p258
    %p260 = scmp.ne.s32.totalorder %s248, %s249
    %p261 = scmp.eq.s32.totalorder %s29, 1
    %p262 = por %p260, %p261
    %p264 = scmp.ne.s32.totalorder %s249, %s263
    %p265 = scmp.eq.s32.totalorder %s29, 0
    %p266 = por %p264, %p265
    %s268 = sadd.s32 %s267, 1
    %p271 = scmp.eq.s32.totalorder %s23, 1
    %p272 = scmp.ne.s32.totalorder %s267, %s269
    %p273 = scmp.eq.s32.totalorder %s23, 0
    %p274 = por %p272, %p273
    %p275 = scmp.ne.s32.totalorder %s267, %s269
    %p276 = scmp.eq.s32.totalorder %s28, 1
    %p277 = por %p275, %p276
    %p278 = scmp.ne.s32.totalorder %s269, %s270
    %p279 = scmp.eq.s32.totalorder %s28, 0
    %p280 = por %p278, %p279
    %p281 = scmp.ne.s32.totalorder %s269, %s270
    %p282 = scmp.eq.s32.totalorder %s29, 1
    %p283 = por %p281, %p282
    %p285 = scmp.ne.s32.totalorder %s270, %s284
    %p286 = scmp.eq.s32.totalorder %s29, 0
    %p287 = por %p285, %p286
    %s289 = sadd.s32 %s288, 1
    %p292 = scmp.eq.s32.totalorder %s23, 1
    %p293 = scmp.ne.s32.totalorder %s288, %s290
    %p294 = scmp.eq.s32.totalorder %s23, 0
    %p295 = por %p293, %p294
    %p296 = scmp.ne.s32.totalorder %s288, %s290
    %p297 = scmp.eq.s32.totalorder %s28, 1
    %p298 = por %p296, %p297
    %p299 = scmp.ne.s32.totalorder %s290, %s291
    %p300 = scmp.eq.s32.totalorder %s28, 0
    %p301 = por %p299, %p300
    %p302 = scmp.ne.s32.totalorder %s290, %s291
    %p303 = scmp.eq.s32.totalorder %s29, 1
    %p304 = por %p302, %p303
    %p306 = scmp.ne.s32.totalorder %s291, %s305
    %p307 = scmp.eq.s32.totalorder %s29, 0
    %p308 = por %p306, %p307
    %s310 = sadd.s32 %s309, 1
    %p313 = scmp.eq.s32.totalorder %s23, 1
    %p314 = scmp.ne.s32.totalorder %s309, %s311
    %p315 = scmp.eq.s32.totalorder %s23, 0
    %p316 = por %p314, %p315
    %p317 = scmp.ne.s32.totalorder %s309, %s311
    %p318 = scmp.eq.s32.totalorder %s28, 1
    %p319 = por %p317, %p318
    %p320 = scmp.ne.s32.totalorder %s311, %s312
    %p321 = scmp.eq.s32.totalorder %s28, 0
    %p322 = por %p320, %p321
    %p323 = scmp.ne.s32.totalorder %s311, %s312
    %p324 = scmp.eq.s32.totalorder %s29, 1
    %p325 = por %p323, %p324
    %p327 = scmp.ne.s32.totalorder %s312, %s326
    %p328 = scmp.eq.s32.totalorder %s29, 0
    %p329 = por %p327, %p328
    %s331 = sadd.s32 %s330, 1
    %p334 = scmp.eq.s32.totalorder %s23, 1
    %p335 = scmp.ne.s32.totalorder %s330, %s332
    %p336 = scmp.eq.s32.totalorder %s23, 0
    %p337 = por %p335, %p336
    %p338 = scmp.ne.s32.totalorder %s330, %s332
    %p339 = scmp.eq.s32.totalorder %s28, 1
    %p340 = por %p338, %p339
    %p341 = scmp.ne.s32.totalorder %s332, %s333
    %p342 = scmp.eq.s32.totalorder %s28, 0
    %p343 = por %p341, %p342
    %p344 = scmp.ne.s32.totalorder %s332, %s333
    %p345 = scmp.eq.s32.totalorder %s29, 1
    %p346 = por %p344, %p345
    %p348 = scmp.ne.s32.totalorder %s333, %s347
    %p349 = scmp.eq.s32.totalorder %s29, 0
    %p350 = por %p348, %p349
    %s352 = sadd.s32 %s351, 1
    %p355 = scmp.eq.s32.totalorder %s23, 1
    %p356 = scmp.ne.s32.totalorder %s351, %s353
    %p357 = scmp.eq.s32.totalorder %s23, 0
    %p358 = por %p356, %p357
    %p359 = scmp.ne.s32.totalorder %s351, %s353
    %p360 = scmp.eq.s32.totalorder %s28, 1
    %p361 = por %p359, %p360
    %p362 = scmp.ne.s32.totalorder %s353, %s354
    %p363 = scmp.eq.s32.totalorder %s28, 0
    %p364 = por %p362, %p363
    %p365 = scmp.ne.s32.totalorder %s353, %s354
    %p366 = scmp.eq.s32.totalorder %s29, 1
    %p367 = por %p365, %p366
    %p369 = scmp.ne.s32.totalorder %s354, %s368
    %p370 = scmp.eq.s32.totalorder %s29, 0
    %p371 = por %p369, %p370
    %s373 = sadd.s32 %s372, 1
    %p376 = scmp.eq.s32.totalorder %s23, 1
    %p377 = scmp.ne.s32.totalorder %s372, %s374
    %p378 = scmp.eq.s32.totalorder %s23, 0
    %p379 = por %p377, %p378
    %p380 = scmp.ne.s32.totalorder %s372, %s374
    %p381 = scmp.eq.s32.totalorder %s28, 1
    %p382 = por %p380, %p381
    %p383 = scmp.ne.s32.totalorder %s374, %s375
    %p384 = scmp.eq.s32.totalorder %s28, 0
    %p385 = por %p383, %p384
    %p386 = scmp.ne.s32.totalorder %s374, %s375
    %p387 = scmp.eq.s32.totalorder %s29, 1
    %p388 = por %p386, %p387
    %p390 = scmp.ne.s32.totalorder %s375, %s389
    %p391 = scmp.eq.s32.totalorder %s29, 0
    %p392 = por %p390, %p391
    %s393 = ssub.s32 %s23, %s30
    %p394 = scmp.eq.s32.totalorder %s393, 0
    %s396 = sadd.s32 %s395, 1
    %s397 = scalar_select %p394, %s395, %s396
    %p400 = pneg %p394
    %p401 = scmp.eq.s32.totalorder %s23, 1
    %p402 = por %p400, %p401
    %p403 = scmp.ne.s32.totalorder %s395, %s398
    %p404 = scmp.eq.s32.totalorder %s23, 0
    %p405 = por %p403, %p404
    %p406 = scmp.ne.s32.totalorder %s395, %s398
    %p407 = scmp.eq.s32.totalorder %s28, 1
    %p408 = por %p406, %p407
    %p409 = scmp.ne.s32.totalorder %s398, %s399
    %p410 = scmp.eq.s32.totalorder %s28, 0
    %p411 = por %p409, %p410
    %p412 = scmp.ne.s32.totalorder %s398, %s399
    %p413 = scmp.eq.s32.totalorder %s29, 1
    %p414 = por %p412, %p413
    %p416 = scmp.ne.s32.totalorder %s399, %s415
    %p417 = scmp.eq.s32.totalorder %s29, 0
    %p418 = por %p416, %p417
    %p419 = scmp.le.s32.totalorder 1, %s23
    %p420 = scmp.lt.s32.totalorder %s23, 3
    %p421 = pnand %p419, %p420
    %p422 = pneg %p421
    // Predicated region
    $region9: #{qwen2_forward.1} parent=5 // pred_check
      _
    $region10: #{qwen2_forward.1} parent=5 // pred_check_branch
      %424 = sbr.rel (%p421) target = $region12
    $region11: #{qwen2_forward.1} parent=5 // pred_region
      %s425 = ssub.s32 %s23, 1
      // Predicated region
      $region13: #{qwen2_forward.1} parent=11 // pred_check
        %p426 = pneg %p70
      $region14: #{qwen2_forward.1} parent=11 // pred_check_branch
        %428 = sbr.rel (%p426) target = $region16
      $region15: #{qwen2_forward.1} parent=11 // pred_region
        _
      $region16: #{qwen2_forward.1} parent=11 // pred_fallthru
        _
      // Predicated region
      $region17: #{qwen2_forward.1} parent=11 // pred_check
        %p429 = pneg %p91
      $region18: #{qwen2_forward.1} parent=11 // pred_check_branch
        %431 = sbr.rel (%p429) target = $region20
      $region19: #{qwen2_forward.1} parent=11 // pred_region
        _
      $region20: #{qwen2_forward.1} parent=11 // pred_fallthru
        _
      // Predicated region
      $region21: #{qwen2_forward.1} parent=11 // pred_check
        %p432 = pneg %p112
      $region22: #{qwen2_forward.1} parent=11 // pred_check_branch
        %434 = sbr.rel (%p432) target = $region24
      $region23: #{qwen2_forward.1} parent=11 // pred_region
        _
      $region24: #{qwen2_forward.1} parent=11 // pred_fallthru
        _
      // Predicated region
      $region25: #{qwen2_forward.1} parent=11 // pred_check
        %p435 = pneg %p133
      $region26: #{qwen2_forward.1} parent=11 // pred_check_branch
        %437 = sbr.rel (%p435) target = $region28
      $region27: #{qwen2_forward.1} parent=11 // pred_region
        _
      $region28: #{qwen2_forward.1} parent=11 // pred_fallthru
        _
      // Predicated region
      $region29: #{qwen2_forward.1} parent=11 // pred_check
        %p438 = pneg %p154
      $region30: #{qwen2_forward.1} parent=11 // pred_check_branch
        %440 = sbr.rel (%p438) target = $region32
      $region31: #{qwen2_forward.1} parent=11 // pred_region
        _
      $region32: #{qwen2_forward.1} parent=11 // pred_fallthru
        _
      // Predicated region
      $region33: #{qwen2_forward.1} parent=11 // pred_check
        %p441 = pneg %p175
      $region34: #{qwen2_forward.1} parent=11 // pred_check_branch
        %443 = sbr.rel (%p441) target = $region36
      $region35: #{qwen2_forward.1} parent=11 // pred_region
        _
      $region36: #{qwen2_forward.1} parent=11 // pred_fallthru
        _
      // Predicated region
      $region37: #{qwen2_forward.1} parent=11 // pred_check
        %p444 = pneg %p196
      $region38: #{qwen2_forward.1} parent=11 // pred_check_branch
        %446 = sbr.rel (%p444) target = $region40
      $region39: #{qwen2_forward.1} parent=11 // pred_region
        _
      $region40: #{qwen2_forward.1} parent=11 // pred_fallthru
        _
      // Predicated region
      $region41: #{qwen2_forward.1} parent=11 // pred_check
        %p447 = pneg %p217
      $region42: #{qwen2_forward.1} parent=11 // pred_check_branch
        %449 = sbr.rel (%p447) target = $region44
      $region43: #{qwen2_forward.1} parent=11 // pred_region
        _
      $region44: #{qwen2_forward.1} parent=11 // pred_fallthru
        _
      // Predicated region
      $region45: #{qwen2_forward.1} parent=11 // pred_check
        %p450 = pneg %p238
      $region46: #{qwen2_forward.1} parent=11 // pred_check_branch
        %452 = sbr.rel (%p450) target = $region48
      $region47: #{qwen2_forward.1} parent=11 // pred_region
        _
      $region48: #{qwen2_forward.1} parent=11 // pred_fallthru
        _
      // Predicated region
      $region49: #{qwen2_forward.1} parent=11 // pred_check
        %p453 = pneg %p259
      $region50: #{qwen2_forward.1} parent=11 // pred_check_branch
        %455 = sbr.rel (%p453) target = $region52
      $region51: #{qwen2_forward.1} parent=11 // pred_region
        _
      $region52: #{qwen2_forward.1} parent=11 // pred_fallthru
        _
      // Predicated region
      $region53: #{qwen2_forward.1} parent=11 // pred_check
        %p456 = pneg %p280
      $region54: #{qwen2_forward.1} parent=11 // pred_check_branch
        %458 = sbr.rel (%p456) target = $region56
      $region55: #{qwen2_forward.1} parent=11 // pred_region
        _
      $region56: #{qwen2_forward.1} parent=11 // pred_fallthru
        _
      // Predicated region
      $region57: #{qwen2_forward.1} parent=11 // pred_check
        %p459 = pneg %p301
      $region58: #{qwen2_forward.1} parent=11 // pred_check_branch
        %461 = sbr.rel (%p459) target = $region60
      $region59: #{qwen2_forward.1} parent=11 // pred_region
        _
      $region60: #{qwen2_forward.1} parent=11 // pred_fallthru
        _
      // Predicated region
      $region61: #{qwen2_forward.1} parent=11 // pred_check
        %p462 = pneg %p322
      $region62: #{qwen2_forward.1} parent=11 // pred_check_branch
        %464 = sbr.rel (%p462) target = $region64
      $region63: #{qwen2_forward.1} parent=11 // pred_region
        _
      $region64: #{qwen2_forward.1} parent=11 // pred_fallthru
        _
      // Predicated region
      $region65: #{qwen2_forward.1} parent=11 // pred_check
        %p465 = pneg %p343
      $region66: #{qwen2_forward.1} parent=11 // pred_check_branch
        %467 = sbr.rel (%p465) target = $region68
      $region67: #{qwen2_forward.1} parent=11 // pred_region
        _
      $region68: #{qwen2_forward.1} parent=11 // pred_fallthru
        _
      // Predicated region
      $region69: #{qwen2_forward.1} parent=11 // pred_check
        %p468 = pneg %p364
      $region70: #{qwen2_forward.1} parent=11 // pred_check_branch
        %470 = sbr.rel (%p468) target = $region72
      $region71: #{qwen2_forward.1} parent=11 // pred_region
        _
      $region72: #{qwen2_forward.1} parent=11 // pred_fallthru
        _
      // Predicated region
      $region73: #{qwen2_forward.1} parent=11 // pred_check
        %p471 = pneg %p385
      $region74: #{qwen2_forward.1} parent=11 // pred_check_branch
        %473 = sbr.rel (%p471) target = $region76
      $region75: #{qwen2_forward.1} parent=11 // pred_region
        _
      $region76: #{qwen2_forward.1} parent=11 // pred_fallthru
        _
    $region12: #{qwen2_forward.1} parent=5 // pred_fallthru
      _
    %p474 = scmp.lt.s32.totalorder %s23, 2
    // Predicated region
    $region77: #{qwen2_forward.1} parent=5 // pred_check
      %p475 = pneg %p474
    $region78: #{qwen2_forward.1} parent=5 // pred_check_branch
      %477 = sbr.rel (%p475) target = $region80
    $region79: #{qwen2_forward.1} parent=5 // pred_region
      // Predicated region
      $region81: #{qwen2_forward.1} parent=79 // pred_check
        %p478 = pneg %p43
      $region82: #{qwen2_forward.1} parent=79 // pred_check_branch
        %480 = sbr.rel (%p478) target = $region84
      $region83: #{qwen2_forward.1} parent=79 // pred_region
        %p481 = scmp.lt.s32.totalorder %s23, 1
        %s482 = scalar_select %p481, %s23, 1
        %s483 = smul.addr %s482, 8
        %s484 = scalar_lea.vmem %s0, %s483
      $region84: #{qwen2_forward.1} parent=79 // pred_fallthru
        _
    $region80: #{qwen2_forward.1} parent=5 // pred_fallthru
      _
    %p485 = scmp.le.s32.totalorder 1, %s23
    %p486 = scmp.lt.s32.totalorder %s23, 3
    %p487 = pnand %p485, %p486
    %p488 = pneg %p487
    // Predicated region
    $region85: #{qwen2_forward.1} parent=5 // pred_check
      _
    $region86: #{qwen2_forward.1} parent=5 // pred_check_branch
      %490 = sbr.rel (%p487) target = $region88
    $region87: #{qwen2_forward.1} parent=5 // pred_region
      %s491 = ssub.s32 %s23, 1
      %p492 = scmp.lt.s32.totalorder %s28, 1
      %s493 = scalar_select %p492, %s28, 1
      %s494 = smul.addr %s493, 8
      %s495 = scalar_lea.vmem %s0, %s494
      %p496 = pneg %p49
      %p497 = pneg %p46
      %p498 = pneg %p70
      %p499 = pneg %p67
      %p500 = pneg %p91
      %p501 = pneg %p88
      %p502 = pneg %p112
      %p503 = pneg %p109
      %p504 = pneg %p133
      %p505 = pneg %p130
      %p506 = pneg %p154
      %p507 = pneg %p151
      %p508 = pneg %p175
      %p509 = pneg %p172
      %p510 = pneg %p196
      %p511 = pneg %p193
      %p512 = pneg %p217
      %p513 = pneg %p214
      %p514 = pneg %p238
      %p515 = pneg %p235
      %p516 = pneg %p259
      %p517 = pneg %p256
      %p518 = pneg %p280
      %p519 = pneg %p277
      %p520 = pneg %p301
      %p521 = pneg %p298
      %p522 = pneg %p322
      %p523 = pneg %p319
      %p524 = pneg %p343
      %p525 = pneg %p340
      %p526 = pneg %p364
      %p527 = pneg %p361
      %p528 = pneg %p385
      %p529 = pneg %p382
      %p530 = pneg %p411
      %p531 = pneg %p408
      %p532 = scmp.lt.s32.totalorder %s28, 1
      %s533 = scalar_select %p532, %s28, 1
      %s534 = smul.addr %s533, 8
      %s535 = scalar_lea.vmem %s17, %s534
      %p536 = scmp.lt.s32.totalorder %s28, 1
      %s537 = scalar_select %p536, %s28, 1
      %s538 = smul.addr %s537, 8
      %s539 = scalar_lea.vmem %s0, %s538
      %p540 = scmp.lt.s32.totalorder %s28, 1
      %s541 = scalar_select %p540, %s28, 1
      %s542 = smul.addr %s541, 8
      %s543 = scalar_lea.vmem %s17, %s542
      %v545 = vld [vmem:[%s1] sm:$0xff]
      %v546 = vld [vmem:[%s2] sm:$0xff]
      %v547 = vld [vmem:[%s3] sm:$0xff]
      %v548 = vld [vmem:[%s4] sm:$0xff]
      %v549 = vld [vmem:[%s4 + $0x8] sm:$0xff]
      %v550 = vld [vmem:[%s4 + $0x10] sm:$0xff]
      %v551 = vld [vmem:[%s4 + $0x18] sm:$0xff]
      %v552 = vld [vmem:[%s539] sm:$0xff]
      %v553 = vmul.f32 %v552, %v552
      %vm554 = vcmask 261120
      %v555 = vsel %vm554, %v553, 0.0
      %556 = vadd.xlane.f32.xlu0 %v555
      %v557 = vpop.xlane.xlu0 %556
      %v558 = vrcp.pop 32.0
      %v559 = vmul.f32 %v557, %v558
      %v560 = vadd.f32 %v559, 1e-06
      %v561 = vrsqrt.pop %v560
      %v562 = vmul.f32 %v552, %v561
      %v563 = vpack.c.bf16 %v562, %v562
      %v564 = vld [vmem:[%s5] sm:$0xf]
      %v565 = vld [vmem:[%s5 + $0x4] sm:$0xf]
      %v566 = vld [vmem:[%s5 + $0x8] sm:$0xf]
      %v567 = vld [vmem:[%s5 + $0xc] sm:$0xf]
      %v568 = vld [vmem:[%s6] sm:$0x1]
      %v570 = vlaneseq
      %v571 = vshrl.u32 %v570, 7
      %v572 = vsub.s32 0, %v571
      %v573 = vrot.slane %v568, %v572
      %v579 = vunpack.c.l.b16 %v564
      %v580 = vunpack.c.l.b16 %v565
      %v581 = vunpack.c.l.b16 %v566
      %v582 = vunpack.c.l.b16 %v567
      %v583 = vpack.c.b16 %v580, %v579
      %v584 = vpack.c.b16 %v582, %v581
      %v588 = vsel %vm554, %v563, 0
      %590 = vmatprep.subr.bf16.mxu0 0
      %591 = vmatpush1.bf16.msra.mxu0 %v583
      %592 = vmatprep.subr.bf16.mxu0 0
      %593 = vmatpush1.bf16.msra.mxu0 %v584
      %594 = vmatprep.subr.bf16.mxu0 0
      %595 = vmatpush1.bf16.msra.mxu0 0
      %596 = vmatprep.subr.bf16.mxu0 0
      %597 = vmatpush1.bf16.msra.mxu0 0
      %598 = vmatprep.subr.bf16.mxu0 0
      %599 = vmatpush1.bf16.msra.mxu0 0
      %600 = vmatprep.subr.bf16.mxu0 0
      %601 = vmatpush1.bf16.msra.mxu0 0
      %602 = vmatprep.subr.bf16.mxu0 0
      %603 = vmatpush1.bf16.msra.mxu0 0
      %604 = vmatprep.subr.bf16.mxu0 0
      %605 = vmatpush1.bf16.msra.mxu0 0
      %606 = vmatprep.subr.bf16.mxu0 0
      %607 = vmatpush1.bf16.msra.mxu0 0
      %608 = vmatprep.subr.bf16.mxu0 0
      %609 = vmatpush1.bf16.msra.mxu0 0
      %610 = vmatprep.subr.bf16.mxu0 0
      %611 = vmatpush1.bf16.msra.mxu0 0
      %612 = vmatprep.subr.bf16.mxu0 0
      %613 = vmatpush1.bf16.msra.mxu0 0
      %614 = vmatprep.subr.bf16.mxu0 0
      %615 = vmatpush1.bf16.msra.mxu0 0
      %616 = vmatprep.subr.bf16.mxu0 0
      %617 = vmatpush1.bf16.msra.mxu0 0
      %618 = vmatprep.subr.bf16.mxu0 0
      %619 = vmatpush1.bf16.msra.mxu0 0
      %620 = vmatprep.subr.bf16.mxu0 0
      %621 = vmatpush1.bf16.msra.mxu0 0
      %622 = vmatprep.mubr.bf16.mxu0 0
      %623 = vmatmul.mubr.bf16.gmra.mrb[0].mxu0 %v588
      %v624 = vpop.f32.mrb[0].mxu0
      %v625 = vadd.f32 %v573, %v624
      %v626 = vpop.f32.mrb[0].mxu0
      %v627 = vpop.f32.mrb[0].mxu0
      %v628 = vpop.f32.mrb[0].mxu0
      %629 = vdwg.mxu0
      %v630 = vmul.f32 %v625, %v545
      %632 = vrot.lane.b32.xlu0 %v625, 124
      %v633 = vpop.permute.xlu0 %632
      %635 = vrot.lane.b32.xlu0 %v625, 28
      %v636 = vpop.permute.xlu0 %635
      %vm638 = vcmask 228352
      %v639 = vsel %vm638, %v633, %v636
      %v640 = vmul.f32 %v639, %v546
      %v641 = vadd.f32 %v630, %v640
      %642 = vrot.lane.b32.xlu0 %v625, 100
      %v643 = vpop.permute.xlu0 %642
      %645 = vrot.lane.b32.xlu0 %v625, 4
      %v646 = vpop.permute.xlu0 %645
      %vm648 = vcmask 31744
      %v649 = vsel %vm648, %v643, %v646
      %v650 = vmul.f32 %v649, %v547
      %v651 = vadd.f32 %v641, %v650
      %653 = vrot.lane.b32.xlu0 %v545, 32
      %v654 = vpop.permute.xlu0 %653
      %v656 = vmul.f32 %v625, %v654
      %657 = vrot.lane.b32.xlu0 %v625, 92
      %v658 = vpop.permute.xlu0 %657
      %660 = vrot.lane.b32.xlu0 %v625, 108
      %v661 = vpop.permute.xlu0 %660
      %vm663 = vcmask 97280
      %v664 = vsel %vm663, %v658, %v661
      %v665 = vmul.f32 %v664, %v546
      %667 = vrot.lane.b32.xlu0 %v665, 32
      %v668 = vpop.permute.xlu0 %667
      %v670 = vadd.f32 %v656, %v668
      %671 = vrot.lane.b32.xlu0 %v625, 84
      %v672 = vpop.permute.xlu0 %671
      %v674 = vsel %vm648, %v672, %v643
      %v675 = vmul.f32 %v674, %v547
      %677 = vrot.lane.b32.xlu0 %v675, 32
      %v678 = vpop.permute.xlu0 %677
      %v680 = vadd.f32 %v670, %v678
      %v681 = vpack.c.bf16 %v651, %v651
      %v682 = vpack.c.bf16 %v680, %v680
      %v683 = vpack.c.bf16 %v625, %v625
      %685 = vrot.lane.b32.xlu0 %v682, 96
      %v686 = vpop.permute.xlu0 %685
      %vm687 = vcmask 64512
      %v689 = vsel %vm687, %v681, 0
      %v692 = vsel %vm687, %v686, 0
      %694 = vmatprep.subr.bf16.mxu0 0
      %695 = vmatpush1.bf16.xpose.msra.mxu0 %v692
      %696 = vmatprep.subr.bf16.mxu0 0
      %697 = vmatpush1.bf16.xpose.msra.mxu0 0
      %698 = vmatprep.subr.bf16.mxu0 0
      %699 = vmatpush1.bf16.xpose.msra.mxu0 0
      %700 = vmatprep.subr.bf16.mxu0 0
      %701 = vmatpush1.bf16.xpose.msra.mxu0 0
      %702 = vmatprep.subr.bf16.mxu0 0
      %703 = vmatpush1.bf16.xpose.msra.mxu0 0
      %704 = vmatprep.subr.bf16.mxu0 0
      %705 = vmatpush1.bf16.xpose.msra.mxu0 0
      %706 = vmatprep.subr.bf16.mxu0 0
      %707 = vmatpush1.bf16.xpose.msra.mxu0 0
      %708 = vmatprep.subr.bf16.mxu0 0
      %709 = vmatpush1.bf16.xpose.msra.mxu0 0
      %710 = vmatprep.subr.bf16.mxu0 0
      %711 = vmatpush1.bf16.xpose.msra.mxu0 0
      %712 = vmatprep.subr.bf16.mxu0 0
      %713 = vmatpush1.bf16.xpose.msra.mxu0 0
      %714 = vmatprep.subr.bf16.mxu0 0
      %715 = vmatpush1.bf16.xpose.msra.mxu0 0
      %716 = vmatprep.subr.bf16.mxu0 0
      %717 = vmatpush1.bf16.xpose.msra.mxu0 0
      %718 = vmatprep.subr.bf16.mxu0 0
      %719 = vmatpush1.bf16.xpose.msra.mxu0 0
      %720 = vmatprep.subr.bf16.mxu0 0
      %721 = vmatpush1.bf16.xpose.msra.mxu0 0
      %722 = vmatprep.subr.bf16.mxu0 0
      %723 = vmatpush1.bf16.xpose.msra.mxu0 0
      %724 = vmatprep.subr.bf16.mxu0 0
      %725 = vmatpush1.bf16.xpose.msra.mxu0 0
      %726 = vmatprep.mubr.bf16.mxu0 0
      %727 = vmatmul.mubr.bf16.gmra.mrb[0].mxu0 %v689
      %v728 = vpop.f32.mrb[0].mxu0
      %v729 = vadd.f32 0.0, %v728
      %v730 = vpop.f32.mrb[0].mxu0
      %v731 = vpop.f32.mrb[0].mxu0
      %v732 = vpop.f32.mrb[0].mxu0
      %733 = vdwg.mxu0
      %734 = vst.msk [vmem:[#allocation2] sm:$0xff] %vm687, %v729
      %736 = vrot.lane.b32.xlu0 %v681, 120
      %v737 = vpop.permute.xlu0 %736
      %v739 = vsel %vm687, %v737, 0
      %741 = vmatprep.subr.bf16.mxu0 0
      %742 = vmatpush1.bf16.xpose.msra.mxu0 %v692
      %743 = vmatprep.subr.bf16.mxu0 0
      %744 = vmatpush1.bf16.xpose.msra.mxu0 0
      %745 = vmatprep.subr.bf16.mxu0 0
      %746 = vmatpush1.bf16.xpose.msra.mxu0 0
      %747 = vmatprep.subr.bf16.mxu0 0
      %748 = vmatpush1.bf16.xpose.msra.mxu0 0
      %749 = vmatprep.subr.bf16.mxu0 0
      %750 = vmatpush1.bf16.xpose.msra.mxu0 0
      %751 = vmatprep.subr.bf16.mxu0 0
      %752 = vmatpush1.bf16.xpose.msra.mxu0 0
      %753 = vmatprep.subr.bf16.mxu0 0
      %754 = vmatpush1.bf16.xpose.msra.mxu0 0
      %755 = vmatprep.subr.bf16.mxu0 0
      %756 = vmatpush1.bf16.xpose.msra.mxu0 0
      %757 = vmatprep.subr.bf16.mxu0 0
      %758 = vmatpush1.bf16.xpose.msra.mxu0 0
      %759 = vmatprep.subr.bf16.mxu0 0
      %760 = vmatpush1.bf16.xpose.msra.mxu0 0
      %761 = vmatprep.subr.bf16.mxu0 0
      %762 = vmatpush1.bf16.xpose.msra.mxu0 0
      %763 = vmatprep.subr.bf16.mxu0 0
      %764 = vmatpush1.bf16.xpose.msra.mxu0 0
      %765 = vmatprep.subr.bf16.mxu0 0
      %766 = vmatpush1.bf16.xpose.msra.mxu0 0
      %767 = vmatprep.subr.bf16.mxu0 0
      %768 = vmatpush1.bf16.xpose.msra.mxu0 0
      %769 = vmatprep.subr.bf16.mxu0 0
      %770 = vmatpush1.bf16.xpose.msra.mxu0 0
      %771 = vmatprep.subr.bf16.mxu0 0
      %772 = vmatpush1.bf16.xpose.msra.mxu0 0
      %773 = vmatprep.mubr.bf16.mxu0 0
      %774 = vmatmul.mubr.bf16.gmra.mrb[0].mxu0 %v739
      %v775 = vpop.f32.mrb[0].mxu0
      %v776 = vadd.f32 0.0, %v775
      %v777 = vpop.f32.mrb[0].mxu0
      %v778 = vpop.f32.mrb[0].mxu0
      %v779 = vpop.f32.mrb[0].mxu0
      %780 = vdwg.mxu0
      %781 = vst.msk [vmem:[#allocation2 + $0x8] sm:$0xff] %vm687, %v776
      %782 = vrot.lane.b32.xlu0 %v681, 112
      %v783 = vpop.permute.xlu0 %782
      %784 = vrot.lane.b32.xlu0 %v682, 88
      %v785 = vpop.permute.xlu0 %784
      %v787 = vsel %vm687, %v783, 0
      %v790 = vsel %vm687, %v785, 0
      %792 = vmatprep.subr.bf16.mxu0 0
      %793 = vmatpush1.bf16.xpose.msra.mxu0 %v790
      %794 = vmatprep.subr.bf16.mxu0 0
      %795 = vmatpush1.bf16.xpose.msra.mxu0 0
      %796 = vmatprep.subr.bf16.mxu0 0
      %797 = vmatpush1.bf16.xpose.msra.mxu0 0
      %798 = vmatprep.subr.bf16.mxu0 0
      %799 = vmatpush1.bf16.xpose.msra.mxu0 0
      %800 = vmatprep.subr.bf16.mxu0 0
      %801 = vmatpush1.bf16.xpose.msra.mxu0 0
      %802 = vmatprep.subr.bf16.mxu0 0
      %803 = vmatpush1.bf16.xpose.msra.mxu0 0
      %804 = vmatprep.subr.bf16.mxu0 0
      %805 = vmatpush1.bf16.xpose.msra.mxu0 0
      %806 = vmatprep.subr.bf16.mxu0 0
      %807 = vmatpush1.bf16.xpose.msra.mxu0 0
      %808 = vmatprep.subr.bf16.mxu0 0
      %809 = vmatpush1.bf16.xpose.msra.mxu0 0
      %810 = vmatprep.subr.bf16.mxu0 0
      %811 = vmatpush1.bf16.xpose.msra.mxu0 0
      %812 = vmatprep.subr.bf16.mxu0 0
      %813 = vmatpush1.bf16.xpose.msra.mxu0 0
      %814 = vmatprep.subr.bf16.mxu0 0
      %815 = vmatpush1.bf16.xpose.msra.mxu0 0
      %816 = vmatprep.subr.bf16.mxu0 0
      %817 = vmatpush1.bf16.xpose.msra.mxu0 0
      %818 = vmatprep.subr.bf16.mxu0 0
      %819 = vmatpush1.bf16.xpose.msra.mxu0 0
      %820 = vmatprep.subr.bf16.mxu0 0
      %821 = vmatpush1.bf16.xpose.msra.mxu0 0
      %822 = vmatprep.subr.bf16.mxu0 0
      %823 = vmatpush1.bf16.xpose.msra.mxu0 0
      %824 = vmatprep.mubr.bf16.mxu0 0
      %825 = vmatmul.mubr.bf16.gmra.mrb[0].mxu0 %v787
      %v826 = vpop.f32.mrb[0].mxu0
      %v827 = vadd.f32 0.0, %v826
      %v828 = vpop.f32.mrb[0].mxu0
      %v829 = vpop.f32.mrb[0].mxu0
      %v830 = vpop.f32.mrb[0].mxu0
      %831 = vdwg.mxu0
      %832 = vst.msk [vmem:[#allocation2 + $0x10] sm:$0xff] %vm687, %v827
      %833 = vrot.lane.b32.xlu0 %v681, 104
      %v834 = vpop.permute.xlu0 %833
      %v836 = vsel %vm687, %v834, 0
      %838 = vmatprep.subr.bf16.mxu0 0
      %839 = vmatpush1.bf16.xpose.msra.mxu0 %v790
      %840 = vmatprep.subr.bf16.mxu0 0
      %841 = vmatpush1.bf16.xpose.msra.mxu0 0
      %842 = vmatprep.subr.bf16.mxu0 0
      %843 = vmatpush1.bf16.xpose.msra.mxu0 0
      %844 = vmatprep.subr.bf16.mxu0 0
      %845 = vmatpush1.bf16.xpose.msra.mxu0 0
      %846 = vmatprep.subr.bf16.mxu0 0
      %847 = vmatpush1.bf16.xpose.msra.mxu0 0
      %848 = vmatprep.subr.bf16.mxu0 0
      %849 = vmatpush1.bf16.xpose.msra.mxu0 0
      %850 = vmatprep.subr.bf16.mxu0 0
      %851 = vmatpush1.bf16.xpose.msra.mxu0 0
      %852 = vmatprep.subr.bf16.mxu0 0
      %853 = vmatpush1.bf16.xpose.msra.mxu0 0
      %854 = vmatprep.subr.bf16.mxu0 0
      %855 = vmatpush1.bf16.xpose.msra.mxu0 0
      %856 = vmatprep.subr.bf16.mxu0 0
      %857 = vmatpush1.bf16.xpose.msra.mxu0 0
      %858 = vmatprep.subr.bf16.mxu0 0
      %859 = vmatpush1.bf16.xpose.msra.mxu0 0
      %860 = vmatprep.subr.bf16.mxu0 0
      %861 = vmatpush1.bf16.xpose.msra.mxu0 0
      %862 = vmatprep.subr.bf16.mxu0 0
      %863 = vmatpush1.bf16.xpose.msra.mxu0 0
      %864 = vmatprep.subr.bf16.mxu0 0
      %865 = vmatpush1.bf16.xpose.msra.mxu0 0
      %866 = vmatprep.subr.bf16.mxu0 0
      %867 = vmatpush1.bf16.xpose.msra.mxu0 0
      %868 = vmatprep.subr.bf16.mxu0 0
      %869 = vmatpush1.bf16.xpose.msra.mxu0 0
      %870 = vmatprep.mubr.bf16.mxu0 0
      %871 = vmatmul.mubr.bf16.gmra.mrb[0].mxu0 %v836
      %v872 = vpop.f32.mrb[0].mxu0
      %v873 = vadd.f32 0.0, %v872
      %v874 = vpop.f32.mrb[0].mxu0
      %v875 = vpop.f32.mrb[0].mxu0
      %v876 = vpop.f32.mrb[0].mxu0
      %877 = vdwg.mxu0
      %878 = vst.msk [vmem:[#allocation2 + $0x18] sm:$0xff] %vm687, %v873
      %v879 = vld [vmem:[#allocation2] sm:$0xff]
      %v880 = vld [vmem:[#allocation2 + $0x8] sm:$0xff]
      %v881 = vld [vmem:[#allocation2 + $0x10] sm:$0xff]
      %v882 = vld [vmem:[#allocation2 + $0x18] sm:$0xff]
      %v883 = vadd.f32 %v879, %v548
      %v884 = vadd.f32 %v880, %v549
      %v885 = vadd.f32 %v881, %v550
      %v886 = vadd.f32 %v882, %v551
      %v887 = vsel %vm687, %v883, -inf
      %888 = vmax.xlane.f32.xlu0 %v887
      %v889 = vpop.xlane.xlu0 %888
      %v890 = vsel %vm687, %v884, -inf
      %891 = vmax.xlane.f32.xlu0 %v890
      %v892 = vpop.xlane.xlu0 %891
      %v893 = vsel %vm687, %v885, -inf
      %894 = vmax.xlane.f32.xlu0 %v893
      %v895 = vpop.xlane.xlu0 %894
      %v896 = vsel %vm687, %v886, -inf
      %897 = vmax.xlane.f32.xlu0 %v896
      %v898 = vpop.xlane.xlu0 %897
      %v899 = vsub.f32 %v883, %v889
      %v900 = vsub.f32 %v884, %v892
      %v901 = vsub.f32 %v885, %v895
      %v902 = vsub.f32 %v886, %v898
      %v903 = vmul.f32 %v899, 1.442695
      %v904 = vpow.pop %v903
      %v905 = vmul.f32 %v900, 1.442695
      %v906 = vpow.pop %v905
      %v907 = vmul.f32 %v901, 1.442695
      %v908 = vpow.pop %v907
      %v909 = vmul.f32 %v902, 1.442695
      %v910 = vpow.pop %v909
      %v911 = vsel %vm687, %v904, 0.0
      %912 = vadd.xlane.f32.xlu0 %v911
      %v913 = vpop.xlane.xlu0 %912
      %v914 = vsel %vm687, %v906, 0.0
      %915 = vadd.xlane.f32.xlu0 %v914
      %v916 = vpop.xlane.xlu0 %915
      %v917 = vsel %vm687, %v908, 0.0
      %918 = vadd.xlane.f32.xlu0 %v917
      %v919 = vpop.xlane.xlu0 %918
      %v920 = vsel %vm687, %v910, 0.0
      %921 = vadd.xlane.f32.xlu0 %v920
      %v922 = vpop.xlane.xlu0 %921
      %v923 = vrcp.pop %v913
      %v924 = vrcp.pop %v916
      %v925 = vrcp.pop %v919
      %v926 = vrcp.pop %v922
      %v927 = vmul.f32 %v904, %v923
      %v928 = vmul.f32 %v906, %v924
      %v929 = vmul.f32 %v908, %v925
      %v930 = vmul.f32 %v910, %v926
      %v931 = vpack.c.bf16 %v928, %v927
      %v932 = vpack.c.bf16 %v930, %v929
      %934 = vrot.lane.b32.xlu0 %v683, 80
      %v935 = vpop.permute.xlu0 %934
      %v937 = vsel %vm687, %v931, 0
      %vm939 = vcmask 1043456
      %v941 = vsel %vm939, %v935, 0
      %943 = vmatprep.subr.bf16.mxu0 0
      %944 = vmatpush1.bf16.msra.mxu0 %v941
      %945 = vmatprep.subr.bf16.mxu0 0
      %946 = vmatpush1.bf16.msra.mxu0 0
      %947 = vmatprep.subr.bf16.mxu0 0
      %948 = vmatpush1.bf16.msra.mxu0 0
      %949 = vmatprep.subr.bf16.mxu0 0
      %950 = vmatpush1.bf16.msra.mxu0 0
      %951 = vmatprep.subr.bf16.mxu0 0
      %952 = vmatpush1.bf16.msra.mxu0 0
      %953 = vmatprep.subr.bf16.mxu0 0
      %954 = vmatpush1.bf16.msra.mxu0 0
      %955 = vmatprep.subr.bf16.mxu0 0
      %956 = vmatpush1.bf16.msra.mxu0 0
      %957 = vmatprep.subr.bf16.mxu0 0
      %958 = vmatpush1.bf16.msra.mxu0 0
      %959 = vmatprep.subr.bf16.mxu0 0
      %960 = vmatpush1.bf16.msra.mxu0 0
      %961 = vmatprep.subr.bf16.mxu0 0
      %962 = vmatpush1.bf16.msra.mxu0 0
      %963 = vmatprep.subr.bf16.mxu0 0
      %964 = vmatpush1.bf16.msra.mxu0 0
      %965 = vmatprep.subr.bf16.mxu0 0
      %966 = vmatpush1.bf16.msra.mxu0 0
      %967 = vmatprep.subr.bf16.mxu0 0
      %968 = vmatpush1.bf16.msra.mxu0 0
      %969 = vmatprep.subr.bf16.mxu0 0
      %970 = vmatpush1.bf16.msra.mxu0 0
      %971 = vmatprep.subr.bf16.mxu0 0
      %972 = vmatpush1.bf16.msra.mxu0 0
      %973 = vmatprep.subr.bf16.mxu0 0
      %974 = vmatpush1.bf16.msra.mxu0 0
      %975 = vmatprep.mubr.bf16.mxu0 0
      %976 = vmatmul.mubr.bf16.gmra.mrb[0].mxu0 %v937
      %v977 = vpop.f32.mrb[0].mxu0
      %v978 = vadd.f32 0.0, %v977
      %v979 = vpop.f32.mrb[0].mxu0
      %v980 = vpop.f32.mrb[0].mxu0
      %v981 = vpop.f32.mrb[0].mxu0
      %982 = vdwg.mxu0
      %983 = vst.msk [vmem:[#allocation3] sm:$0xff] %vm687, %v978
      %v985 = vrot.slane %v931, 4
      %v987 = vsel %vm687, %v985, 0
      %989 = vmatprep.subr.bf16.mxu0 0
      %990 = vmatpush1.bf16.msra.mxu0 %v941
      %991 = vmatprep.subr.bf16.mxu0 0
      %992 = vmatpush1.bf16.msra.mxu0 0
      %993 = vmatprep.subr.bf16.mxu0 0
      %994 = vmatpush1.bf16.msra.mxu0 0
      %995 = vmatprep.subr.bf16.mxu0 0
      %996 = vmatpush1.bf16.msra.mxu0 0
      %997 = vmatprep.subr.bf16.mxu0 0
      %998 = vmatpush1.bf16.msra.mxu0 0
      %999 = vmatprep.subr.bf16.mxu0 0
      %1000 = vmatpush1.bf16.msra.mxu0 0
      %1001 = vmatprep.subr.bf16.mxu0 0
      %1002 = vmatpush1.bf16.msra.mxu0 0
      %1003 = vmatprep.subr.bf16.mxu0 0
      %1004 = vmatpush1.bf16.msra.mxu0 0
      %1005 = vmatprep.subr.bf16.mxu0 0
      %1006 = vmatpush1.bf16.msra.mxu0 0
      %1007 = vmatprep.subr.bf16.mxu0 0
      %1008 = vmatpush1.bf16.msra.mxu0 0
      %1009 = vmatprep.subr.bf16.mxu0 0
      %1010 = vmatpush1.bf16.msra.mxu0 0
      %1011 = vmatprep.subr.bf16.mxu0 0
      %1012 = vmatpush1.bf16.msra.mxu0 0
      %1013 = vmatprep.subr.bf16.mxu0 0
      %1014 = vmatpush1.bf16.msra.mxu0 0
      %1015 = vmatprep.subr.bf16.mxu0 0
      %1016 = vmatpush1.bf16.msra.mxu0 0
      %1017 = vmatprep.subr.bf16.mxu0 0
      %1018 = vmatpush1.bf16.msra.mxu0 0
      %1019 = vmatprep.subr.bf16.mxu0 0
      %1020 = vmatpush1.bf16.msra.mxu0 0
      %1021 = vmatprep.mubr.bf16.mxu0 0
      %1022 = vmatmul.mubr.bf16.gmra.mrb[0].mxu0 %v987
      %v1023 = vpop.f32.mrb[0].mxu0
      %v1024 = vadd.f32 0.0, %v1023
      %v1025 = vpop.f32.mrb[0].mxu0
      %v1026 = vpop.f32.mrb[0].mxu0
      %v1027 = vpop.f32.mrb[0].mxu0
      %1028 = vdwg.mxu0
      %1030 = vrot.lane.b32.xlu0 %v1024, 8
      %v1031 = vpop.permute.xlu0 %1030
      %vm1033 = vcmask 130112
      %1034 = vst.msk [vmem:[#allocation3] sm:$0xff] %vm1033, %v1031
      %1035 = vrot.lane.b32.xlu0 %v683, 72
      %v1036 = vpop.permute.xlu0 %1035
      %v1038 = vsel %vm687, %v932, 0
      %v1041 = vsel %vm939, %v1036, 0
      %1043 = vmatprep.subr.bf16.mxu0 0
      %1044 = vmatpush1.bf16.msra.mxu0 %v1041
      %1045 = vmatprep.subr.bf16.mxu0 0
      %1046 = vmatpush1.bf16.msra.mxu0 0
      %1047 = vmatprep.subr.bf16.mxu0 0
      %1048 = vmatpush1.bf16.msra.mxu0 0
      %1049 = vmatprep.subr.bf16.mxu0 0
      %1050 = vmatpush1.bf16.msra.mxu0 0
      %1051 = vmatprep.subr.bf16.mxu0 0
      %1052 = vmatpush1.bf16.msra.mxu0 0
      %1053 = vmatprep.subr.bf16.mxu0 0
      %1054 = vmatpush1.bf16.msra.mxu0 0
      %1055 = vmatprep.subr.bf16.mxu0 0
      %1056 = vmatpush1.bf16.msra.mxu0 0
      %1057 = vmatprep.subr.bf16.mxu0 0
      %1058 = vmatpush1.bf16.msra.mxu0 0
      %1059 = vmatprep.subr.bf16.mxu0 0
      %1060 = vmatpush1.bf16.msra.mxu0 0
      %1061 = vmatprep.subr.bf16.mxu0 0
      %1062 = vmatpush1.bf16.msra.mxu0 0
      %1063 = vmatprep.subr.bf16.mxu0 0
      %1064 = vmatpush1.bf16.msra.mxu0 0
      %1065 = vmatprep.subr.bf16.mxu0 0
      %1066 = vmatpush1.bf16.msra.mxu0 0
      %1067 = vmatprep.subr.bf16.mxu0 0
      %1068 = vmatpush1.bf16.msra.mxu0 0
      %1069 = vmatprep.subr.bf16.mxu0 0
      %1070 = vmatpush1.bf16.msra.mxu0 0
      %1071 = vmatprep.subr.bf16.mxu0 0
      %1072 = vmatpush1.bf16.msra.mxu0 0
      %1073 = vmatprep.subr.bf16.mxu0 0
      %1074 = vmatpush1.bf16.msra.mxu0 0
      %1075 = vmatprep.mubr.bf16.mxu0 0
      %1076 = vmatmul.mubr.bf16.gmra.mrb[0].mxu0 %v1038
      %v1077 = vpop.f32.mrb[0].mxu0
      %v1078 = vadd.f32 0.0, %v1077
      %v1079 = vpop.f32.mrb[0].mxu0
      %v1080 = vpop.f32.mrb[0].mxu0
      %v1081 = vpop.f32.mrb[0].mxu0
      %1082 = vdwg.mxu0
      %1084 = vrot.lane.b32.xlu0 %v1078, 16
      %v1085 = vpop.permute.xlu0 %1084
      %vm1087 = vcmask 195712
      %1088 = vst.msk [vmem:[#allocation3] sm:$0xff] %vm1087, %v1085
      %v1090 = vrot.slane %v932, 4
      %v1092 = vsel %vm687, %v1090, 0
      %1094 = vmatprep.subr.bf16.mxu0 0
      %1095 = vmatpush1.bf16.msra.mxu0 %v1041
      %1096 = vmatprep.subr.bf16.mxu0 0
      %1097 = vmatpush1.bf16.msra.mxu0 0
      %1098 = vmatprep.subr.bf16.mxu0 0
      %1099 = vmatpush1.bf16.msra.mxu0 0
      %1100 = vmatprep.subr.bf16.mxu0 0
      %1101 = vmatpush1.bf16.msra.mxu0 0
      %1102 = vmatprep.subr.bf16.mxu0 0
      %1103 = vmatpush1.bf16.msra.mxu0 0
      %1104 = vmatprep.subr.bf16.mxu0 0
      %1105 = vmatpush1.bf16.msra.mxu0 0
      %1106 = vmatprep.subr.bf16.mxu0 0
      %1107 = vmatpush1.bf16.msra.mxu0 0
      %1108 = vmatprep.subr.bf16.mxu0 0
      %1109 = vmatpush1.bf16.msra.mxu0 0
      %1110 = vmatprep.subr.bf16.mxu0 0
      %1111 = vmatpush1.bf16.msra.mxu0 0
      %1112 = vmatprep.subr.bf16.mxu0 0
      %1113 = vmatpush1.bf16.msra.mxu0 0
      %1114 = vmatprep.subr.bf16.mxu0 0
      %1115 = vmatpush1.bf16.msra.mxu0 0
      %1116 = vmatprep.subr.bf16.mxu0 0
      %1117 = vmatpush1.bf16.msra.mxu0 0
      %1118 = vmatprep.subr.bf16.mxu0 0
      %1119 = vmatpush1.bf16.msra.mxu0 0
      %1120 = vmatprep.subr.bf16.mxu0 0
      %1121 = vmatpush1.bf16.msra.mxu0 0
      %1122 = vmatprep.subr.bf16.mxu0 0
      %1123 = vmatpush1.bf16.msra.mxu0 0
      %1124 = vmatprep.subr.bf16.mxu0 0
      %1125 = vmatpush1.bf16.msra.mxu0 0
      %1126 = vmatprep.mubr.bf16.mxu0 0
      %1127 = vmatmul.mubr.bf16.gmra.mrb[0].mxu0 %v1092
      %v1128 = vpop.f32.mrb[0].mxu0
      %v1129 = vadd.f32 0.0, %v1128
      %v1130 = vpop.f32.mrb[0].mxu0
      %v1131 = vpop.f32.mrb[0].mxu0
      %v1132 = vpop.f32.mrb[0].mxu0
      %1133 = vdwg.mxu0
      %1135 = vrot.lane.b32.xlu0 %v1129, 24
      %v1136 = vpop.permute.xlu0 %1135
      %vm1138 = vcmask 261312
      %1139 = vst.msk [vmem:[#allocation3] sm:$0xff] %vm1138, %v1136
      %v1140 = vld [vmem:[#allocation3] sm:$0xff]
      %v1141 = vpack.c.bf16 %v1140, %v1140
      %v1142 = vld [vmem:[%s7] sm:$0xf]
      %v1143 = vld [vmem:[%s7 + $0x4] sm:$0xf]
      %v1144 = vld [vmem:[%s7 + $0x8] sm:$0xf]
      %v1145 = vld [vmem:[%s7 + $0xc] sm:$0xf]
      %v1150 = vunpack.c.l.b16 %v1142
      %v1151 = vunpack.c.l.b16 %v1143
      %v1152 = vunpack.c.l.b16 %v1144
      %v1153 = vunpack.c.l.b16 %v1145
      %v1154 = vpack.c.b16 %v1151, %v1150
      %v1155 = vpack.c.b16 %v1153, %v1152
      %v1159 = vsel %vm554, %v1141, 0
      %1161 = vmatprep.subr.bf16.mxu0 0
      %1162 = vmatpush1.bf16.msra.mxu0 %v1154
      %1163 = vmatprep.subr.bf16.mxu0 0
      %1164 = vmatpush1.bf16.msra.mxu0 %v1155
      %1165 = vmatprep.subr.bf16.mxu0 0
      %1166 = vmatpush1.bf16.msra.mxu0 0
      %1167 = vmatprep.subr.bf16.mxu0 0
      %1168 = vmatpush1.bf16.msra.mxu0 0
      %1169 = vmatprep.subr.bf16.mxu0 0
      %1170 = vmatpush1.bf16.msra.mxu0 0
      %1171 = vmatprep.subr.bf16.mxu0 0
      %1172 = vmatpush1.bf16.msra.mxu0 0
      %1173 = vmatprep.subr.bf16.mxu0 0
      %1174 = vmatpush1.bf16.msra.mxu0 0
      %1175 = vmatprep.subr.bf16.mxu0 0
      %1176 = vmatpush1.bf16.msra.mxu0 0
      %1177 = vmatprep.subr.bf16.mxu0 0
      %1178 = vmatpush1.bf16.msra.mxu0 0
      %1179 = vmatprep.subr.bf16.mxu0 0
      %1180 = vmatpush1.bf16.msra.mxu0 0
      %1181 = vmatprep.subr.bf16.mxu0 0
      %1182 = vmatpush1.bf16.msra.mxu0 0
      %1183 = vmatprep.subr.bf16.mxu0 0
      %1184 = vmatpush1.bf16.msra.mxu0 0
      %1185 = vmatprep.subr.bf16.mxu0 0
      %1186 = vmatpush1.bf16.msra.mxu0 0
      %1187 = vmatprep.subr.bf16.mxu0 0
      %1188 = vmatpush1.bf16.msra.mxu0 0
      %1189 = vmatprep.subr.bf16.mxu0 0
      %1190 = vmatpush1.bf16.msra.mxu0 0
      %1191 = vmatprep.subr.bf16.mxu0 0
      %1192 = vmatpush1.bf16.msra.mxu0 0
      %1193 = vmatprep.mubr.bf16.mxu0 0
      %1194 = vmatmul.mubr.bf16.gmra.mrb[0].mxu0 %v1159
      %v1195 = vpop.f32.mrb[0].mxu0
      %v1196 = vadd.f32 0.0, %v1195
      %v1197 = vpop.f32.mrb[0].mxu0
      %v1198 = vpop.f32.mrb[0].mxu0
      %v1199 = vpop.f32.mrb[0].mxu0
      %1200 = vdwg.mxu0
      %v1201 = vadd.f32 %v552, %v1196
      %v1202 = vmul.f32 %v1201, %v1201
      %v1203 = vsel %vm554, %v1202, 0.0
      %1204 = vadd.xlane.f32.xlu0 %v1203
      %v1205 = vpop.xlane.xlu0 %1204
      %v1206 = vmul.f32 %v1205, %v558
      %v1207 = vadd.f32 %v1206, 1e-06
      %v1208 = vrsqrt.pop %v1207
      %v1209 = vmul.f32 %v1201, %v1208
      %v1210 = vpack.c.bf16 %v1209, %v1209
      %v1211 = vld [vmem:[%s8] sm:$0xf]
      %v1212 = vld [vmem:[%s8 + $0x4] sm:$0xf]
      %v1213 = vld [vmem:[%s8 + $0x8] sm:$0xf]
      %v1214 = vld [vmem:[%s8 + $0xc] sm:$0xf]
      %v1219 = vunpack.c.l.b16 %v1211
      %v1220 = vunpack.c.l.b16 %v1212
      %v1221 = vunpack.c.l.b16 %v1213
      %v1222 = vunpack.c.l.b16 %v1214
      %v1223 = vpack.c.b16 %v1220, %v1219
      %v1224 = vpack.c.b16 %v1222, %v1221
      %v1228 = vsel %vm554, %v1210, 0
      %1230 = vmatprep.subr.bf16.mxu0 0
      %1231 = vmatpush1.bf16.msra.mxu0 %v1223
      %1232 = vmatprep.subr.bf16.mxu0 0
      %1233 = vmatpush1.bf16.msra.mxu0 %v1224
      %1234 = vmatprep.subr.bf16.mxu0 0
      %1235 = vmatpush1.bf16.msra.mxu0 0
      %1236 = vmatprep.subr.bf16.mxu0 0
      %1237 = vmatpush1.bf16.msra.mxu0 0
      %1238 = vmatprep.subr.bf16.mxu0 0
      %1239 = vmatpush1.bf16.msra.mxu0 0
      %1240 = vmatprep.subr.bf16.mxu0 0
      %1241 = vmatpush1.bf16.msra.mxu0 0
      %1242 = vmatprep.subr.bf16.mxu0 0
      %1243 = vmatpush1.bf16.msra.mxu0 0
      %1244 = vmatprep.subr.bf16.mxu0 0
      %1245 = vmatpush1.bf16.msra.mxu0 0
      %1246 = vmatprep.subr.bf16.mxu0 0
      %1247 = vmatpush1.bf16.msra.mxu0 0
      %1248 = vmatprep.subr.bf16.mxu0 0
      %1249 = vmatpush1.bf16.msra.mxu0 0
      %1250 = vmatprep.subr.bf16.mxu0 0
      %1251 = vmatpush1.bf16.msra.mxu0 0
      %1252 = vmatprep.subr.bf16.mxu0 0
      %1253 = vmatpush1.bf16.msra.mxu0 0
      %1254 = vmatprep.subr.bf16.mxu0 0
      %1255 = vmatpush1.bf16.msra.mxu0 0
      %1256 = vmatprep.subr.bf16.mxu0 0
      %1257 = vmatpush1.bf16.msra.mxu0 0
      %1258 = vmatprep.subr.bf16.mxu0 0
      %1259 = vmatpush1.bf16.msra.mxu0 0
      %1260 = vmatprep.subr.bf16.mxu0 0
      %1261 = vmatpush1.bf16.msra.mxu0 0
      %1262 = vmatprep.mubr.bf16.mxu0 0
      %1263 = vmatmul.mubr.bf16.gmra.mrb[0].mxu0 %v1228
      %v1264 = vpop.f32.mrb[0].mxu0
      %v1265 = vadd.f32 0.0, %v1264
      %v1266 = vpop.f32.mrb[0].mxu0
      %v1267 = vpop.f32.mrb[0].mxu0
      %v1268 = vpop.f32.mrb[0].mxu0
      %1269 = vdwg.mxu0
      %v1270 = vxor.u32 %v1265, 2147483648
      %v1271 = vmul.f32 %v1270, 1.442695
      %v1272 = vpow.pop %v1271
      %v1273 = vadd.f32 %v1272, 1.0
      %v1274 = vrcp.pop %v1273
      %v1275 = vmul.f32 1.0, %v1274
      %v1276 = vmul.f32 %v1265, %v1275
      %1278 = vrot.lane.b32.xlu0 %v1265, 64
      %v1279 = vpop.permute.xlu0 %1278
      %v1281 = vmul.f32 %v1276, %v1279
      %v1282 = vpack.c.bf16 %v1281, %v1281
      %v1283 = vld [vmem:[%s9] sm:$0xf]
      %v1284 = vld [vmem:[%s9 + $0x4] sm:$0xf]
      %v1285 = vld [vmem:[%s9 + $0x8] sm:$0xf]
      %v1286 = vld [vmem:[%s9 + $0xc] sm:$0xf]
      %v1287 = vld [vmem:[%s9 + $0x10] sm:$0xf]
      %v1288 = vld [vmem:[%s9 + $0x14] sm:$0xf]
      %v1289 = vld [vmem:[%s9 + $0x18] sm:$0xf]
      %v1290 = vld [vmem:[%s9 + $0x1c] sm:$0xf]
      %v1299 = vunpack.c.l.b16 %v1283
      %v1300 = vunpack.c.l.b16 %v1284
      %v1301 = vunpack.c.l.b16 %v1285
      %v1302 = vunpack.c.l.b16 %v1286
      %v1303 = vunpack.c.l.b16 %v1287
      %v1304 = vunpack.c.l.b16 %v1288
      %v1305 = vunpack.c.l.b16 %v1289
      %v1306 = vunpack.c.l.b16 %v1290
      %v1307 = vpack.c.b16 %v1300, %v1299
      %v1308 = vpack.c.b16 %v1302, %v1301
      %v1309 = vpack.c.b16 %v1304, %v1303
      %v1310 = vpack.c.b16 %v1306, %v1305
      %vm1315 = vcmask 523264
      %v1317 = vsel %vm1315, %v1282, 0
      %1319 = vmatprep.subr.bf16.mxu0 0
      %1320 = vmatpush1.bf16.msra.mxu0 %v1307
      %1321 = vmatprep.subr.bf16.mxu0 0
      %1322 = vmatpush1.bf16.msra.mxu0 %v1308
      %1323 = vmatprep.subr.bf16.mxu0 0
      %1324 = vmatpush1.bf16.msra.mxu0 %v1309
      %1325 = vmatprep.subr.bf16.mxu0 0
      %1326 = vmatpush1.bf16.msra.mxu0 %v1310
      %1327 = vmatprep.subr.bf16.mxu0 0
      %1328 = vmatpush1.bf16.msra.mxu0 0
      %1329 = vmatprep.subr.bf16.mxu0 0
      %1330 = vmatpush1.bf16.msra.mxu0 0
      %1331 = vmatprep.subr.bf16.mxu0 0
      %1332 = vmatpush1.bf16.msra.mxu0 0
      %1333 = vmatprep.subr.bf16.mxu0 0
      %1334 = vmatpush1.bf16.msra.mxu0 0
      %1335 = vmatprep.subr.bf16.mxu0 0
      %1336 = vmatpush1.bf16.msra.mxu0 0
      %1337 = vmatprep.subr.bf16.mxu0 0
      %1338 = vmatpush1.bf16.msra.mxu0 0
      %1339 = vmatprep.subr.bf16.mxu0 0
      %1340 = vmatpush1.bf16.msra.mxu0 0
      %1341 = vmatprep.subr.bf16.mxu0 0
      %1342 = vmatpush1.bf16.msra.mxu0 0
      %1343 = vmatprep.subr.bf16.mxu0 0
      %1344 = vmatpush1.bf16.msra.mxu0 0
      %1345 = vmatprep.subr.bf16.mxu0 0
      %1346 = vmatpush1.bf16.msra.mxu0 0
      %1347 = vmatprep.subr.bf16.mxu0 0
      %1348 = vmatpush1.bf16.msra.mxu0 0
      %1349 = vmatprep.subr.bf16.mxu0 0
      %1350 = vmatpush1.bf16.msra.mxu0 0
      %1351 = vmatprep.mubr.bf16.mxu0 0
      %1352 = vmatmul.mubr.bf16.gmra.mrb[0].mxu0 %v1317
      %v1353 = vpop.f32.mrb[0].mxu0
      %v1354 = vadd.f32 0.0, %v1353
      %v1355 = vpop.f32.mrb[0].mxu0
      %v1356 = vpop.f32.mrb[0].mxu0
      %v1357 = vpop.f32.mrb[0].mxu0
      %1358 = vdwg.mxu0
      %v1359 = vadd.f32 %v1201, %v1354
      %v1360 = vmul.f32 %v1359, %v1359
      %v1361 = vsel %vm554, %v1360, 0.0
      %1362 = vadd.xlane.f32.xlu0 %v1361
      %v1363 = vpop.xlane.xlu0 %1362
      %v1364 = vmul.f32 %v1363, %v558
      %v1365 = vadd.f32 %v1364, 1e-06
      %v1366 = vrsqrt.pop %v1365
      %v1367 = vmul.f32 %v1359, %v1366
      %v1368 = vpack.c.bf16 %v1367, %v1367
      %v1369 = vld [vmem:[%s10] sm:$0xf]
      %v1370 = vld [vmem:[%s10 + $0x4] sm:$0xf]
      %v1371 = vld [vmem:[%s10 + $0x8] sm:$0xf]
      %v1372 = vld [vmem:[%s10 + $0xc] sm:$0xf]
      %v1373 = vld [vmem:[%s11] sm:$0x1]
      %v1375 = vlaneseq
      %v1376 = vshrl.u32 %v1375, 7
      %v1377 = vsub.s32 0, %v1376
      %v1378 = vrot.slane %v1373, %v1377
      %v1384 = vunpack.c.l.b16 %v1369
      %v1385 = vunpack.c.l.b16 %v1370
      %v1386 = vunpack.c.l.b16 %v1371
      %v1387 = vunpack.c.l.b16 %v1372
      %v1388 = vpack.c.b16 %v1385, %v1384
      %v1389 = vpack.c.b16 %v1387, %v1386
      %v1393 = vsel %vm554, %v1368, 0
      %1395 = vmatprep.subr.bf16.mxu0 0
      %1396 = vmatpush1.bf16.msra.mxu0 %v1388
      %1397 = vmatprep.subr.bf16.mxu0 0
      %1398 = vmatpush1.bf16.msra.mxu0 %v1389
      %1399 = vmatprep.subr.bf16.mxu0 0
      %1400 = vmatpush1.bf16.msra.mxu0 0
      %1401 = vmatprep.subr.bf16.mxu0 0
      %1402 = vmatpush1.bf16.msra.mxu0 0
      %1403 = vmatprep.subr.bf16.mxu0 0
      %1404 = vmatpush1.bf16.msra.mxu0 0
      %1405 = vmatprep.subr.bf16.mxu0 0
      %1406 = vmatpush1.bf16.msra.mxu0 0
      %1407 = vmatprep.subr.bf16.mxu0 0
      %1408 = vmatpush1.bf16.msra.mxu0 0
      %1409 = vmatprep.subr.bf16.mxu0 0
      %1410 = vmatpush1.bf16.msra.mxu0 0
      %1411 = vmatprep.subr.bf16.mxu0 0
      %1412 = vmatpush1.bf16.msra.mxu0 0
      %1413 = vmatprep.subr.bf16.mxu0 0
      %1414 = vmatpush1.bf16.msra.mxu0 0
      %1415 = vmatprep.subr.bf16.mxu0 0
      %1416 = vmatpush1.bf16.msra.mxu0 0
      %1417 = vmatprep.subr.bf16.mxu0 0
      %1418 = vmatpush1.bf16.msra.mxu0 0
      %1419 = vmatprep.subr.bf16.mxu0 0
      %1420 = vmatpush1.bf16.msra.mxu0 0
      %1421 = vmatprep.subr.bf16.mxu0 0
      %1422 = vmatpush1.bf16.msra.mxu0 0
      %1423 = vmatprep.subr.bf16.mxu0 0
      %1424 = vmatpush1.bf16.msra.mxu0 0
      %1425 = vmatprep.subr.bf16.mxu0 0
      %1426 = vmatpush1.bf16.msra.mxu0 0
      %1427 = vmatprep.mubr.bf16.mxu0 0
      %1428 = vmatmul.mubr.bf16.gmra.mrb[0].mxu0 %v1393
      %v1429 = vpop.f32.mrb[0].mxu0
      %v1430 = vadd.f32 %v1378, %v1429
      %v1431 = vpop.f32.mrb[0].mxu0
      %v1432 = vpop.f32.mrb[0].mxu0
      %v1433 = vpop.f32.mrb[0].mxu0
      %1434 = vdwg.mxu0
      %v1435 = vmul.f32 %v1430, %v545
      %1437 = vrot.lane.b32.xlu0 %v1430, 124
      %v1438 = vpop.permute.xlu0 %1437
      %1440 = vrot.lane.b32.xlu0 %v1430, 28
      %v1441 = vpop.permute.xlu0 %1440
      %v1443 = vsel %vm638, %v1438, %v1441
      %v1444 = vmul.f32 %v1443, %v546
      %v1445 = vadd.f32 %v1435, %v1444
      %1446 = vrot.lane.b32.xlu0 %v1430, 100
      %v1447 = vpop.permute.xlu0 %1446
      %1449 = vrot.lane.b32.xlu0 %v1430, 4
      %v1450 = vpop.permute.xlu0 %1449
      %v1452 = vsel %vm648, %v1447, %v1450
      %v1453 = vmul.f32 %v1452, %v547
      %v1454 = vadd.f32 %v1445, %v1453
      %v1455 = vmul.f32 %v1430, %v654
      %1456 = vrot.lane.b32.xlu0 %v1430, 92
      %v1457 = vpop.permute.xlu0 %1456
      %1459 = vrot.lane.b32.xlu0 %v1430, 108
      %v1460 = vpop.permute.xlu0 %1459
      %v1462 = vsel %vm663, %v1457, %v1460
      %v1463 = vmul.f32 %v1462, %v546
      %1465 = vrot.lane.b32.xlu0 %v1463, 32
      %v1466 = vpop.permute.xlu0 %1465
      %v1468 = vadd.f32 %v1455, %v1466
      %1469 = vrot.lane.b32.xlu0 %v1430, 84
      %v1470 = vpop.permute.xlu0 %1469
      %v1472 = vsel %vm648, %v1470, %v1447
      %v1473 = vmul.f32 %v1472, %v547
      %1475 = vrot.lane.b32.xlu0 %v1473, 32
      %v1476 = vpop.permute.xlu0 %1475
      %v1478 = vadd.f32 %v1468, %v1476
      %v1479 = vpack.c.bf16 %v1454, %v1454
      %v1480 = vpack.c.bf16 %v1478, %v1478
      %v1481 = vpack.c.bf16 %v1430, %v1430
      %1483 = vrot.lane.b32.xlu0 %v1480, 96
      %v1484 = vpop.permute.xlu0 %1483
      %v1486 = vsel %vm687, %v1479, 0
      %v1489 = vsel %vm687, %v1484, 0
      %1491 = vmatprep.subr.bf16.mxu0 0
      %1492 = vmatpush1.bf16.xpose.msra.mxu0 %v1489
      %1493 = vmatprep.subr.bf16.mxu0 0
      %1494 = vmatpush1.bf16.xpose.msra.mxu0 0
      %1495 = vmatprep.subr.bf16.mxu0 0
      %1496 = vmatpush1.bf16.xpose.msra.mxu0 0
      %1497 = vmatprep.subr.bf16.mxu0 0
      %1498 = vmatpush1.bf16.xpose.msra.mxu0 0
      %1499 = vmatprep.subr.bf16.mxu0 0
      %1500 = vmatpush1.bf16.xpose.msra.mxu0 0
      %1501 = vmatprep.subr.bf16.mxu0 0
      %1502 = vmatpush1.bf16.xpose.msra.mxu0 0
      %1503 = vmatprep.subr.bf16.mxu0 0
      %1504 = vmatpush1.bf16.xpose.msra.mxu0 0
      %1505 = vmatprep.subr.bf16.mxu0 0
      %1506 = vmatpush1.bf16.xpose.msra.mxu0 0
      %1507 = vmatprep.subr.bf16.mxu0 0
      %1508 = vmatpush1.bf16.xpose.msra.mxu0 0
      %1509 = vmatprep.subr.bf16.mxu0 0
      %1510 = vmatpush1.bf16.xpose.msra.mxu0 0
      %1511 = vmatprep.subr.bf16.mxu0 0
      %1512 = vmatpush1.bf16.xpose.msra.mxu0 0
      %1513 = vmatprep.subr.bf16.mxu0 0
      %1514 = vmatpush1.bf16.xpose.msra.mxu0 0
      %1515 = vmatprep.subr.bf16.mxu0 0
      %1516 = vmatpush1.bf16.xpose.msra.mxu0 0
      %1517 = vmatprep.subr.bf16.mxu0 0
      %1518 = vmatpush1.bf16.xpose.msra.mxu0 0
      %1519 = vmatprep.subr.bf16.mxu0 0
      %1520 = vmatpush1.bf16.xpose.msra.mxu0 0
      %1521 = vmatprep.subr.bf16.mxu0 0
      %1522 = vmatpush1.bf16.xpose.msra.mxu0 0
      %1523 = vmatprep.mubr.bf16.mxu0 0
      %1524 = vmatmul.mubr.bf16.gmra.mrb[0].mxu0 %v1486
      %v1525 = vpop.f32.mrb[0].mxu0
      %v1526 = vadd.f32 0.0, %v1525
      %v1527 = vpop.f32.mrb[0].mxu0
      %v1528 = vpop.f32.mrb[0].mxu0
      %v1529 = vpop.f32.mrb[0].mxu0
      %1530 = vdwg.mxu0
      %1531 = vst.msk [vmem:[#allocation2] sm:$0xff] %vm687, %v1526
      %1533 = vrot.lane.b32.xlu0 %v1479, 120
      %v1534 = vpop.permute.xlu0 %1533
      %v1536 = vsel %vm687, %v1534, 0
      %1538 = vmatprep.subr.bf16.mxu0 0
      %1539 = vmatpush1.bf16.xpose.msra.mxu0 %v1489
      %1540 = vmatprep.subr.bf16.mxu0 0
      %1541 = vmatpush1.bf16.xpose.msra.mxu0 0
      %1542 = vmatprep.subr.bf16.mxu0 0
      %1543 = vmatpush1.bf16.xpose.msra.mxu0 0
      %1544 = vmatprep.subr.bf16.mxu0 0
      %1545 = vmatpush1.bf16.xpose.msra.mxu0 0
      %1546 = vmatprep.subr.bf16.mxu0 0
      %1547 = vmatpush1.bf16.xpose.msra.mxu0 0
      %1548 = vmatprep.subr.bf16.mxu0 0
      %1549 = vmatpush1.bf16.xpose.msra.mxu0 0
      %1550 = vmatprep.subr.bf16.mxu0 0
      %1551 = vmatpush1.bf16.xpose.msra.mxu0 0
      %1552 = vmatprep.subr.bf16.mxu0 0
      %1553 = vmatpush1.bf16.xpose.msra.mxu0 0
      %1554 = vmatprep.subr.bf16.mxu0 0
      %1555 = vmatpush1.bf16.xpose.msra.mxu0 0
      %1556 = vmatprep.subr.bf16.mxu0 0
      %1557 = vmatpush1.bf16.xpose.msra.mxu0 0
      %1558 = vmatprep.subr.bf16.mxu0 0
      %1559 = vmatpush1.bf16.xpose.msra.mxu0 0
      %1560 = vmatprep.subr.bf16.mxu0 0
      %1561 = vmatpush1.bf16.xpose.msra.mxu0 0
      %1562 = vmatprep.subr.bf16.mxu0 0
      %1563 = vmatpush1.bf16.xpose.msra.mxu0 0
      %1564 = vmatprep.subr.bf16.mxu0 0
      %1565 = vmatpush1.bf16.xpose.msra.mxu0 0
      %1566 = vmatprep.subr.bf16.mxu0 0
      %1567 = vmatpush1.bf16.xpose.msra.mxu0 0
      %1568 = vmatprep.subr.bf16.mxu0 0
      %1569 = vmatpush1.bf16.xpose.msra.mxu0 0
      %1570 = vmatprep.mubr.bf16.mxu0 0
      %1571 = vmatmul.mubr.bf16.gmra.mrb[0].mxu0 %v1536
      %v1572 = vpop.f32.mrb[0].mxu0
      %v1573 = vadd.f32 0.0, %v1572
      %v1574 = vpop.f32.mrb[0].mxu0
      %v1575 = vpop.f32.mrb[0].mxu0
      %v1576 = vpop.f32.mrb[0].mxu0
      %1577 = vdwg.mxu0
      %1578 = vst.msk [vmem:[#allocation2 + $0x8] sm:$0xff] %vm687, %v1573
      %1579 = vrot.lane.b32.xlu0 %v1479, 112
      %v1580 = vpop.permute.xlu0 %1579
      %1581 = vrot.lane.b32.xlu0 %v1480, 88
      %v1582 = vpop.permute.xlu0 %1581
      %v1584 = vsel %vm687, %v1580, 0
      %v1587 = vsel %vm687, %v1582, 0
      %1589 = vmatprep.subr.bf16.mxu0 0
      %1590 = vmatpush1.bf16.xpose.msra.mxu0 %v1587
      %1591 = vmatprep.subr.bf16.mxu0 0
      %1592 = vmatpush1.bf16.xpose.msra.mxu0 0
      %1593 = vmatprep.subr.bf16.mxu0 0
      %1594 = vmatpush1.bf16.xpose.msra.mxu0 0
      %1595 = vmatprep.subr.bf16.mxu0 0
      %1596 = vmatpush1.bf16.xpose.msra.mxu0 0
      %1597 = vmatprep.subr.bf16.mxu0 0
      %1598 = vmatpush1.bf16.xpose.msra.mxu0 0
      %1599 = vmatprep.subr.bf16.mxu0 0
      %1600 = vmatpush1.bf16.xpose.msra.mxu0 0
      %1601 = vmatprep.subr.bf16.mxu0 0
      %1602 = vmatpush1.bf16.xpose.msra.mxu0 0
      %1603 = vmatprep.subr.bf16.mxu0 0
      %1604 = vmatpush1.bf16.xpose.msra.mxu0 0
      %1605 = vmatprep.subr.bf16.mxu0 0
      %1606 = vmatpush1.bf16.xpose.msra.mxu0 0
      %1607 = vmatprep.subr.bf16.mxu0 0
      %1608 = vmatpush1.bf16.xpose.msra.mxu0 0
      %1609 = vmatprep.subr.bf16.mxu0 0
      %1610 = vmatpush1.bf16.xpose.msra.mxu0 0
      %1611 = vmatprep.subr.bf16.mxu0 0
      %1612 = vmatpush1.bf16.xpose.msra.mxu0 0
      %1613 = vmatprep.subr.bf16.mxu0 0
      %1614 = vmatpush1.bf16.xpose.msra.mxu0 0
      %1615 = vmatprep.subr.bf16.mxu0 0
      %1616 = vmatpush1.bf16.xpose.msra.mxu0 0
      %1617 = vmatprep.subr.bf16.mxu0 0
      %1618 = vmatpush1.bf16.xpose.msra.mxu0 0
      %1619 = vmatprep.subr.bf16.mxu0 0
      %1620 = vmatpush1.bf16.xpose.msra.mxu0 0
      %1621 = vmatprep.mubr.bf16.mxu0 0
      %1622 = vmatmul.mubr.bf16.gmra.mrb[0].mxu0 %v1584
      %v1623 = vpop.f32.mrb[0].mxu0
      %v1624 = vadd.f32 0.0, %v1623
      %v1625 = vpop.f32.mrb[0].mxu0
      %v1626 = vpop.f32.mrb[0].mxu0
      %v1627 = vpop.f32.mrb[0].mxu0
      %1628 = vdwg.mxu0
      %1629 = vst.msk [vmem:[#allocation2 + $0x10] sm:$0xff] %vm687, %v1624
      %1630 = vrot.lane.b32.xlu0 %v1479, 104
      %v1631 = vpop.permute.xlu0 %1630
      %v1633 = vsel %vm687, %v1631, 0
      %1635 = vmatprep.subr.bf16.mxu0 0
      %1636 = vmatpush1.bf16.xpose.msra.mxu0 %v1587
      %1637 = vmatprep.subr.bf16.mxu0 0
      %1638 = vmatpush1.bf16.xpose.msra.mxu0 0
      %1639 = vmatprep.subr.bf16.mxu0 0
      %1640 = vmatpush1.bf16.xpose.msra.mxu0 0
      %1641 = vmatprep.subr.bf16.mxu0 0
      %1642 = vmatpush1.bf16.xpose.msra.mxu0 0
      %1643 = vmatprep.subr.bf16.mxu0 0
      %1644 = vmatpush1.bf16.xpose.msra.mxu0 0
      %1645 = vmatprep.subr.bf16.mxu0 0
      %1646 = vmatpush1.bf16.xpose.msra.mxu0 0
      %1647 = vmatprep.subr.bf16.mxu0 0
      %1648 = vmatpush1.bf16.xpose.msra.mxu0 0
      %1649 = vmatprep.subr.bf16.mxu0 0
      %1650 = vmatpush1.bf16.xpose.msra.mxu0 0
      %1651 = vmatprep.subr.bf16.mxu0 0
      %1652 = vmatpush1.bf16.xpose.msra.mxu0 0
      %1653 = vmatprep.subr.bf16.mxu0 0
      %1654 = vmatpush1.bf16.xpose.msra.mxu0 0
      %1655 = vmatprep.subr.bf16.mxu0 0
      %1656 = vmatpush1.bf16.xpose.msra.mxu0 0
      %1657 = vmatprep.subr.bf16.mxu0 0
      %1658 = vmatpush1.bf16.xpose.msra.mxu0 0
      %1659 = vmatprep.subr.bf16.mxu0 0
      %1660 = vmatpush1.bf16.xpose.msra.mxu0 0
      %1661 = vmatprep.subr.bf16.mxu0 0
      %1662 = vmatpush1.bf16.xpose.msra.mxu0 0
      %1663 = vmatprep.subr.bf16.mxu0 0
      %1664 = vmatpush1.bf16.xpose.msra.mxu0 0
      %1665 = vmatprep.subr.bf16.mxu0 0
      %1666 = vmatpush1.bf16.xpose.msra.mxu0 0
      %1667 = vmatprep.mubr.bf16.mxu0 0
      %1668 = vmatmul.mubr.bf16.gmra.mrb[0].mxu0 %v1633
      %v1669 = vpop.f32.mrb[0].mxu0
      %v1670 = vadd.f32 0.0, %v1669
      %v1671 = vpop.f32.mrb[0].mxu0
      %v1672 = vpop.f32.mrb[0].mxu0
      %v1673 = vpop.f32.mrb[0].mxu0
      %1674 = vdwg.mxu0
      %1675 = vst.msk [vmem:[#allocation2 + $0x18] sm:$0xff] %vm687, %v1670
      %v1676 = vld [vmem:[#allocation2] sm:$0xff]
      %v1677 = vld [vmem:[#allocation2 + $0x8] sm:$0xff]
      %v1678 = vld [vmem:[#allocation2 + $0x10] sm:$0xff]
      %v1679 = vld [vmem:[#allocation2 + $0x18] sm:$0xff]
      %v1680 = vadd.f32 %v1676, %v548
      %v1681 = vadd.f32 %v1677, %v549
      %v1682 = vadd.f32 %v1678, %v550
      %v1683 = vadd.f32 %v1679, %v551
      %v1684 = vsel %vm687, %v1680, -inf
      %1685 = vmax.xlane.f32.xlu0 %v1684
      %v1686 = vpop.xlane.xlu0 %1685
      %v1687 = vsel %vm687, %v1681, -inf
      %1688 = vmax.xlane.f32.xlu0 %v1687
      %v1689 = vpop.xlane.xlu0 %1688
      %v1690 = vsel %vm687, %v1682, -inf
      %1691 = vmax.xlane.f32.xlu0 %v1690
      %v1692 = vpop.xlane.xlu0 %1691
      %v1693 = vsel %vm687, %v1683, -inf
      %1694 = vmax.xlane.f32.xlu0 %v1693
      %v1695 = vpop.xlane.xlu0 %1694
      %v1696 = vsub.f32 %v1680, %v1686
      %v1697 = vsub.f32 %v1681, %v1689
      %v1698 = vsub.f32 %v1682, %v1692
      %v1699 = vsub.f32 %v1683, %v1695
      %v1700 = vmul.f32 %v1696, 1.442695
      %v1701 = vpow.pop %v1700
      %v1702 = vmul.f32 %v1697, 1.442695
      %v1703 = vpow.pop %v1702
      %v1704 = vmul.f32 %v1698, 1.442695
      %v1705 = vpow.pop %v1704
      %v1706 = vmul.f32 %v1699, 1.442695
      %v1707 = vpow.pop %v1706
      %v1708 = vsel %vm687, %v1701, 0.0
      %1709 = vadd.xlane.f32.xlu0 %v1708
      %v1710 = vpop.xlane.xlu0 %1709
      %v1711 = vsel %vm687, %v1703, 0.0
      %1712 = vadd.xlane.f32.xlu0 %v1711
      %v1713 = vpop.xlane.xlu0 %1712
      %v1714 = vsel %vm687, %v1705, 0.0
      %1715 = vadd.xlane.f32.xlu0 %v1714
      %v1716 = vpop.xlane.xlu0 %1715
      %v1717 = vsel %vm687, %v1707, 0.0
      %1718 = vadd.xlane.f32.xlu0 %v1717
      %v1719 = vpop.xlane.xlu0 %1718
      %v1720 = vrcp.pop %v1710
      %v1721 = vrcp.pop %v1713
      %v1722 = vrcp.pop %v1716
      %v1723 = vrcp.pop %v1719
      %v1724 = vmul.f32 %v1701, %v1720
      %v1725 = vmul.f32 %v1703, %v1721
      %v1726 = vmul.f32 %v1705, %v1722
      %v1727 = vmul.f32 %v1707, %v1723
      %v1728 = vpack.c.bf16 %v1725, %v1724
      %v1729 = vpack.c.bf16 %v1727, %v1726
      %1731 = vrot.lane.b32.xlu0 %v1481, 80
      %v1732 = vpop.permute.xlu0 %1731
      %v1734 = vsel %vm687, %v1728, 0
      %v1737 = vsel %vm939, %v1732, 0
      %1739 = vmatprep.subr.bf16.mxu0 0
      %1740 = vmatpush1.bf16.msra.mxu0 %v1737
      %1741 = vmatprep.subr.bf16.mxu0 0
      %1742 = vmatpush1.bf16.msra.mxu0 0
      %1743 = vmatprep.subr.bf16.mxu0 0
      %1744 = vmatpush1.bf16.msra.mxu0 0
      %1745 = vmatprep.subr.bf16.mxu0 0
      %1746 = vmatpush1.bf16.msra.mxu0 0
      %1747 = vmatprep.subr.bf16.mxu0 0
      %1748 = vmatpush1.bf16.msra.mxu0 0
      %1749 = vmatprep.subr.bf16.mxu0 0
      %1750 = vmatpush1.bf16.msra.mxu0 0
      %1751 = vmatprep.subr.bf16.mxu0 0
      %1752 = vmatpush1.bf16.msra.mxu0 0
      %1753 = vmatprep.subr.bf16.mxu0 0
      %1754 = vmatpush1.bf16.msra.mxu0 0
      %1755 = vmatprep.subr.bf16.mxu0 0
      %1756 = vmatpush1.bf16.msra.mxu0 0
      %1757 = vmatprep.subr.bf16.mxu0 0
      %1758 = vmatpush1.bf16.msra.mxu0 0
      %1759 = vmatprep.subr.bf16.mxu0 0
      %1760 = vmatpush1.bf16.msra.mxu0 0
      %1761 = vmatprep.subr.bf16.mxu0 0
      %1762 = vmatpush1.bf16.msra.mxu0 0
      %1763 = vmatprep.subr.bf16.mxu0 0
      %1764 = vmatpush1.bf16.msra.mxu0 0
      %1765 = vmatprep.subr.bf16.mxu0 0
      %1766 = vmatpush1.bf16.msra.mxu0 0
      %1767 = vmatprep.subr.bf16.mxu0 0
      %1768 = vmatpush1.bf16.msra.mxu0 0
      %1769 = vmatprep.subr.bf16.mxu0 0
      %1770 = vmatpush1.bf16.msra.mxu0 0
      %1771 = vmatprep.mubr.bf16.mxu0 0
      %1772 = vmatmul.mubr.bf16.gmra.mrb[0].mxu0 %v1734
      %v1773 = vpop.f32.mrb[0].mxu0
      %v1774 = vadd.f32 0.0, %v1773
      %v1775 = vpop.f32.mrb[0].mxu0
      %v1776 = vpop.f32.mrb[0].mxu0
      %v1777 = vpop.f32.mrb[0].mxu0
      %1778 = vdwg.mxu0
      %1779 = vst.msk [vmem:[#allocation3] sm:$0xff] %vm687, %v1774
      %v1781 = vrot.slane %v1728, 4
      %v1783 = vsel %vm687, %v1781, 0
      %1785 = vmatprep.subr.bf16.mxu0 0
      %1786 = vmatpush1.bf16.msra.mxu0 %v1737
      %1787 = vmatprep.subr.bf16.mxu0 0
      %1788 = vmatpush1.bf16.msra.mxu0 0
      %1789 = vmatprep.subr.bf16.mxu0 0
      %1790 = vmatpush1.bf16.msra.mxu0 0
      %1791 = vmatprep.subr.bf16.mxu0 0
      %1792 = vmatpush1.bf16.msra.mxu0 0
      %1793 = vmatprep.subr.bf16.mxu0 0
      %1794 = vmatpush1.bf16.msra.mxu0 0
      %1795 = vmatprep.subr.bf16.mxu0 0
      %1796 = vmatpush1.bf16.msra.mxu0 0
      %1797 = vmatprep.subr.bf16.mxu0 0
      %1798 = vmatpush1.bf16.msra.mxu0 0
      %1799 = vmatprep.subr.bf16.mxu0 0
      %1800 = vmatpush1.bf16.msra.mxu0 0
      %1801 = vmatprep.subr.bf16.mxu0 0
      %1802 = vmatpush1.bf16.msra.mxu0 0
      %1803 = vmatprep.subr.bf16.mxu0 0
      %1804 = vmatpush1.bf16.msra.mxu0 0
      %1805 = vmatprep.subr.bf16.mxu0 0
      %1806 = vmatpush1.bf16.msra.mxu0 0
      %1807 = vmatprep.subr.bf16.mxu0 0
      %1808 = vmatpush1.bf16.msra.mxu0 0
      %1809 = vmatprep.subr.bf16.mxu0 0
      %1810 = vmatpush1.bf16.msra.mxu0 0
      %1811 = vmatprep.subr.bf16.mxu0 0
      %1812 = vmatpush1.bf16.msra.mxu0 0
      %1813 = vmatprep.subr.bf16.mxu0 0
      %1814 = vmatpush1.bf16.msra.mxu0 0
      %1815 = vmatprep.subr.bf16.mxu0 0
      %1816 = vmatpush1.bf16.msra.mxu0 0
      %1817 = vmatprep.mubr.bf16.mxu0 0
      %1818 = vmatmul.mubr.bf16.gmra.mrb[0].mxu0 %v1783
      %v1819 = vpop.f32.mrb[0].mxu0
      %v1820 = vadd.f32 0.0, %v1819
      %v1821 = vpop.f32.mrb[0].mxu0
      %v1822 = vpop.f32.mrb[0].mxu0
      %v1823 = vpop.f32.mrb[0].mxu0
      %1824 = vdwg.mxu0
      %1826 = vrot.lane.b32.xlu0 %v1820, 8
      %v1827 = vpop.permute.xlu0 %1826
      %1829 = vst.msk [vmem:[#allocation3] sm:$0xff] %vm1033, %v1827
      %1830 = vrot.lane.b32.xlu0 %v1481, 72
      %v1831 = vpop.permute.xlu0 %1830
      %v1833 = vsel %vm687, %v1729, 0
      %v1836 = vsel %vm939, %v1831, 0
      %1838 = vmatprep.subr.bf16.mxu0 0
      %1839 = vmatpush1.bf16.msra.mxu0 %v1836
      %1840 = vmatprep.subr.bf16.mxu0 0
      %1841 = vmatpush1.bf16.msra.mxu0 0
      %1842 = vmatprep.subr.bf16.mxu0 0
      %1843 = vmatpush1.bf16.msra.mxu0 0
      %1844 = vmatprep.subr.bf16.mxu0 0
      %1845 = vmatpush1.bf16.msra.mxu0 0
      %1846 = vmatprep.subr.bf16.mxu0 0
      %1847 = vmatpush1.bf16.msra.mxu0 0
      %1848 = vmatprep.subr.bf16.mxu0 0
      %1849 = vmatpush1.bf16.msra.mxu0 0
      %1850 = vmatprep.subr.bf16.mxu0 0
      %1851 = vmatpush1.bf16.msra.mxu0 0
      %1852 = vmatprep.subr.bf16.mxu0 0
      %1853 = vmatpush1.bf16.msra.mxu0 0
      %1854 = vmatprep.subr.bf16.mxu0 0
      %1855 = vmatpush1.bf16.msra.mxu0 0
      %1856 = vmatprep.subr.bf16.mxu0 0
      %1857 = vmatpush1.bf16.msra.mxu0 0
      %1858 = vmatprep.subr.bf16.mxu0 0
      %1859 = vmatpush1.bf16.msra.mxu0 0
      %1860 = vmatprep.subr.bf16.mxu0 0
      %1861 = vmatpush1.bf16.msra.mxu0 0
      %1862 = vmatprep.subr.bf16.mxu0 0
      %1863 = vmatpush1.bf16.msra.mxu0 0
      %1864 = vmatprep.subr.bf16.mxu0 0
      %1865 = vmatpush1.bf16.msra.mxu0 0
      %1866 = vmatprep.subr.bf16.mxu0 0
      %1867 = vmatpush1.bf16.msra.mxu0 0
      %1868 = vmatprep.subr.bf16.mxu0 0
      %1869 = vmatpush1.bf16.msra.mxu0 0
      %1870 = vmatprep.mubr.bf16.mxu0 0
      %1871 = vmatmul.mubr.bf16.gmra.mrb[0].mxu0 %v1833
      %v1872 = vpop.f32.mrb[0].mxu0
      %v1873 = vadd.f32 0.0, %v1872
      %v1874 = vpop.f32.mrb[0].mxu0
      %v1875 = vpop.f32.mrb[0].mxu0
      %v1876 = vpop.f32.mrb[0].mxu0
      %1877 = vdwg.mxu0
      %1879 = vrot.lane.b32.xlu0 %v1873, 16
      %v1880 = vpop.permute.xlu0 %1879
      %1882 = vst.msk [vmem:[#allocation3] sm:$0xff] %vm1087, %v1880
      %v1884 = vrot.slane %v1729, 4
      %v1886 = vsel %vm687, %v1884, 0
      %1888 = vmatprep.subr.bf16.mxu0 0
      %1889 = vmatpush1.bf16.msra.mxu0 %v1836
      %1890 = vmatprep.subr.bf16.mxu0 0
      %1891 = vmatpush1.bf16.msra.mxu0 0
      %1892 = vmatprep.subr.bf16.mxu0 0
      %1893 = vmatpush1.bf16.msra.mxu0 0
      %1894 = vmatprep.subr.bf16.mxu0 0
      %1895 = vmatpush1.bf16.msra.mxu0 0
      %1896 = vmatprep.subr.bf16.mxu0 0
      %1897 = vmatpush1.bf16.msra.mxu0 0
      %1898 = vmatprep.subr.bf16.mxu0 0
      %1899 = vmatpush1.bf16.msra.mxu0 0
      %1900 = vmatprep.subr.bf16.mxu0 0
      %1901 = vmatpush1.bf16.msra.mxu0 0
      %1902 = vmatprep.subr.bf16.mxu0 0
      %1903 = vmatpush1.bf16.msra.mxu0 0
      %1904 = vmatprep.subr.bf16.mxu0 0
      %1905 = vmatpush1.bf16.msra.mxu0 0
      %1906 = vmatprep.subr.bf16.mxu0 0
      %1907 = vmatpush1.bf16.msra.mxu0 0
      %1908 = vmatprep.subr.bf16.mxu0 0
      %1909 = vmatpush1.bf16.msra.mxu0 0
      %1910 = vmatprep.subr.bf16.mxu0 0
      %1911 = vmatpush1.bf16.msra.mxu0 0
      %1912 = vmatprep.subr.bf16.mxu0 0
      %1913 = vmatpush1.bf16.msra.mxu0 0
      %1914 = vmatprep.subr.bf16.mxu0 0
      %1915 = vmatpush1.bf16.msra.mxu0 0
      %1916 = vmatprep.subr.bf16.mxu0 0
      %1917 = vmatpush1.bf16.msra.mxu0 0
      %1918 = vmatprep.subr.bf16.mxu0 0
      %1919 = vmatpush1.bf16.msra.mxu0 0
      %1920 = vmatprep.mubr.bf16.mxu0 0
      %1921 = vmatmul.mubr.bf16.gmra.mrb[0].mxu0 %v1886
      %v1922 = vpop.f32.mrb[0].mxu0
      %v1923 = vadd.f32 0.0, %v1922
      %v1924 = vpop.f32.mrb[0].mxu0
      %v1925 = vpop.f32.mrb[0].mxu0
      %v1926 = vpop.f32.mrb[0].mxu0
      %1927 = vdwg.mxu0
      %1929 = vrot.lane.b32.xlu0 %v1923, 24
      %v1930 = vpop.permute.xlu0 %1929
      %1932 = vst.msk [vmem:[#allocation3] sm:$0xff] %vm1138, %v1930
      %v1933 = vld [vmem:[#allocation3] sm:$0xff]
      %v1934 = vpack.c.bf16 %v1933, %v1933
      %v1935 = vld [vmem:[%s12] sm:$0xf]
      %v1936 = vld [vmem:[%s12 + $0x4] sm:$0xf]
      %v1937 = vld [vmem:[%s12 + $0x8] sm:$0xf]
      %v1938 = vld [vmem:[%s12 + $0xc] sm:$0xf]
      %v1943 = vunpack.c.l.b16 %v1935
      %v1944 = vunpack.c.l.b16 %v1936
      %v1945 = vunpack.c.l.b16 %v1937
      %v1946 = vunpack.c.l.b16 %v1938
      %v1947 = vpack.c.b16 %v1944, %v1943
      %v1948 = vpack.c.b16 %v1946, %v1945
      %v1952 = vsel %vm554, %v1934, 0
      %1954 = vmatprep.subr.bf16.mxu0 0
      %1955 = vmatpush1.bf16.msra.mxu0 %v1947
      %1956 = vmatprep.subr.bf16.mxu0 0
      %1957 = vmatpush1.bf16.msra.mxu0 %v1948
      %1958 = vmatprep.subr.bf16.mxu0 0
      %1959 = vmatpush1.bf16.msra.mxu0 0
      %1960 = vmatprep.subr.bf16.mxu0 0
      %1961 = vmatpush1.bf16.msra.mxu0 0
      %1962 = vmatprep.subr.bf16.mxu0 0
      %1963 = vmatpush1.bf16.msra.mxu0 0
      %1964 = vmatprep.subr.bf16.mxu0 0
      %1965 = vmatpush1.bf16.msra.mxu0 0
      %1966 = vmatprep.subr.bf16.mxu0 0
      %1967 = vmatpush1.bf16.msra.mxu0 0
      %1968 = vmatprep.subr.bf16.mxu0 0
      %1969 = vmatpush1.bf16.msra.mxu0 0
      %1970 = vmatprep.subr.bf16.mxu0 0
      %1971 = vmatpush1.bf16.msra.mxu0 0
      %1972 = vmatprep.subr.bf16.mxu0 0
      %1973 = vmatpush1.bf16.msra.mxu0 0
      %1974 = vmatprep.subr.bf16.mxu0 0
      %1975 = vmatpush1.bf16.msra.mxu0 0
      %1976 = vmatprep.subr.bf16.mxu0 0
      %1977 = vmatpush1.bf16.msra.mxu0 0
      %1978 = vmatprep.subr.bf16.mxu0 0
      %1979 = vmatpush1.bf16.msra.mxu0 0
      %1980 = vmatprep.subr.bf16.mxu0 0
      %1981 = vmatpush1.bf16.msra.mxu0 0
      %1982 = vmatprep.subr.bf16.mxu0 0
      %1983 = vmatpush1.bf16.msra.mxu0 0
      %1984 = vmatprep.subr.bf16.mxu0 0
      %1985 = vmatpush1.bf16.msra.mxu0 0
      %1986 = vmatprep.mubr.bf16.mxu0 0
      %1987 = vmatmul.mubr.bf16.gmra.mrb[0].mxu0 %v1952
      %v1988 = vpop.f32.mrb[0].mxu0
      %v1989 = vadd.f32 0.0, %v1988
      %v1990 = vpop.f32.mrb[0].mxu0
      %v1991 = vpop.f32.mrb[0].mxu0
      %v1992 = vpop.f32.mrb[0].mxu0
      %1993 = vdwg.mxu0
      %v1994 = vadd.f32 %v1359, %v1989
      %v1995 = vmul.f32 %v1994, %v1994
      %v1996 = vsel %vm554, %v1995, 0.0
      %1997 = vadd.xlane.f32.xlu0 %v1996
      %v1998 = vpop.xlane.xlu0 %1997
      %v1999 = vmul.f32 %v1998, %v558
      %v2000 = vadd.f32 %v1999, 1e-06
      %v2001 = vrsqrt.pop %v2000
      %v2002 = vmul.f32 %v1994, %v2001
      %v2003 = vpack.c.bf16 %v2002, %v2002
      %v2004 = vld [vmem:[%s13] sm:$0xf]
      %v2005 = vld [vmem:[%s13 + $0x4] sm:$0xf]
      %v2006 = vld [vmem:[%s13 + $0x8] sm:$0xf]
      %v2007 = vld [vmem:[%s13 + $0xc] sm:$0xf]
      %v2012 = vunpack.c.l.b16 %v2004
      %v2013 = vunpack.c.l.b16 %v2005
      %v2014 = vunpack.c.l.b16 %v2006
      %v2015 = vunpack.c.l.b16 %v2007
      %v2016 = vpack.c.b16 %v2013, %v2012
      %v2017 = vpack.c.b16 %v2015, %v2014
      %v2021 = vsel %vm554, %v2003, 0
      %2023 = vmatprep.subr.bf16.mxu0 0
      %2024 = vmatpush1.bf16.msra.mxu0 %v2016
      %2025 = vmatprep.subr.bf16.mxu0 0
      %2026 = vmatpush1.bf16.msra.mxu0 %v2017
      %2027 = vmatprep.subr.bf16.mxu0 0
      %2028 = vmatpush1.bf16.msra.mxu0 0
      %2029 = vmatprep.subr.bf16.mxu0 0
      %2030 = vmatpush1.bf16.msra.mxu0 0
      %2031 = vmatprep.subr.bf16.mxu0 0
      %2032 = vmatpush1.bf16.msra.mxu0 0
      %2033 = vmatprep.subr.bf16.mxu0 0
      %2034 = vmatpush1.bf16.msra.mxu0 0
      %2035 = vmatprep.subr.bf16.mxu0 0
      %2036 = vmatpush1.bf16.msra.mxu0 0
      %2037 = vmatprep.subr.bf16.mxu0 0
      %2038 = vmatpush1.bf16.msra.mxu0 0
      %2039 = vmatprep.subr.bf16.mxu0 0
      %2040 = vmatpush1.bf16.msra.mxu0 0
      %2041 = vmatprep.subr.bf16.mxu0 0
      %2042 = vmatpush1.bf16.msra.mxu0 0
      %2043 = vmatprep.subr.bf16.mxu0 0
      %2044 = vmatpush1.bf16.msra.mxu0 0
      %2045 = vmatprep.subr.bf16.mxu0 0
      %2046 = vmatpush1.bf16.msra.mxu0 0
      %2047 = vmatprep.subr.bf16.mxu0 0
      %2048 = vmatpush1.bf16.msra.mxu0 0
      %2049 = vmatprep.subr.bf16.mxu0 0
      %2050 = vmatpush1.bf16.msra.mxu0 0
      %2051 = vmatprep.subr.bf16.mxu0 0
      %2052 = vmatpush1.bf16.msra.mxu0 0
      %2053 = vmatprep.subr.bf16.mxu0 0
      %2054 = vmatpush1.bf16.msra.mxu0 0
      %2055 = vmatprep.mubr.bf16.mxu0 0
      %2056 = vmatmul.mubr.bf16.gmra.mrb[0].mxu0 %v2021
      %v2057 = vpop.f32.mrb[0].mxu0
      %v2058 = vadd.f32 0.0, %v2057
      %v2059 = vpop.f32.mrb[0].mxu0
      %v2060 = vpop.f32.mrb[0].mxu0
      %v2061 = vpop.f32.mrb[0].mxu0
      %2062 = vdwg.mxu0
      %v2063 = vxor.u32 %v2058, 2147483648
      %v2064 = vmul.f32 %v2063, 1.442695
      %v2065 = vpow.pop %v2064
      %v2066 = vadd.f32 %v2065, 1.0
      %v2067 = vrcp.pop %v2066
      %v2068 = vmul.f32 1.0, %v2067
      %v2069 = vmul.f32 %v2058, %v2068
      %2071 = vrot.lane.b32.xlu0 %v2058, 64
      %v2072 = vpop.permute.xlu0 %2071
      %v2074 = vmul.f32 %v2069, %v2072
      %v2075 = vpack.c.bf16 %v2074, %v2074
      %v2076 = vld [vmem:[%s14] sm:$0xf]
      %v2077 = vld [vmem:[%s14 + $0x4] sm:$0xf]
      %v2078 = vld [vmem:[%s14 + $0x8] sm:$0xf]
      %v2079 = vld [vmem:[%s14 + $0xc] sm:$0xf]
      %v2080 = vld [vmem:[%s14 + $0x10] sm:$0xf]
      %v2081 = vld [vmem:[%s14 + $0x14] sm:$0xf]
      %v2082 = vld [vmem:[%s14 + $0x18] sm:$0xf]
      %v2083 = vld [vmem:[%s14 + $0x1c] sm:$0xf]
      %v2092 = vunpack.c.l.b16 %v2076
      %v2093 = vunpack.c.l.b16 %v2077
      %v2094 = vunpack.c.l.b16 %v2078
      %v2095 = vunpack.c.l.b16 %v2079
      %v2096 = vunpack.c.l.b16 %v2080
      %v2097 = vunpack.c.l.b16 %v2081
      %v2098 = vunpack.c.l.b16 %v2082
      %v2099 = vunpack.c.l.b16 %v2083
      %v2100 = vpack.c.b16 %v2093, %v2092
      %v2101 = vpack.c.b16 %v2095, %v2094
      %v2102 = vpack.c.b16 %v2097, %v2096
      %v2103 = vpack.c.b16 %v2099, %v2098
      %v2109 = vsel %vm1315, %v2075, 0
      %2111 = vmatprep.subr.bf16.mxu0 0
      %2112 = vmatpush1.bf16.msra.mxu0 %v2100
      %2113 = vmatprep.subr.bf16.mxu0 0
      %2114 = vmatpush1.bf16.msra.mxu0 %v2101
      %2115 = vmatprep.subr.bf16.mxu0 0
      %2116 = vmatpush1.bf16.msra.mxu0 %v2102
      %2117 = vmatprep.subr.bf16.mxu0 0
      %2118 = vmatpush1.bf16.msra.mxu0 %v2103
      %2119 = vmatprep.subr.bf16.mxu0 0
      %2120 = vmatpush1.bf16.msra.mxu0 0
      %2121 = vmatprep.subr.bf16.mxu0 0
      %2122 = vmatpush1.bf16.msra.mxu0 0
      %2123 = vmatprep.subr.bf16.mxu0 0
      %2124 = vmatpush1.bf16.msra.mxu0 0
      %2125 = vmatprep.subr.bf16.mxu0 0
      %2126 = vmatpush1.bf16.msra.mxu0 0
      %2127 = vmatprep.subr.bf16.mxu0 0
      %2128 = vmatpush1.bf16.msra.mxu0 0
      %2129 = vmatprep.subr.bf16.mxu0 0
      %2130 = vmatpush1.bf16.msra.mxu0 0
      %2131 = vmatprep.subr.bf16.mxu0 0
      %2132 = vmatpush1.bf16.msra.mxu0 0
      %2133 = vmatprep.subr.bf16.mxu0 0
      %2134 = vmatpush1.bf16.msra.mxu0 0
      %2135 = vmatprep.subr.bf16.mxu0 0
      %2136 = vmatpush1.bf16.msra.mxu0 0
      %2137 = vmatprep.subr.bf16.mxu0 0
      %2138 = vmatpush1.bf16.msra.mxu0 0
      %2139 = vmatprep.subr.bf16.mxu0 0
      %2140 = vmatpush1.bf16.msra.mxu0 0
      %2141 = vmatprep.subr.bf16.mxu0 0
      %2142 = vmatpush1.bf16.msra.mxu0 0
      %2143 = vmatprep.mubr.bf16.mxu0 0
      %2144 = vmatmul.mubr.bf16.gmra.mrb[0].mxu0 %v2109
      %v2145 = vpop.f32.mrb[0].mxu0
      %v2146 = vadd.f32 0.0, %v2145
      %v2147 = vpop.f32.mrb[0].mxu0
      %v2148 = vpop.f32.mrb[0].mxu0
      %v2149 = vpop.f32.mrb[0].mxu0
      %2150 = vdwg.mxu0
      %v2151 = vadd.f32 %v1994, %v2146
      %v2152 = vmul.f32 %v2151, %v2151
      %v2153 = vsel %vm554, %v2152, 0.0
      %2154 = vadd.xlane.f32.xlu0 %v2153
      %v2155 = vpop.xlane.xlu0 %2154
      %v2156 = vmul.f32 %v2155, %v558
      %v2157 = vadd.f32 %v2156, 1e-06
      %v2158 = vrsqrt.pop %v2157
      %v2159 = vmul.f32 %v2151, %v2158
      %v2160 = vpack.c.bf16 %v2159, %v2159
      %v2161 = vld [vmem:[%s15] sm:$0xf]
      %v2162 = vld [vmem:[%s15 + $0x4] sm:$0xf]
      %v2163 = vld [vmem:[%s15 + $0x8] sm:$0xf]
      %v2164 = vld [vmem:[%s15 + $0xc] sm:$0xf]
      %v2165 = vld [vmem:[%s16] sm:$0x1]
      %v2167 = vlaneseq
      %v2168 = vshrl.u32 %v2167, 7
      %v2169 = vsub.s32 0, %v2168
      %v2170 = vrot.slane %v2165, %v2169
      %v2176 = vunpack.c.l.b16 %v2161
      %v2177 = vunpack.c.l.b16 %v2162
      %v2178 = vunpack.c.l.b16 %v2163
      %v2179 = vunpack.c.l.b16 %v2164
      %v2180 = vpack.c.b16 %v2177, %v2176
      %v2181 = vpack.c.b16 %v2179, %v2178
      %v2185 = vsel %vm554, %v2160, 0
      %2187 = vmatprep.subr.bf16.mxu0 0
      %2188 = vmatpush1.bf16.msra.mxu0 %v2180
      %2189 = vmatprep.subr.bf16.mxu0 0
      %2190 = vmatpush1.bf16.msra.mxu0 %v2181
      %2191 = vmatprep.subr.bf16.mxu0 0
      %2192 = vmatpush1.bf16.msra.mxu0 0
      %2193 = vmatprep.subr.bf16.mxu0 0
      %2194 = vmatpush1.bf16.msra.mxu0 0
      %2195 = vmatprep.subr.bf16.mxu0 0
      %2196 = vmatpush1.bf16.msra.mxu0 0
      %2197 = vmatprep.subr.bf16.mxu0 0
      %2198 = vmatpush1.bf16.msra.mxu0 0
      %2199 = vmatprep.subr.bf16.mxu0 0
      %2200 = vmatpush1.bf16.msra.mxu0 0
      %2201 = vmatprep.subr.bf16.mxu0 0
      %2202 = vmatpush1.bf16.msra.mxu0 0
      %2203 = vmatprep.subr.bf16.mxu0 0
      %2204 = vmatpush1.bf16.msra.mxu0 0
      %2205 = vmatprep.subr.bf16.mxu0 0
      %2206 = vmatpush1.bf16.msra.mxu0 0
      %2207 = vmatprep.subr.bf16.mxu0 0
      %2208 = vmatpush1.bf16.msra.mxu0 0
      %2209 = vmatprep.subr.bf16.mxu0 0
      %2210 = vmatpush1.bf16.msra.mxu0 0
      %2211 = vmatprep.subr.bf16.mxu0 0
      %2212 = vmatpush1.bf16.msra.mxu0 0
      %2213 = vmatprep.subr.bf16.mxu0 0
      %2214 = vmatpush1.bf16.msra.mxu0 0
      %2215 = vmatprep.subr.bf16.mxu0 0
      %2216 = vmatpush1.bf16.msra.mxu0 0
      %2217 = vmatprep.subr.bf16.mxu0 0
      %2218 = vmatpush1.bf16.msra.mxu0 0
      %2219 = vmatprep.mubr.bf16.mxu0 0
      %2220 = vmatmul.mubr.bf16.gmra.mrb[0].mxu0 %v2185
      %v2221 = vpop.f32.mrb[0].mxu0
      %v2222 = vadd.f32 %v2170, %v2221
      %v2223 = vpop.f32.mrb[0].mxu0
      %v2224 = vpop.f32.mrb[0].mxu0
      %v2225 = vpop.f32.mrb[0].mxu0
      %2226 = vdwg.mxu0
      %2227 = vst [vmem:[%s543] sm:$0xff] %v2222
      %p2228 = scmp.lt.s32.totalorder %s28, 1
      %s2229 = scalar_select %p2228, %s28, 1
      %s2230 = smul.addr %s2229, 8
      %s2231 = scalar_lea.vmem %s17, %s2230
      // Predicated region
      $region89: #{qwen2_forward.1} parent=87 // pred_check
        %p2232 = pneg %p408
      $region90: #{qwen2_forward.1} parent=87 // pred_check_branch
        %2234 = sbr.rel (%p2232) target = $region92
      $region91: #{qwen2_forward.1} parent=87 // pred_region
        _
      $region92: #{qwen2_forward.1} parent=87 // pred_fallthru
        _
    $region88: #{qwen2_forward.1} parent=5 // pred_fallthru
      _
    %p2235 = scmp.le.s32.totalorder 2, %s23
    // Predicated region
    $region93: #{qwen2_forward.1} parent=5 // pred_check
      %p2236 = pneg %p2235
    $region94: #{qwen2_forward.1} parent=5 // pred_check_branch
      %2238 = sbr.rel (%p2236) target = $region96
    $region95: #{qwen2_forward.1} parent=5 // pred_region
      %s2239 = ssub.s32 %s23, 2
      // Predicated region
      $region97: #{qwen2_forward.1} parent=95 // pred_check
        %p2240 = pneg %p414
      $region98: #{qwen2_forward.1} parent=95 // pred_check_branch
        %2242 = sbr.rel (%p2240) target = $region100
      $region99: #{qwen2_forward.1} parent=95 // pred_region
        %p2243 = scmp.lt.s32.totalorder %s29, 1
        %s2244 = scalar_select %p2243, %s29, 1
        %s2245 = smul.addr %s2244, 8
        %s2246 = scalar_lea.vmem %s17, %s2245
      $region100: #{qwen2_forward.1} parent=95 // pred_fallthru
        _
    $region96: #{qwen2_forward.1} parent=5 // pred_fallthru
      _
  $region6: #{qwen2_forward.1} parent=0 // loop_footer
    %s27 = sadd.s32 1, %s23
  $region7: #{qwen2_forward.1} parent=0 // loop_footer_branch
    %22 = sbr.rel target = $region3
  $region8: #{qwen2_forward.1} parent=0 // loop_exit
    _

</llo_original>
